<compile_context>
chip_gen: v5e
topology: v5e:2x2
jax: 0.10.0
libtpu: 0.0.40
codegen_flags: <defaults>
</compile_context>

<pallas_src>
import functools

import numpy as np
import jax
import jax.numpy as jnp
from jax import lax
from jax.experimental import pallas as pl
from jax.experimental.pallas import tpu as pltpu


# ----------------------------------------------------------------------------
# Pallas kernel: one bidirectional GRU layer (both directions fused).
# Inputs (per batch block):
#   lens_ref   [TB, 1]   int32   sorted sequence lengths
#   gi_ref     [T, 6, TB, H]     precomputed x@W_ih + biases; index = dir*3+gate
#   w_hh_ref   [6, H, H]         per-direction, per-gate hidden weights
#   b_hh_n_ref [2, 1, H]         n-gate hidden bias per direction
#   h0_ref     [2, TB, H]        initial hidden (fwd, bwd)
# Outputs:
#   out_ref    [T, 2, TB, H]     direction-separated outputs (0 at padded steps)
#   hf_ref     [2, TB, H]        final hidden per direction
# ----------------------------------------------------------------------------
def _bigru_layer_kernel(lens_ref, gi_ref, w_hh_ref, b_hh_n_ref, h0_ref,
                        out_ref, hf_ref, *, seq_len, unroll):
    T = seq_len
    TB, H = h0_ref.shape[1], h0_ref.shape[2]

    # hoisted loads / broadcasts (kept outside the recurrence loop)
    w = [w_hh_ref[k] for k in range(6)]                     # each [H, H]
    bn_f = jnp.broadcast_to(b_hh_n_ref[0], (TB, H))
    bn_b = jnp.broadcast_to(b_hh_n_ref[1], (TB, H))
    lens = lens_ref[...]                                     # [TB, 1] int32

    def cell(gi_r, gi_z, gi_n, h, w_r, w_z, w_n, bn):
        # b_ih (all gates) and b_hh (r, z gates) are already folded into gi.
        r = jax.nn.sigmoid(gi_r + jnp.dot(h, w_r, preferred_element_type=jnp.float32))
        z = jax.nn.sigmoid(gi_z + jnp.dot(h, w_z, preferred_element_type=jnp.float32))
        n = jnp.tanh(gi_n + r * (jnp.dot(h, w_n, preferred_element_type=jnp.float32) + bn))
        return (1.0 - z) * n + z * h

    def step(i, carry):
        h_f, h_b = carry
        t_f = i
        t_b = T - 1 - i

        # forward direction at t_f
        h_new = cell(gi_ref[t_f, 0], gi_ref[t_f, 1], gi_ref[t_f, 2],
                     h_f, w[0], w[1], w[2], bn_f)
        m = (lens > t_f).astype(jnp.float32)                 # [TB, 1]
        out_ref[t_f, 0] = m * h_new                          # zeros at padded steps
        h_f = m * h_new + (1.0 - m) * h_f                    # freeze past length

        # backward direction at t_b
        h_new = cell(gi_ref[t_b, 3], gi_ref[t_b, 4], gi_ref[t_b, 5],
                     h_b, w[3], w[4], w[5], bn_b)
        m = (lens > t_b).astype(jnp.float32)
        out_ref[t_b, 1] = m * h_new
        h_b = m * h_new + (1.0 - m) * h_b
        return (h_f, h_b)

    h_f, h_b = lax.fori_loop(0, T, step, (h0_ref[0], h0_ref[1]), unroll=unroll)
    hf_ref[0] = h_f
    hf_ref[1] = h_b


def _pick_batch_block(B, max_block=64):
    """Largest batch block that satisfies the (8,128)/full-dim rule and divides B."""
    if B <= 8 or B % 8 != 0:
        return B
    tb = min(max_block, B)
    tb -= tb % 8
    while B % tb != 0:
        tb -= 8
    return tb


def bigru_layer_pallas(gi, lens, w_hh, b_hh_n, h0):
    """gi: [T, 6, B, H] f32, lens: [B,1] int32, w_hh: [6,H,H], b_hh_n: [2,1,H], h0: [2,B,H]."""
    T, _, B, H = gi.shape
    TB = _pick_batch_block(B)
    grid = (B // TB,)
    unroll = True if T <= 32 else 8
    kernel = functools.partial(_bigru_layer_kernel, seq_len=int(T), unroll=unroll)

    in_specs = [
        pl.BlockSpec((TB, 1), lambda b: (b, 0)),              # lens
        pl.BlockSpec((T, 6, TB, H), lambda b: (0, 0, b, 0)),  # gi
        pl.BlockSpec((6, H, H), lambda b: (0, 0, 0)),         # w_hh
        pl.BlockSpec((2, 1, H), lambda b: (0, 0, 0)),         # b_hh_n
        pl.BlockSpec((2, TB, H), lambda b: (0, b, 0)),        # h0
    ]
    out_specs = (
        pl.BlockSpec((T, 2, TB, H), lambda b: (0, 0, b, 0)),  # out
        pl.BlockSpec((2, TB, H), lambda b: (0, b, 0)),        # final hidden
    )
    out, hf = pl.pallas_call(
        kernel,
        out_shape=(jax.ShapeDtypeStruct((T, 2, B, H), jnp.float32),
                   jax.ShapeDtypeStruct((2, B, H), jnp.float32)),
        grid=grid,
        in_specs=in_specs,
        out_specs=out_specs,
        compiler_params=pltpu.CompilerParams(dimension_semantics=("parallel",)),
    )(lens, gi, w_hh, b_hh_n, h0)
    return out, hf


# ----------------------------------------------------------------------------
# Weight packing for the fused layer (done once per layer in the wrapper).
# ----------------------------------------------------------------------------
def _pack_layer(p, S, F, H):
    """S = number of input streams (1 for layer 0, 2 afterwards), F = features/stream."""
    def pack_dir(d):
        w_ih = p[f"w_ih_{d}"].reshape(S, F, 3, H)             # [S,F,3,H] gate order (r,z,n)
        b_ih = p[f"b_ih_{d}"].reshape(3, H)
        b_hh = p[f"b_hh_{d}"].reshape(3, H)
        w_hh = p[f"w_hh_{d}"].reshape(H, 3, H).transpose(1, 0, 2)   # [3,H,H]
        # fold b_ih (all gates) + b_hh (r,z only) into the hoisted GEMM bias
        b_pre = jnp.concatenate([b_ih[:2] + b_hh[:2], b_ih[2:]], axis=0)   # [3,H]
        return w_ih, b_pre, w_hh, b_hh[2:3]
    wf, bpf, whf, bnf = pack_dir("f")
    wb, bpb, whb, bnb = pack_dir("b")
    w_ih_all = jnp.stack([wf, wb], axis=0)                    # [2,S,F,3,H]
    b_pre = jnp.stack([bpf, bpb], axis=0)                     # [2,3,H]
    w_hh_all = jnp.stack([whf, whb], axis=0).reshape(6, H, H) # [6,H,H]
    b_hh_n = jnp.stack([bnf, bnb], axis=0)                    # [2,1,H]
    return w_ih_all, b_pre, w_hh_all, b_hh_n


# ----------------------------------------------------------------------------
# Encoder forward: glue (embedding, sort, hoisted GEMMs) in XLA, recurrence in
# the Pallas kernel.
# ----------------------------------------------------------------------------
def encoder_forward(params, input_seqs, input_lens, hidden=None):
    """input_seqs: [T, B] int32, input_lens: numpy int array [B]."""
    n_layers = params["n_layers"]
    H = params["hidden_size"]
    T, B = input_seqs.shape

    embedded = params["embedding"][input_seqs]                 # [T, B, E]
    embedded = jnp.transpose(embedded, (1, 0, 2))              # [B, T, E]
    sort_idx = np.argsort(-input_lens)
    unsort_idx = np.argsort(sort_idx)
    lens_sorted = input_lens[sort_idx]
    embedded_sorted = jnp.transpose(embedded[jnp.asarray(sort_idx)], (1, 0, 2))  # [T,B,E]

    # pack_padded/pad_packed truncate to the longest sequence
    t_eff = int(np.max(input_lens))
    x = embedded_sorted[:t_eff].astype(jnp.float32)[:, None]   # [T_eff, 1, B, E]
    lens_dev = jnp.asarray(lens_sorted.astype(np.int32)).reshape(B, 1)

    # NOTE: like the PyTorch module, a caller-provided `hidden` is used as-is
    # (the packed GRU interprets it in sorted-batch order).
    hidden0 = (jnp.zeros((2 * n_layers, B, H), jnp.float32)
               if hidden is None else hidden)

    layer_in = x                                               # [T_eff, S, B, F]
    h_finals = []
    out = None
    for l in range(n_layers):
        p = params["gru"][l]
        S, F = layer_in.shape[1], layer_in.shape[3]
        w_ih_all, b_pre, w_hh_all, b_hh_n = _pack_layer(p, S, F, H)
        # hoisted input projection: one GEMM for both directions and all gates
        gi = jnp.einsum("tsbf,dsfgh->tdgbh", layer_in, w_ih_all)
        gi = (gi + b_pre[None, :, :, None, :]).reshape(t_eff, 6, B, H)
        h0 = jnp.stack([hidden0[2 * l], hidden0[2 * l + 1]], axis=0)
        out, hf = bigru_layer_pallas(gi, lens_dev, w_hh_all, b_hh_n, h0)
        h_finals.append(hf)
        layer_in = out                                          # [T_eff, 2, B, H] (no concat)
        # TODO(synk): inter-layer dropout is a train-mode-only op; eval semantics assumed.

    outputs = out[:, 0] + out[:, 1]                             # sum fwd/bwd halves [T_eff,B,H]
    hidden_out = jnp.concatenate(h_finals, axis=0)              # [2*n_layers, B, H]

    unsort = jnp.asarray(unsort_idx)
    outputs = outputs[:, unsort, :]
    hidden_out = hidden_out[:, unsort, :]
    return outputs, hidden_out, embedded_sorted                 # embedded in sorted order (as in torch)


# ----------------------------------------------------------------------------
# Pure-JAX naive reference (raw weights, explicit mask tensor) for validation.
# ----------------------------------------------------------------------------
def gru_layer_ref(x, mask, w_ih, w_hh, b_ih, b_hh, h0, reverse):
    T = x.shape[0]
    H = h0.shape[-1]
    ts = jnp.arange(T - 1, -1, -1) if reverse else jnp.arange(T)

    def step(h, t):
        gi = x[t] @ w_ih + b_ih
        gh = h @ w_hh + b_hh
        r = jax.nn.sigmoid(gi[:, :H] + gh[:, :H])
        z = jax.nn.sigmoid(gi[:, H:2 * H] + gh[:, H:2 * H])
        n = jnp.tanh(gi[:, 2 * H:] + r * gh[:, 2 * H:])
        h_new = (1.0 - z) * n + z * h
        m = mask[t]
        return m * h_new + (1.0 - m) * h, m * h_new

    h_f, outs = lax.scan(step, h0, ts)
    out = outs[::-1] if reverse else outs
    return out, h_f


def encoder_forward_ref(params, input_seqs, input_lens, hidden=None):
    n_layers = params["n_layers"]
    H = params["hidden_size"]
    T, B = input_seqs.shape

    embedded = params["embedding"][input_seqs]
    embedded = jnp.transpose(embedded, (1, 0, 2))
    sort_idx = np.argsort(-input_lens)
    unsort_idx = np.argsort(sort_idx)
    lens_sorted = input_lens[sort_idx]
    embedded = jnp.transpose(embedded[jnp.asarray(sort_idx)], (1, 0, 2))

    t_eff = int(np.max(input_lens))
    x = embedded[:t_eff].astype(jnp.float32)
    mask2d = (np.arange(t_eff)[:, None] < lens_sorted[None, :]).astype(np.float32)
    mask = jnp.broadcast_to(jnp.asarray(mask2d)[:, :, None], (t_eff, B, H))

    hidden0 = (jnp.zeros((2 * n_layers, B, H), jnp.float32)
               if hidden is None else hidden)

    layer_in = x
    h_finals = []
    out_f = out_b = None
    for l in range(n_layers):
        p = params["gru"][l]
        out_f, h_f = gru_layer_ref(layer_in, mask, p["w_ih_f"], p["w_hh_f"],
                                   p["b_ih_f"], p["b_hh_f"], hidden0[2 * l], False)
        out_b, h_b = gru_layer_ref(layer_in, mask, p["w_ih_b"], p["w_hh_b"],
                                   p["b_ih_b"], p["b_hh_b"], hidden0[2 * l + 1], True)
        h_finals += [h_f, h_b]
        layer_in = jnp.concatenate([out_f, out_b], axis=-1)

    outputs = out_f + out_b
    hidden_out = jnp.stack(h_finals, axis=0)
    unsort = jnp.asarray(unsort_idx)
    outputs = outputs[:, unsort, :]
    hidden_out = hidden_out[:, unsort, :]
    return outputs, hidden_out, embedded


# ----------------------------------------------------------------------------
# Deterministic parameter init (mirrors nn.GRU default uniform + init_gru's
# orthogonal hidden-hidden blocks). Weights stored pre-transposed:
#   w_ih: [in, 3H], w_hh: [H, 3H], b_ih/b_hh: [1, 3H], gate order (r, z, n).
# ----------------------------------------------------------------------------
def init_params(key, vocab_size, embed_size, hidden_size, n_layers):
    keys = iter(jax.random.split(key, 128))
    emb = jax.random.normal(next(keys), (vocab_size, embed_size), jnp.float32)
    scale = 1.0 / np.sqrt(hidden_size)
    gru = []
    for l in range(n_layers):
        in_size = embed_size if l == 0 else 2 * hidden_size
        layer = {}
        for d in ("f", "b"):
            w_ih = jax.random.uniform(next(keys), (3 * hidden_size, in_size),
                                      jnp.float32, -scale, scale)
            blocks = []
            for _ in range(3):
                m = jax.random.normal(next(keys), (hidden_size, hidden_size), jnp.float32)
                q, _ = jnp.linalg.qr(m)
                blocks.append(q)
            w_hh = jnp.concatenate(blocks, axis=0)              # [3H, H]
            b_ih = jax.random.uniform(next(keys), (3 * hidden_size,),
                                      jnp.float32, -scale, scale)
            b_hh = jax.random.uniform(next(keys), (3 * hidden_size,),
                                      jnp.float32, -scale, scale)
            layer[f"w_ih_{d}"] = w_ih.T                         # [in, 3H]
            layer[f"w_hh_{d}"] = w_hh.T                         # [H, 3H]
            layer[f"b_ih_{d}"] = b_ih[None, :]                  # [1, 3H]
            layer[f"b_hh_{d}"] = b_hh[None, :]                  # [1, 3H]
        gru.append(layer)
    return {"embedding": emb, "gru": gru,
            "n_layers": n_layers, "hidden_size": hidden_size}


if __name__ == "__main__":
    vocab_size, embed_size, hidden_size, n_layers = 50, 32, 32, 2
    T, B = 8, 4

    key = jax.random.PRNGKey(0)
    k_param, k_seq = jax.random.split(key)
    params = init_params(k_param, vocab_size, embed_size, hidden_size, n_layers)
    input_seqs = jax.random.randint(k_seq, (T, B), 0, vocab_size, dtype=jnp.int32)
    input_lens = np.array([5, 8, 3, 8], dtype=np.int32)

    outputs, hidden, embedded = encoder_forward(params, input_seqs, input_lens)
    jax.block_until_ready((outputs, hidden, embedded))

    # cross-check the fused Pallas path against a naive pure-JAX reference
    outputs_r, hidden_r, embedded_r = encoder_forward_ref(params, input_seqs, input_lens)
    assert np.allclose(np.asarray(outputs), np.asarray(outputs_r), atol=1e-4)
    assert np.allclose(np.asarray(hidden), np.asarray(hidden_r), atol=1e-4)
    assert np.allclose(np.asarray(embedded), np.asarray(embedded_r), atol=1e-5)

    assert outputs.shape == (int(np.max(input_lens)), B, hidden_size)
    assert hidden.shape == (2 * n_layers, B, hidden_size)
    assert embedded.shape == (T, B, embed_size)
    print("KERNEL_OK")
</pallas_src>

<mosaic_0001>
module attributes {stable_mosaic.version = 11 : i64} {
  func.func @_bigru_layer_kernel(%arg0: i32, %arg1: memref<4x1xi32, #tpu.memory_space<vmem>>, %arg2: memref<8x6x4x32xf32, #tpu.memory_space<vmem>>, %arg3: memref<6x32x32xf32, #tpu.memory_space<vmem>>, %arg4: memref<2x1x32xf32, #tpu.memory_space<vmem>>, %arg5: memref<2x4x32xf32, #tpu.memory_space<vmem>>, %arg6: memref<8x2x4x32xf32, #tpu.memory_space<vmem>>, %arg7: memref<2x4x32xf32, #tpu.memory_space<vmem>>) attributes {dimension_semantics = [#tpu.dimension_semantics<parallel>], iteration_bounds = array<i64: 1>, scalar_prefetch = 0 : i64, scratch_operands = 0 : i64, tpu.core_type = #tpu.core_type<tc>, window_params = [{transform_indices = @transform_0, window_bounds = array<i64: 4, 1>}, {transform_indices = @transform_1, window_bounds = array<i64: 8, 6, 4, 32>}, {pipeline_mode = #tpu.pipeline_mode<synchronous>, transform_indices = @transform_2, window_bounds = array<i64: 6, 32, 32>}, {pipeline_mode = #tpu.pipeline_mode<synchronous>, transform_indices = @transform_3, window_bounds = array<i64: 2, 1, 32>}, {transform_indices = @transform_4, window_bounds = array<i64: 2, 4, 32>}, {transform_indices = @transform_5, window_bounds = array<i64: 8, 2, 4, 32>}, {transform_indices = @transform_6, window_bounds = array<i64: 2, 4, 32>}]} {
    %c0 = arith.constant 0 : index
    %c0_0 = arith.constant 0 : index
    %c0_1 = arith.constant 0 : index
    %0 = vector.load %arg3[%c0, %c0_0, %c0_1] : memref<6x32x32xf32, #tpu.memory_space<vmem>>, vector<1x32x32xf32>
    %1 = vector.shape_cast %0 : vector<1x32x32xf32> to vector<32x32xf32>
    %c1 = arith.constant 1 : index
    %c0_2 = arith.constant 0 : index
    %c0_3 = arith.constant 0 : index
    %2 = vector.load %arg3[%c1, %c0_2, %c0_3] : memref<6x32x32xf32, #tpu.memory_space<vmem>>, vector<1x32x32xf32>
    %3 = vector.shape_cast %2 : vector<1x32x32xf32> to vector<32x32xf32>
    %c2 = arith.constant 2 : index
    %c0_4 = arith.constant 0 : index
    %c0_5 = arith.constant 0 : index
    %4 = vector.load %arg3[%c2, %c0_4, %c0_5] : memref<6x32x32xf32, #tpu.memory_space<vmem>>, vector<1x32x32xf32>
    %5 = vector.shape_cast %4 : vector<1x32x32xf32> to vector<32x32xf32>
    %c3 = arith.constant 3 : index
    %c0_6 = arith.constant 0 : index
    %c0_7 = arith.constant 0 : index
    %6 = vector.load %arg3[%c3, %c0_6, %c0_7] : memref<6x32x32xf32, #tpu.memory_space<vmem>>, vector<1x32x32xf32>
    %7 = vector.shape_cast %6 : vector<1x32x32xf32> to vector<32x32xf32>
    %c4 = arith.constant 4 : index
    %c0_8 = arith.constant 0 : index
    %c0_9 = arith.constant 0 : index
    %8 = vector.load %arg3[%c4, %c0_8, %c0_9] : memref<6x32x32xf32, #tpu.memory_space<vmem>>, vector<1x32x32xf32>
    %9 = vector.shape_cast %8 : vector<1x32x32xf32> to vector<32x32xf32>
    %c5 = arith.constant 5 : index
    %c0_10 = arith.constant 0 : index
    %c0_11 = arith.constant 0 : index
    %10 = vector.load %arg3[%c5, %c0_10, %c0_11] : memref<6x32x32xf32, #tpu.memory_space<vmem>>, vector<1x32x32xf32>
    %11 = vector.shape_cast %10 : vector<1x32x32xf32> to vector<32x32xf32>
    %c0_12 = arith.constant 0 : index
    %c0_13 = arith.constant 0 : index
    %c0_14 = arith.constant 0 : index
    %12 = vector.load %arg4[%c0_12, %c0_13, %c0_14] : memref<2x1x32xf32, #tpu.memory_space<vmem>>, vector<1x1x32xf32>
    %13 = vector.shape_cast %12 : vector<1x1x32xf32> to vector<1x32xf32>
    %14 = vector.shape_cast %13 : vector<1x32xf32> to vector<1x32xf32>
    %15 = vector.broadcast %14 : vector<1x32xf32> to vector<4x32xf32>
    %c1_15 = arith.constant 1 : index
    %c0_16 = arith.constant 0 : index
    %c0_17 = arith.constant 0 : index
    %16 = vector.load %arg4[%c1_15, %c0_16, %c0_17] : memref<2x1x32xf32, #tpu.memory_space<vmem>>, vector<1x1x32xf32>
    %17 = vector.shape_cast %16 : vector<1x1x32xf32> to vector<1x32xf32>
    %18 = vector.shape_cast %17 : vector<1x32xf32> to vector<1x32xf32>
    %19 = vector.broadcast %18 : vector<1x32xf32> to vector<4x32xf32>
    %c0_18 = arith.constant 0 : index
    %c0_19 = arith.constant 0 : index
    %20 = vector.load %arg1[%c0_18, %c0_19] : memref<4x1xi32, #tpu.memory_space<vmem>>, vector<4x1xi32>
    %c0_20 = arith.constant 0 : index
    %c0_21 = arith.constant 0 : index
    %c0_22 = arith.constant 0 : index
    %21 = vector.load %arg5[%c0_20, %c0_21, %c0_22] : memref<2x4x32xf32, #tpu.memory_space<vmem>>, vector<1x4x32xf32>
    %22 = vector.shape_cast %21 : vector<1x4x32xf32> to vector<4x32xf32>
    %c1_23 = arith.constant 1 : index
    %c0_24 = arith.constant 0 : index
    %c0_25 = arith.constant 0 : index
    %23 = vector.load %arg5[%c1_23, %c0_24, %c0_25] : memref<2x4x32xf32, #tpu.memory_space<vmem>>, vector<1x4x32xf32>
    %24 = vector.shape_cast %23 : vector<1x4x32xf32> to vector<4x32xf32>
    %c0_i32 = arith.constant 0 : i32
    %c7_i32 = arith.constant 7 : i32
    %25 = arith.subi %c7_i32, %c0_i32 : i32
    %26 = arith.index_cast %c0_i32 : i32 to index
    %c0_26 = arith.constant 0 : index
    %c0_27 = arith.constant 0 : index
    %c0_28 = arith.constant 0 : index
    %27 = vector.load %arg2[%26, %c0_26, %c0_27, %c0_28] : memref<8x6x4x32xf32, #tpu.memory_space<vmem>>, vector<1x1x4x32xf32>
    %28 = vector.shape_cast %27 : vector<1x1x4x32xf32> to vector<4x32xf32>
    %29 = arith.index_cast %c0_i32 : i32 to index
    %c1_29 = arith.constant 1 : index
    %c0_30 = arith.constant 0 : index
    %c0_31 = arith.constant 0 : index
    %30 = vector.load %arg2[%29, %c1_29, %c0_30, %c0_31] : memref<8x6x4x32xf32, #tpu.memory_space<vmem>>, vector<1x1x4x32xf32>
    %31 = vector.shape_cast %30 : vector<1x1x4x32xf32> to vector<4x32xf32>
    %32 = arith.index_cast %c0_i32 : i32 to index
    %c2_32 = arith.constant 2 : index
    %c0_33 = arith.constant 0 : index
    %c0_34 = arith.constant 0 : index
    %33 = vector.load %arg2[%32, %c2_32, %c0_33, %c0_34] : memref<8x6x4x32xf32, #tpu.memory_space<vmem>>, vector<1x1x4x32xf32>
    %34 = vector.shape_cast %33 : vector<1x1x4x32xf32> to vector<4x32xf32>
    %cst = arith.constant dense<0.000000e+00> : vector<4x32xf32>
    %35 = tpu.matmul %22, %1, %cst {dimension_numbers = #tpu.dot_dimension_numbers<[1], [0], [0], [1], [0, 0, 1, 1], [], []>} : vector<4x32xf32>, vector<32x32xf32>, vector<4x32xf32> -> vector<4x32xf32>
    %36 = arith.addf %28, %35 : vector<4x32xf32>
    %37 = arith.negf %36 : vector<4x32xf32>
    %38 = math.exp %37 : vector<4x32xf32>
    %cst_35 = arith.constant 1.000000e+00 : f32
    %39 = vector.broadcast %cst_35 : f32 to vector<4x32xf32>
    %40 = arith.addf %39, %38 : vector<4x32xf32>
    %41 = arith.divf %39, %40 : vector<4x32xf32>
    %cst_36 = arith.constant dense<0.000000e+00> : vector<4x32xf32>
    %42 = tpu.matmul %22, %3, %cst_36 {dimension_numbers = #tpu.dot_dimension_numbers<[1], [0], [0], [1], [0, 0, 1, 1], [], []>} : vector<4x32xf32>, vector<32x32xf32>, vector<4x32xf32> -> vector<4x32xf32>
    %43 = arith.addf %31, %42 : vector<4x32xf32>
    %44 = arith.negf %43 : vector<4x32xf32>
    %45 = math.exp %44 : vector<4x32xf32>
    %cst_37 = arith.constant 1.000000e+00 : f32
    %46 = vector.broadcast %cst_37 : f32 to vector<4x32xf32>
    %47 = arith.addf %46, %45 : vector<4x32xf32>
    %48 = arith.divf %46, %47 : vector<4x32xf32>
    %cst_38 = arith.constant dense<0.000000e+00> : vector<4x32xf32>
    %49 = tpu.matmul %22, %5, %cst_38 {dimension_numbers = #tpu.dot_dimension_numbers<[1], [0], [0], [1], [0, 0, 1, 1], [], []>} : vector<4x32xf32>, vector<32x32xf32>, vector<4x32xf32> -> vector<4x32xf32>
    %50 = arith.addf %49, %15 : vector<4x32xf32>
    %51 = arith.mulf %41, %50 : vector<4x32xf32>
    %52 = arith.addf %34, %51 : vector<4x32xf32>
    %53 = math.tanh %52 : vector<4x32xf32>
    %cst_39 = arith.constant 1.000000e+00 : f32
    %54 = vector.broadcast %cst_39 : f32 to vector<4x32xf32>
    %55 = arith.subf %54, %48 : vector<4x32xf32>
    %56 = arith.mulf %55, %53 : vector<4x32xf32>
    %57 = arith.mulf %48, %22 : vector<4x32xf32>
    %58 = arith.addf %56, %57 : vector<4x32xf32>
    %59 = vector.broadcast %c0_i32 : i32 to vector<4x1xi32>
    %60 = arith.cmpi sgt, %20, %59 : vector<4x1xi32>
    %61 = arith.extui %60 : vector<4x1xi1> to vector<4x1xi32>
    %62 = arith.sitofp %61 : vector<4x1xi32> to vector<4x1xf32>
    %63 = vector.broadcast %62 : vector<4x1xf32> to vector<4x32xf32>
    %64 = arith.mulf %63, %58 : vector<4x32xf32>
    %65 = arith.index_cast %c0_i32 : i32 to index
    %c0_40 = arith.constant 0 : index
    %c0_41 = arith.constant 0 : index
    %c0_42 = arith.constant 0 : index
    %66 = vector.load %arg6[%65, %c0_40, %c0_41, %c0_42] : memref<8x2x4x32xf32, #tpu.memory_space<vmem>>, vector<1x1x4x32xf32>
    %67 = vector.shape_cast %66 : vector<1x1x4x32xf32> to vector<4x32xf32>
    %68 = vector.shape_cast %64 : vector<4x32xf32> to vector<1x1x4x32xf32>
    tpu.vector_store %arg6[%65, %c0_40, %c0_41, %c0_42], %68 {strides = array<i32>} : memref<8x2x4x32xf32, #tpu.memory_space<vmem>>, vector<1x1x4x32xf32>,
    %69 = vector.broadcast %62 : vector<4x1xf32> to vector<4x32xf32>
    %70 = arith.mulf %69, %58 : vector<4x32xf32>
    %cst_43 = arith.constant 1.000000e+00 : f32
    %71 = vector.broadcast %cst_43 : f32 to vector<4x1xf32>
    %72 = arith.subf %71, %62 : vector<4x1xf32>
    %73 = vector.broadcast %72 : vector<4x1xf32> to vector<4x32xf32>
    %74 = arith.mulf %73, %22 : vector<4x32xf32>
    %75 = arith.addf %70, %74 : vector<4x32xf32>
    %76 = arith.index_cast %25 : i32 to index
    %c3_44 = arith.constant 3 : index
    %c0_45 = arith.constant 0 : index
    %c0_46 = arith.constant 0 : index
    %77 = vector.load %arg2[%76, %c3_44, %c0_45, %c0_46] : memref<8x6x4x32xf32, #tpu.memory_space<vmem>>, vector<1x1x4x32xf32>
    %78 = vector.shape_cast %77 : vector<1x1x4x32xf32> to vector<4x32xf32>
    %79 = arith.index_cast %25 : i32 to index
    %c4_47 = arith.constant 4 : index
    %c0_48 = arith.constant 0 : index
    %c0_49 = arith.constant 0 : index
    %80 = vector.load %arg2[%79, %c4_47, %c0_48, %c0_49] : memref<8x6x4x32xf32, #tpu.memory_space<vmem>>, vector<1x1x4x32xf32>
    %81 = vector.shape_cast %80 : vector<1x1x4x32xf32> to vector<4x32xf32>
    %82 = arith.index_cast %25 : i32 to index
    %c5_50 = arith.constant 5 : index
    %c0_51 = arith.constant 0 : index
    %c0_52 = arith.constant 0 : index
    %83 = vector.load %arg2[%82, %c5_50, %c0_51, %c0_52] : memref<8x6x4x32xf32, #tpu.memory_space<vmem>>, vector<1x1x4x32xf32>
    %84 = vector.shape_cast %83 : vector<1x1x4x32xf32> to vector<4x32xf32>
    %cst_53 = arith.constant dense<0.000000e+00> : vector<4x32xf32>
    %85 = tpu.matmul %24, %7, %cst_53 {dimension_numbers = #tpu.dot_dimension_numbers<[1], [0], [0], [1], [0, 0, 1, 1], [], []>} : vector<4x32xf32>, vector<32x32xf32>, vector<4x32xf32> -> vector<4x32xf32>
    %86 = arith.addf %78, %85 : vector<4x32xf32>
    %87 = arith.negf %86 : vector<4x32xf32>
    %88 = math.exp %87 : vector<4x32xf32>
    %cst_54 = arith.constant 1.000000e+00 : f32
    %89 = vector.broadcast %cst_54 : f32 to vector<4x32xf32>
    %90 = arith.addf %89, %88 : vector<4x32xf32>
    %91 = arith.divf %89, %90 : vector<4x32xf32>
    %cst_55 = arith.constant dense<0.000000e+00> : vector<4x32xf32>
    %92 = tpu.matmul %24, %9, %cst_55 {dimension_numbers = #tpu.dot_dimension_numbers<[1], [0], [0], [1], [0, 0, 1, 1], [], []>} : vector<4x32xf32>, vector<32x32xf32>, vector<4x32xf32> -> vector<4x32xf32>
    %93 = arith.addf %81, %92 : vector<4x32xf32>
    %94 = arith.negf %93 : vector<4x32xf32>
    %95 = math.exp %94 : vector<4x32xf32>
    %cst_56 = arith.constant 1.000000e+00 : f32
    %96 = vector.broadcast %cst_56 : f32 to vector<4x32xf32>
    %97 = arith.addf %96, %95 : vector<4x32xf32>
    %98 = arith.divf %96, %97 : vector<4x32xf32>
    %cst_57 = arith.constant dense<0.000000e+00> : vector<4x32xf32>
    %99 = tpu.matmul %24, %11, %cst_57 {dimension_numbers = #tpu.dot_dimension_numbers<[1], [0], [0], [1], [0, 0, 1, 1], [], []>} : vector<4x32xf32>, vector<32x32xf32>, vector<4x32xf32> -> vector<4x32xf32>
    %100 = arith.addf %99, %19 : vector<4x32xf32>
    %101 = arith.mulf %91, %100 : vector<4x32xf32>
    %102 = arith.addf %84, %101 : vector<4x32xf32>
    %103 = math.tanh %102 : vector<4x32xf32>
    %cst_58 = arith.constant 1.000000e+00 : f32
    %104 = vector.broadcast %cst_58 : f32 to vector<4x32xf32>
    %105 = arith.subf %104, %98 : vector<4x32xf32>
    %106 = arith.mulf %105, %103 : vector<4x32xf32>
    %107 = arith.mulf %98, %24 : vector<4x32xf32>
    %108 = arith.addf %106, %107 : vector<4x32xf32>
    %109 = vector.broadcast %25 : i32 to vector<4x1xi32>
    %110 = arith.cmpi sgt, %20, %109 : vector<4x1xi32>
    %111 = arith.extui %110 : vector<4x1xi1> to vector<4x1xi32>
    %112 = arith.sitofp %111 : vector<4x1xi32> to vector<4x1xf32>
    %113 = vector.broadcast %112 : vector<4x1xf32> to vector<4x32xf32>
    %114 = arith.mulf %113, %108 : vector<4x32xf32>
    %115 = arith.index_cast %25 : i32 to index
    %c1_59 = arith.constant 1 : index
    %c0_60 = arith.constant 0 : index
    %c0_61 = arith.constant 0 : index
    %116 = vector.load %arg6[%115, %c1_59, %c0_60, %c0_61] : memref<8x2x4x32xf32, #tpu.memory_space<vmem>>, vector<1x1x4x32xf32>
    %117 = vector.shape_cast %116 : vector<1x1x4x32xf32> to vector<4x32xf32>
    %118 = vector.shape_cast %114 : vector<4x32xf32> to vector<1x1x4x32xf32>
    tpu.vector_store %arg6[%115, %c1_59, %c0_60, %c0_61], %118 {strides = array<i32>} : memref<8x2x4x32xf32, #tpu.memory_space<vmem>>, vector<1x1x4x32xf32>,
    %119 = vector.broadcast %112 : vector<4x1xf32> to vector<4x32xf32>
    %120 = arith.mulf %119, %108 : vector<4x32xf32>
    %cst_62 = arith.constant 1.000000e+00 : f32
    %121 = vector.broadcast %cst_62 : f32 to vector<4x1xf32>
    %122 = arith.subf %121, %112 : vector<4x1xf32>
    %123 = vector.broadcast %122 : vector<4x1xf32> to vector<4x32xf32>
    %124 = arith.mulf %123, %24 : vector<4x32xf32>
    %125 = arith.addf %120, %124 : vector<4x32xf32>
    %c1_i32 = arith.constant 1 : i32
    %c7_i32_63 = arith.constant 7 : i32
    %126 = arith.subi %c7_i32_63, %c1_i32 : i32
    %127 = arith.index_cast %c1_i32 : i32 to index
    %c0_64 = arith.constant 0 : index
    %c0_65 = arith.constant 0 : index
    %c0_66 = arith.constant 0 : index
    %128 = vector.load %arg2[%127, %c0_64, %c0_65, %c0_66] : memref<8x6x4x32xf32, #tpu.memory_space<vmem>>, vector<1x1x4x32xf32>
    %129 = vector.shape_cast %128 : vector<1x1x4x32xf32> to vector<4x32xf32>
    %130 = arith.index_cast %c1_i32 : i32 to index
    %c1_67 = arith.constant 1 : index
    %c0_68 = arith.constant 0 : index
    %c0_69 = arith.constant 0 : index
    %131 = vector.load %arg2[%130, %c1_67, %c0_68, %c0_69] : memref<8x6x4x32xf32, #tpu.memory_space<vmem>>, vector<1x1x4x32xf32>
    %132 = vector.shape_cast %131 : vector<1x1x4x32xf32> to vector<4x32xf32>
    %133 = arith.index_cast %c1_i32 : i32 to index
    %c2_70 = arith.constant 2 : index
    %c0_71 = arith.constant 0 : index
    %c0_72 = arith.constant 0 : index
    %134 = vector.load %arg2[%133, %c2_70, %c0_71, %c0_72] : memref<8x6x4x32xf32, #tpu.memory_space<vmem>>, vector<1x1x4x32xf32>
    %135 = vector.shape_cast %134 : vector<1x1x4x32xf32> to vector<4x32xf32>
    %cst_73 = arith.constant dense<0.000000e+00> : vector<4x32xf32>
    %136 = tpu.matmul %75, %1, %cst_73 {dimension_numbers = #tpu.dot_dimension_numbers<[1], [0], [0], [1], [0, 0, 1, 1], [], []>} : vector<4x32xf32>, vector<32x32xf32>, vector<4x32xf32> -> vector<4x32xf32>
    %137 = arith.addf %129, %136 : vector<4x32xf32>
    %138 = arith.negf %137 : vector<4x32xf32>
    %139 = math.exp %138 : vector<4x32xf32>
    %cst_74 = arith.constant 1.000000e+00 : f32
    %140 = vector.broadcast %cst_74 : f32 to vector<4x32xf32>
    %141 = arith.addf %140, %139 : vector<4x32xf32>
    %142 = arith.divf %140, %141 : vector<4x32xf32>
    %cst_75 = arith.constant dense<0.000000e+00> : vector<4x32xf32>
    %143 = tpu.matmul %75, %3, %cst_75 {dimension_numbers = #tpu.dot_dimension_numbers<[1], [0], [0], [1], [0, 0, 1, 1], [], []>} : vector<4x32xf32>, vector<32x32xf32>, vector<4x32xf32> -> vector<4x32xf32>
    %144 = arith.addf %132, %143 : vector<4x32xf32>
    %145 = arith.negf %144 : vector<4x32xf32>
    %146 = math.exp %145 : vector<4x32xf32>
    %cst_76 = arith.constant 1.000000e+00 : f32
    %147 = vector.broadcast %cst_76 : f32 to vector<4x32xf32>
    %148 = arith.addf %147, %146 : vector<4x32xf32>
    %149 = arith.divf %147, %148 : vector<4x32xf32>
    %cst_77 = arith.constant dense<0.000000e+00> : vector<4x32xf32>
    %150 = tpu.matmul %75, %5, %cst_77 {dimension_numbers = #tpu.dot_dimension_numbers<[1], [0], [0], [1], [0, 0, 1, 1], [], []>} : vector<4x32xf32>, vector<32x32xf32>, vector<4x32xf32> -> vector<4x32xf32>
    %151 = arith.addf %150, %15 : vector<4x32xf32>
    %152 = arith.mulf %142, %151 : vector<4x32xf32>
    %153 = arith.addf %135, %152 : vector<4x32xf32>
    %154 = math.tanh %153 : vector<4x32xf32>
    %cst_78 = arith.constant 1.000000e+00 : f32
    %155 = vector.broadcast %cst_78 : f32 to vector<4x32xf32>
    %156 = arith.subf %155, %149 : vector<4x32xf32>
    %157 = arith.mulf %156, %154 : vector<4x32xf32>
    %158 = arith.mulf %149, %75 : vector<4x32xf32>
    %159 = arith.addf %157, %158 : vector<4x32xf32>
    %160 = vector.broadcast %c1_i32 : i32 to vector<4x1xi32>
    %161 = arith.cmpi sgt, %20, %160 : vector<4x1xi32>
    %162 = arith.extui %161 : vector<4x1xi1> to vector<4x1xi32>
    %163 = arith.sitofp %162 : vector<4x1xi32> to vector<4x1xf32>
    %164 = vector.broadcast %163 : vector<4x1xf32> to vector<4x32xf32>
    %165 = arith.mulf %164, %159 : vector<4x32xf32>
    %166 = arith.index_cast %c1_i32 : i32 to index
    %c0_79 = arith.constant 0 : index
    %c0_80 = arith.constant 0 : index
    %c0_81 = arith.constant 0 : index
    %167 = vector.load %arg6[%166, %c0_79, %c0_80, %c0_81] : memref<8x2x4x32xf32, #tpu.memory_space<vmem>>, vector<1x1x4x32xf32>
    %168 = vector.shape_cast %167 : vector<1x1x4x32xf32> to vector<4x32xf32>
    %169 = vector.shape_cast %165 : vector<4x32xf32> to vector<1x1x4x32xf32>
    tpu.vector_store %arg6[%166, %c0_79, %c0_80, %c0_81], %169 {strides = array<i32>} : memref<8x2x4x32xf32, #tpu.memory_space<vmem>>, vector<1x1x4x32xf32>,
    %170 = vector.broadcast %163 : vector<4x1xf32> to vector<4x32xf32>
    %171 = arith.mulf %170, %159 : vector<4x32xf32>
    %cst_82 = arith.constant 1.000000e+00 : f32
    %172 = vector.broadcast %cst_82 : f32 to vector<4x1xf32>
    %173 = arith.subf %172, %163 : vector<4x1xf32>
    %174 = vector.broadcast %173 : vector<4x1xf32> to vector<4x32xf32>
    %175 = arith.mulf %174, %75 : vector<4x32xf32>
    %176 = arith.addf %171, %175 : vector<4x32xf32>
    %177 = arith.index_cast %126 : i32 to index
    %c3_83 = arith.constant 3 : index
    %c0_84 = arith.constant 0 : index
    %c0_85 = arith.constant 0 : index
    %178 = vector.load %arg2[%177, %c3_83, %c0_84, %c0_85] : memref<8x6x4x32xf32, #tpu.memory_space<vmem>>, vector<1x1x4x32xf32>
    %179 = vector.shape_cast %178 : vector<1x1x4x32xf32> to vector<4x32xf32>
    %180 = arith.index_cast %126 : i32 to index
    %c4_86 = arith.constant 4 : index
    %c0_87 = arith.constant 0 : index
    %c0_88 = arith.constant 0 : index
    %181 = vector.load %arg2[%180, %c4_86, %c0_87, %c0_88] : memref<8x6x4x32xf32, #tpu.memory_space<vmem>>, vector<1x1x4x32xf32>
    %182 = vector.shape_cast %181 : vector<1x1x4x32xf32> to vector<4x32xf32>
    %183 = arith.index_cast %126 : i32 to index
    %c5_89 = arith.constant 5 : index
    %c0_90 = arith.constant 0 : index
    %c0_91 = arith.constant 0 : index
    %184 = vector.load %arg2[%183, %c5_89, %c0_90, %c0_91] : memref<8x6x4x32xf32, #tpu.memory_space<vmem>>, vector<1x1x4x32xf32>
    %185 = vector.shape_cast %184 : vector<1x1x4x32xf32> to vector<4x32xf32>
    %cst_92 = arith.constant dense<0.000000e+00> : vector<4x32xf32>
    %186 = tpu.matmul %125, %7, %cst_92 {dimension_numbers = #tpu.dot_dimension_numbers<[1], [0], [0], [1], [0, 0, 1, 1], [], []>} : vector<4x32xf32>, vector<32x32xf32>, vector<4x32xf32> -> vector<4x32xf32>
    %187 = arith.addf %179, %186 : vector<4x32xf32>
    %188 = arith.negf %187 : vector<4x32xf32>
    %189 = math.exp %188 : vector<4x32xf32>
    %cst_93 = arith.constant 1.000000e+00 : f32
    %190 = vector.broadcast %cst_93 : f32 to vector<4x32xf32>
    %191 = arith.addf %190, %189 : vector<4x32xf32>
    %192 = arith.divf %190, %191 : vector<4x32xf32>
    %cst_94 = arith.constant dense<0.000000e+00> : vector<4x32xf32>
    %193 = tpu.matmul %125, %9, %cst_94 {dimension_numbers = #tpu.dot_dimension_numbers<[1], [0], [0], [1], [0, 0, 1, 1], [], []>} : vector<4x32xf32>, vector<32x32xf32>, vector<4x32xf32> -> vector<4x32xf32>
    %194 = arith.addf %182, %193 : vector<4x32xf32>
    %195 = arith.negf %194 : vector<4x32xf32>
    %196 = math.exp %195 : vector<4x32xf32>
    %cst_95 = arith.constant 1.000000e+00 : f32
    %197 = vector.broadcast %cst_95 : f32 to vector<4x32xf32>
    %198 = arith.addf %197, %196 : vector<4x32xf32>
    %199 = arith.divf %197, %198 : vector<4x32xf32>
    %cst_96 = arith.constant dense<0.000000e+00> : vector<4x32xf32>
    %200 = tpu.matmul %125, %11, %cst_96 {dimension_numbers = #tpu.dot_dimension_numbers<[1], [0], [0], [1], [0, 0, 1, 1], [], []>} : vector<4x32xf32>, vector<32x32xf32>, vector<4x32xf32> -> vector<4x32xf32>
    %201 = arith.addf %200, %19 : vector<4x32xf32>
    %202 = arith.mulf %192, %201 : vector<4x32xf32>
    %203 = arith.addf %185, %202 : vector<4x32xf32>
    %204 = math.tanh %203 : vector<4x32xf32>
    %cst_97 = arith.constant 1.000000e+00 : f32
    %205 = vector.broadcast %cst_97 : f32 to vector<4x32xf32>
    %206 = arith.subf %205, %199 : vector<4x32xf32>
    %207 = arith.mulf %206, %204 : vector<4x32xf32>
    %208 = arith.mulf %199, %125 : vector<4x32xf32>
    %209 = arith.addf %207, %208 : vector<4x32xf32>
    %210 = vector.broadcast %126 : i32 to vector<4x1xi32>
    %211 = arith.cmpi sgt, %20, %210 : vector<4x1xi32>
    %212 = arith.extui %211 : vector<4x1xi1> to vector<4x1xi32>
    %213 = arith.sitofp %212 : vector<4x1xi32> to vector<4x1xf32>
    %214 = vector.broadcast %213 : vector<4x1xf32> to vector<4x32xf32>
    %215 = arith.mulf %214, %209 : vector<4x32xf32>
    %216 = arith.index_cast %126 : i32 to index
    %c1_98 = arith.constant 1 : index
    %c0_99 = arith.constant 0 : index
    %c0_100 = arith.constant 0 : index
    %217 = vector.load %arg6[%216, %c1_98, %c0_99, %c0_100] : memref<8x2x4x32xf32, #tpu.memory_space<vmem>>, vector<1x1x4x32xf32>
    %218 = vector.shape_cast %217 : vector<1x1x4x32xf32> to vector<4x32xf32>
    %219 = vector.shape_cast %215 : vector<4x32xf32> to vector<1x1x4x32xf32>
    tpu.vector_store %arg6[%216, %c1_98, %c0_99, %c0_100], %219 {strides = array<i32>} : memref<8x2x4x32xf32, #tpu.memory_space<vmem>>, vector<1x1x4x32xf32>,
    %220 = vector.broadcast %213 : vector<4x1xf32> to vector<4x32xf32>
    %221 = arith.mulf %220, %209 : vector<4x32xf32>
    %cst_101 = arith.constant 1.000000e+00 : f32
    %222 = vector.broadcast %cst_101 : f32 to vector<4x1xf32>
    %223 = arith.subf %222, %213 : vector<4x1xf32>
    %224 = vector.broadcast %223 : vector<4x1xf32> to vector<4x32xf32>
    %225 = arith.mulf %224, %125 : vector<4x32xf32>
    %226 = arith.addf %221, %225 : vector<4x32xf32>
    %c2_i32 = arith.constant 2 : i32
    %c7_i32_102 = arith.constant 7 : i32
    %227 = arith.subi %c7_i32_102, %c2_i32 : i32
    %228 = arith.index_cast %c2_i32 : i32 to index
    %c0_103 = arith.constant 0 : index
    %c0_104 = arith.constant 0 : index
    %c0_105 = arith.constant 0 : index
    %229 = vector.load %arg2[%228, %c0_103, %c0_104, %c0_105] : memref<8x6x4x32xf32, #tpu.memory_space<vmem>>, vector<1x1x4x32xf32>
    %230 = vector.shape_cast %229 : vector<1x1x4x32xf32> to vector<4x32xf32>
    %231 = arith.index_cast %c2_i32 : i32 to index
    %c1_106 = arith.constant 1 : index
    %c0_107 = arith.constant 0 : index
    %c0_108 = arith.constant 0 : index
    %232 = vector.load %arg2[%231, %c1_106, %c0_107, %c0_108] : memref<8x6x4x32xf32, #tpu.memory_space<vmem>>, vector<1x1x4x32xf32>
    %233 = vector.shape_cast %232 : vector<1x1x4x32xf32> to vector<4x32xf32>
    %234 = arith.index_cast %c2_i32 : i32 to index
    %c2_109 = arith.constant 2 : index
    %c0_110 = arith.constant 0 : index
    %c0_111 = arith.constant 0 : index
    %235 = vector.load %arg2[%234, %c2_109, %c0_110, %c0_111] : memref<8x6x4x32xf32, #tpu.memory_space<vmem>>, vector<1x1x4x32xf32>
    %236 = vector.shape_cast %235 : vector<1x1x4x32xf32> to vector<4x32xf32>
    %cst_112 = arith.constant dense<0.000000e+00> : vector<4x32xf32>
    %237 = tpu.matmul %176, %1, %cst_112 {dimension_numbers = #tpu.dot_dimension_numbers<[1], [0], [0], [1], [0, 0, 1, 1], [], []>} : vector<4x32xf32>, vector<32x32xf32>, vector<4x32xf32> -> vector<4x32xf32>
    %238 = arith.addf %230, %237 : vector<4x32xf32>
    %239 = arith.negf %238 : vector<4x32xf32>
    %240 = math.exp %239 : vector<4x32xf32>
    %cst_113 = arith.constant 1.000000e+00 : f32
    %241 = vector.broadcast %cst_113 : f32 to vector<4x32xf32>
    %242 = arith.addf %241, %240 : vector<4x32xf32>
    %243 = arith.divf %241, %242 : vector<4x32xf32>
    %cst_114 = arith.constant dense<0.000000e+00> : vector<4x32xf32>
    %244 = tpu.matmul %176, %3, %cst_114 {dimension_numbers = #tpu.dot_dimension_numbers<[1], [0], [0], [1], [0, 0, 1, 1], [], []>} : vector<4x32xf32>, vector<32x32xf32>, vector<4x32xf32> -> vector<4x32xf32>
    %245 = arith.addf %233, %244 : vector<4x32xf32>
    %246 = arith.negf %245 : vector<4x32xf32>
    %247 = math.exp %246 : vector<4x32xf32>
    %cst_115 = arith.constant 1.000000e+00 : f32
    %248 = vector.broadcast %cst_115 : f32 to vector<4x32xf32>
    %249 = arith.addf %248, %247 : vector<4x32xf32>
    %250 = arith.divf %248, %249 : vector<4x32xf32>
    %cst_116 = arith.constant dense<0.000000e+00> : vector<4x32xf32>
    %251 = tpu.matmul %176, %5, %cst_116 {dimension_numbers = #tpu.dot_dimension_numbers<[1], [0], [0], [1], [0, 0, 1, 1], [], []>} : vector<4x32xf32>, vector<32x32xf32>, vector<4x32xf32> -> vector<4x32xf32>
    %252 = arith.addf %251, %15 : vector<4x32xf32>
    %253 = arith.mulf %243, %252 : vector<4x32xf32>
    %254 = arith.addf %236, %253 : vector<4x32xf32>
    %255 = math.tanh %254 : vector<4x32xf32>
    %cst_117 = arith.constant 1.000000e+00 : f32
    %256 = vector.broadcast %cst_117 : f32 to vector<4x32xf32>
    %257 = arith.subf %256, %250 : vector<4x32xf32>
    %258 = arith.mulf %257, %255 : vector<4x32xf32>
    %259 = arith.mulf %250, %176 : vector<4x32xf32>
    %260 = arith.addf %258, %259 : vector<4x32xf32>
    %261 = vector.broadcast %c2_i32 : i32 to vector<4x1xi32>
    %262 = arith.cmpi sgt, %20, %261 : vector<4x1xi32>
    %263 = arith.extui %262 : vector<4x1xi1> to vector<4x1xi32>
    %264 = arith.sitofp %263 : vector<4x1xi32> to vector<4x1xf32>
    %265 = vector.broadcast %264 : vector<4x1xf32> to vector<4x32xf32>
    %266 = arith.mulf %265, %260 : vector<4x32xf32>
    %267 = arith.index_cast %c2_i32 : i32 to index
    %c0_118 = arith.constant 0 : index
    %c0_119 = arith.constant 0 : index
    %c0_120 = arith.constant 0 : index
    %268 = vector.load %arg6[%267, %c0_118, %c0_119, %c0_120] : memref<8x2x4x32xf32, #tpu.memory_space<vmem>>, vector<1x1x4x32xf32>
    %269 = vector.shape_cast %268 : vector<1x1x4x32xf32> to vector<4x32xf32>
    %270 = vector.shape_cast %266 : vector<4x32xf32> to vector<1x1x4x32xf32>
    tpu.vector_store %arg6[%267, %c0_118, %c0_119, %c0_120], %270 {strides = array<i32>} : memref<8x2x4x32xf32, #tpu.memory_space<vmem>>, vector<1x1x4x32xf32>,
    %271 = vector.broadcast %264 : vector<4x1xf32> to vector<4x32xf32>
    %272 = arith.mulf %271, %260 : vector<4x32xf32>
    %cst_121 = arith.constant 1.000000e+00 : f32
    %273 = vector.broadcast %cst_121 : f32 to vector<4x1xf32>
    %274 = arith.subf %273, %264 : vector<4x1xf32>
    %275 = vector.broadcast %274 : vector<4x1xf32> to vector<4x32xf32>
    %276 = arith.mulf %275, %176 : vector<4x32xf32>
    %277 = arith.addf %272, %276 : vector<4x32xf32>
    %278 = arith.index_cast %227 : i32 to index
    %c3_122 = arith.constant 3 : index
    %c0_123 = arith.constant 0 : index
    %c0_124 = arith.constant 0 : index
    %279 = vector.load %arg2[%278, %c3_122, %c0_123, %c0_124] : memref<8x6x4x32xf32, #tpu.memory_space<vmem>>, vector<1x1x4x32xf32>
    %280 = vector.shape_cast %279 : vector<1x1x4x32xf32> to vector<4x32xf32>
    %281 = arith.index_cast %227 : i32 to index
    %c4_125 = arith.constant 4 : index
    %c0_126 = arith.constant 0 : index
    %c0_127 = arith.constant 0 : index
    %282 = vector.load %arg2[%281, %c4_125, %c0_126, %c0_127] : memref<8x6x4x32xf32, #tpu.memory_space<vmem>>, vector<1x1x4x32xf32>
    %283 = vector.shape_cast %282 : vector<1x1x4x32xf32> to vector<4x32xf32>
    %284 = arith.index_cast %227 : i32 to index
    %c5_128 = arith.constant 5 : index
    %c0_129 = arith.constant 0 : index
    %c0_130 = arith.constant 0 : index
    %285 = vector.load %arg2[%284, %c5_128, %c0_129, %c0_130] : memref<8x6x4x32xf32, #tpu.memory_space<vmem>>, vector<1x1x4x32xf32>
    %286 = vector.shape_cast %285 : vector<1x1x4x32xf32> to vector<4x32xf32>
    %cst_131 = arith.constant dense<0.000000e+00> : vector<4x32xf32>
    %287 = tpu.matmul %226, %7, %cst_131 {dimension_numbers = #tpu.dot_dimension_numbers<[1], [0], [0], [1], [0, 0, 1, 1], [], []>} : vector<4x32xf32>, vector<32x32xf32>, vector<4x32xf32> -> vector<4x32xf32>
    %288 = arith.addf %280, %287 : vector<4x32xf32>
    %289 = arith.negf %288 : vector<4x32xf32>
    %290 = math.exp %289 : vector<4x32xf32>
    %cst_132 = arith.constant 1.000000e+00 : f32
    %291 = vector.broadcast %cst_132 : f32 to vector<4x32xf32>
    %292 = arith.addf %291, %290 : vector<4x32xf32>
    %293 = arith.divf %291, %292 : vector<4x32xf32>
    %cst_133 = arith.constant dense<0.000000e+00> : vector<4x32xf32>
    %294 = tpu.matmul %226, %9, %cst_133 {dimension_numbers = #tpu.dot_dimension_numbers<[1], [0], [0], [1], [0, 0, 1, 1], [], []>} : vector<4x32xf32>, vector<32x32xf32>, vector<4x32xf32> -> vector<4x32xf32>
    %295 = arith.addf %283, %294 : vector<4x32xf32>
    %296 = arith.negf %295 : vector<4x32xf32>
    %297 = math.exp %296 : vector<4x32xf32>
    %cst_134 = arith.constant 1.000000e+00 : f32
    %298 = vector.broadcast %cst_134 : f32 to vector<4x32xf32>
    %299 = arith.addf %298, %297 : vector<4x32xf32>
    %300 = arith.divf %298, %299 : vector<4x32xf32>
    %cst_135 = arith.constant dense<0.000000e+00> : vector<4x32xf32>
    %301 = tpu.matmul %226, %11, %cst_135 {dimension_numbers = #tpu.dot_dimension_numbers<[1], [0], [0], [1], [0, 0, 1, 1], [], []>} : vector<4x32xf32>, vector<32x32xf32>, vector<4x32xf32> -> vector<4x32xf32>
    %302 = arith.addf %301, %19 : vector<4x32xf32>
    %303 = arith.mulf %293, %302 : vector<4x32xf32>
    %304 = arith.addf %286, %303 : vector<4x32xf32>
    %305 = math.tanh %304 : vector<4x32xf32>
    %cst_136 = arith.constant 1.000000e+00 : f32
    %306 = vector.broadcast %cst_136 : f32 to vector<4x32xf32>
    %307 = arith.subf %306, %300 : vector<4x32xf32>
    %308 = arith.mulf %307, %305 : vector<4x32xf32>
    %309 = arith.mulf %300, %226 : vector<4x32xf32>
    %310 = arith.addf %308, %309 : vector<4x32xf32>
    %311 = vector.broadcast %227 : i32 to vector<4x1xi32>
    %312 = arith.cmpi sgt, %20, %311 : vector<4x1xi32>
    %313 = arith.extui %312 : vector<4x1xi1> to vector<4x1xi32>
    %314 = arith.sitofp %313 : vector<4x1xi32> to vector<4x1xf32>
    %315 = vector.broadcast %314 : vector<4x1xf32> to vector<4x32xf32>
    %316 = arith.mulf %315, %310 : vector<4x32xf32>
    %317 = arith.index_cast %227 : i32 to index
    %c1_137 = arith.constant 1 : index
    %c0_138 = arith.constant 0 : index
    %c0_139 = arith.constant 0 : index
    %318 = vector.load %arg6[%317, %c1_137, %c0_138, %c0_139] : memref<8x2x4x32xf32, #tpu.memory_space<vmem>>, vector<1x1x4x32xf32>
    %319 = vector.shape_cast %318 : vector<1x1x4x32xf32> to vector<4x32xf32>
    %320 = vector.shape_cast %316 : vector<4x32xf32> to vector<1x1x4x32xf32>
    tpu.vector_store %arg6[%317, %c1_137, %c0_138, %c0_139], %320 {strides = array<i32>} : memref<8x2x4x32xf32, #tpu.memory_space<vmem>>, vector<1x1x4x32xf32>,
    %321 = vector.broadcast %314 : vector<4x1xf32> to vector<4x32xf32>
    %322 = arith.mulf %321, %310 : vector<4x32xf32>
    %cst_140 = arith.constant 1.000000e+00 : f32
    %323 = vector.broadcast %cst_140 : f32 to vector<4x1xf32>
    %324 = arith.subf %323, %314 : vector<4x1xf32>
    %325 = vector.broadcast %324 : vector<4x1xf32> to vector<4x32xf32>
    %326 = arith.mulf %325, %226 : vector<4x32xf32>
    %327 = arith.addf %322, %326 : vector<4x32xf32>
    %c3_i32 = arith.constant 3 : i32
    %c7_i32_141 = arith.constant 7 : i32
    %328 = arith.subi %c7_i32_141, %c3_i32 : i32
    %329 = arith.index_cast %c3_i32 : i32 to index
    %c0_142 = arith.constant 0 : index
    %c0_143 = arith.constant 0 : index
    %c0_144 = arith.constant 0 : index
    %330 = vector.load %arg2[%329, %c0_142, %c0_143, %c0_144] : memref<8x6x4x32xf32, #tpu.memory_space<vmem>>, vector<1x1x4x32xf32>
    %331 = vector.shape_cast %330 : vector<1x1x4x32xf32> to vector<4x32xf32>
    %332 = arith.index_cast %c3_i32 : i32 to index
    %c1_145 = arith.constant 1 : index
    %c0_146 = arith.constant 0 : index
    %c0_147 = arith.constant 0 : index
    %333 = vector.load %arg2[%332, %c1_145, %c0_146, %c0_147] : memref<8x6x4x32xf32, #tpu.memory_space<vmem>>, vector<1x1x4x32xf32>
    %334 = vector.shape_cast %333 : vector<1x1x4x32xf32> to vector<4x32xf32>
    %335 = arith.index_cast %c3_i32 : i32 to index
    %c2_148 = arith.constant 2 : index
    %c0_149 = arith.constant 0 : index
    %c0_150 = arith.constant 0 : index
    %336 = vector.load %arg2[%335, %c2_148, %c0_149, %c0_150] : memref<8x6x4x32xf32, #tpu.memory_space<vmem>>, vector<1x1x4x32xf32>
    %337 = vector.shape_cast %336 : vector<1x1x4x32xf32> to vector<4x32xf32>
    %cst_151 = arith.constant dense<0.000000e+00> : vector<4x32xf32>
    %338 = tpu.matmul %277, %1, %cst_151 {dimension_numbers = #tpu.dot_dimension_numbers<[1], [0], [0], [1], [0, 0, 1, 1], [], []>} : vector<4x32xf32>, vector<32x32xf32>, vector<4x32xf32> -> vector<4x32xf32>
    %339 = arith.addf %331, %338 : vector<4x32xf32>
    %340 = arith.negf %339 : vector<4x32xf32>
    %341 = math.exp %340 : vector<4x32xf32>
    %cst_152 = arith.constant 1.000000e+00 : f32
    %342 = vector.broadcast %cst_152 : f32 to vector<4x32xf32>
    %343 = arith.addf %342, %341 : vector<4x32xf32>
    %344 = arith.divf %342, %343 : vector<4x32xf32>
    %cst_153 = arith.constant dense<0.000000e+00> : vector<4x32xf32>
    %345 = tpu.matmul %277, %3, %cst_153 {dimension_numbers = #tpu.dot_dimension_numbers<[1], [0], [0], [1], [0, 0, 1, 1], [], []>} : vector<4x32xf32>, vector<32x32xf32>, vector<4x32xf32> -> vector<4x32xf32>
    %346 = arith.addf %334, %345 : vector<4x32xf32>
    %347 = arith.negf %346 : vector<4x32xf32>
    %348 = math.exp %347 : vector<4x32xf32>
    %cst_154 = arith.constant 1.000000e+00 : f32
    %349 = vector.broadcast %cst_154 : f32 to vector<4x32xf32>
    %350 = arith.addf %349, %348 : vector<4x32xf32>
    %351 = arith.divf %349, %350 : vector<4x32xf32>
    %cst_155 = arith.constant dense<0.000000e+00> : vector<4x32xf32>
    %352 = tpu.matmul %277, %5, %cst_155 {dimension_numbers = #tpu.dot_dimension_numbers<[1], [0], [0], [1], [0, 0, 1, 1], [], []>} : vector<4x32xf32>, vector<32x32xf32>, vector<4x32xf32> -> vector<4x32xf32>
    %353 = arith.addf %352, %15 : vector<4x32xf32>
    %354 = arith.mulf %344, %353 : vector<4x32xf32>
    %355 = arith.addf %337, %354 : vector<4x32xf32>
    %356 = math.tanh %355 : vector<4x32xf32>
    %cst_156 = arith.constant 1.000000e+00 : f32
    %357 = vector.broadcast %cst_156 : f32 to vector<4x32xf32>
    %358 = arith.subf %357, %351 : vector<4x32xf32>
    %359 = arith.mulf %358, %356 : vector<4x32xf32>
    %360 = arith.mulf %351, %277 : vector<4x32xf32>
    %361 = arith.addf %359, %360 : vector<4x32xf32>
    %362 = vector.broadcast %c3_i32 : i32 to vector<4x1xi32>
    %363 = arith.cmpi sgt, %20, %362 : vector<4x1xi32>
    %364 = arith.extui %363 : vector<4x1xi1> to vector<4x1xi32>
    %365 = arith.sitofp %364 : vector<4x1xi32> to vector<4x1xf32>
    %366 = vector.broadcast %365 : vector<4x1xf32> to vector<4x32xf32>
    %367 = arith.mulf %366, %361 : vector<4x32xf32>
    %368 = arith.index_cast %c3_i32 : i32 to index
    %c0_157 = arith.constant 0 : index
    %c0_158 = arith.constant 0 : index
    %c0_159 = arith.constant 0 : index
    %369 = vector.load %arg6[%368, %c0_157, %c0_158, %c0_159] : memref<8x2x4x32xf32, #tpu.memory_space<vmem>>, vector<1x1x4x32xf32>
    %370 = vector.shape_cast %369 : vector<1x1x4x32xf32> to vector<4x32xf32>
    %371 = vector.shape_cast %367 : vector<4x32xf32> to vector<1x1x4x32xf32>
    tpu.vector_store %arg6[%368, %c0_157, %c0_158, %c0_159], %371 {strides = array<i32>} : memref<8x2x4x32xf32, #tpu.memory_space<vmem>>, vector<1x1x4x32xf32>,
    %372 = vector.broadcast %365 : vector<4x1xf32> to vector<4x32xf32>
    %373 = arith.mulf %372, %361 : vector<4x32xf32>
    %cst_160 = arith.constant 1.000000e+00 : f32
    %374 = vector.broadcast %cst_160 : f32 to vector<4x1xf32>
    %375 = arith.subf %374, %365 : vector<4x1xf32>
    %376 = vector.broadcast %375 : vector<4x1xf32> to vector<4x32xf32>
    %377 = arith.mulf %376, %277 : vector<4x32xf32>
    %378 = arith.addf %373, %377 : vector<4x32xf32>
    %379 = arith.index_cast %328 : i32 to index
    %c3_161 = arith.constant 3 : index
    %c0_162 = arith.constant 0 : index
    %c0_163 = arith.constant 0 : index
    %380 = vector.load %arg2[%379, %c3_161, %c0_162, %c0_163] : memref<8x6x4x32xf32, #tpu.memory_space<vmem>>, vector<1x1x4x32xf32>
    %381 = vector.shape_cast %380 : vector<1x1x4x32xf32> to vector<4x32xf32>
    %382 = arith.index_cast %328 : i32 to index
    %c4_164 = arith.constant 4 : index
    %c0_165 = arith.constant 0 : index
    %c0_166 = arith.constant 0 : index
    %383 = vector.load %arg2[%382, %c4_164, %c0_165, %c0_166] : memref<8x6x4x32xf32, #tpu.memory_space<vmem>>, vector<1x1x4x32xf32>
    %384 = vector.shape_cast %383 : vector<1x1x4x32xf32> to vector<4x32xf32>
    %385 = arith.index_cast %328 : i32 to index
    %c5_167 = arith.constant 5 : index
    %c0_168 = arith.constant 0 : index
    %c0_169 = arith.constant 0 : index
    %386 = vector.load %arg2[%385, %c5_167, %c0_168, %c0_169] : memref<8x6x4x32xf32, #tpu.memory_space<vmem>>, vector<1x1x4x32xf32>
    %387 = vector.shape_cast %386 : vector<1x1x4x32xf32> to vector<4x32xf32>
    %cst_170 = arith.constant dense<0.000000e+00> : vector<4x32xf32>
    %388 = tpu.matmul %327, %7, %cst_170 {dimension_numbers = #tpu.dot_dimension_numbers<[1], [0], [0], [1], [0, 0, 1, 1], [], []>} : vector<4x32xf32>, vector<32x32xf32>, vector<4x32xf32> -> vector<4x32xf32>
    %389 = arith.addf %381, %388 : vector<4x32xf32>
    %390 = arith.negf %389 : vector<4x32xf32>
    %391 = math.exp %390 : vector<4x32xf32>
    %cst_171 = arith.constant 1.000000e+00 : f32
    %392 = vector.broadcast %cst_171 : f32 to vector<4x32xf32>
    %393 = arith.addf %392, %391 : vector<4x32xf32>
    %394 = arith.divf %392, %393 : vector<4x32xf32>
    %cst_172 = arith.constant dense<0.000000e+00> : vector<4x32xf32>
    %395 = tpu.matmul %327, %9, %cst_172 {dimension_numbers = #tpu.dot_dimension_numbers<[1], [0], [0], [1], [0, 0, 1, 1], [], []>} : vector<4x32xf32>, vector<32x32xf32>, vector<4x32xf32> -> vector<4x32xf32>
    %396 = arith.addf %384, %395 : vector<4x32xf32>
    %397 = arith.negf %396 : vector<4x32xf32>
    %398 = math.exp %397 : vector<4x32xf32>
    %cst_173 = arith.constant 1.000000e+00 : f32
    %399 = vector.broadcast %cst_173 : f32 to vector<4x32xf32>
    %400 = arith.addf %399, %398 : vector<4x32xf32>
    %401 = arith.divf %399, %400 : vector<4x32xf32>
    %cst_174 = arith.constant dense<0.000000e+00> : vector<4x32xf32>
    %402 = tpu.matmul %327, %11, %cst_174 {dimension_numbers = #tpu.dot_dimension_numbers<[1], [0], [0], [1], [0, 0, 1, 1], [], []>} : vector<4x32xf32>, vector<32x32xf32>, vector<4x32xf32> -> vector<4x32xf32>
    %403 = arith.addf %402, %19 : vector<4x32xf32>
    %404 = arith.mulf %394, %403 : vector<4x32xf32>
    %405 = arith.addf %387, %404 : vector<4x32xf32>
    %406 = math.tanh %405 : vector<4x32xf32>
    %cst_175 = arith.constant 1.000000e+00 : f32
    %407 = vector.broadcast %cst_175 : f32 to vector<4x32xf32>
    %408 = arith.subf %407, %401 : vector<4x32xf32>
    %409 = arith.mulf %408, %406 : vector<4x32xf32>
    %410 = arith.mulf %401, %327 : vector<4x32xf32>
    %411 = arith.addf %409, %410 : vector<4x32xf32>
    %412 = vector.broadcast %328 : i32 to vector<4x1xi32>
    %413 = arith.cmpi sgt, %20, %412 : vector<4x1xi32>
    %414 = arith.extui %413 : vector<4x1xi1> to vector<4x1xi32>
    %415 = arith.sitofp %414 : vector<4x1xi32> to vector<4x1xf32>
    %416 = vector.broadcast %415 : vector<4x1xf32> to vector<4x32xf32>
    %417 = arith.mulf %416, %411 : vector<4x32xf32>
    %418 = arith.index_cast %328 : i32 to index
    %c1_176 = arith.constant 1 : index
    %c0_177 = arith.constant 0 : index
    %c0_178 = arith.constant 0 : index
    %419 = vector.load %arg6[%418, %c1_176, %c0_177, %c0_178] : memref<8x2x4x32xf32, #tpu.memory_space<vmem>>, vector<1x1x4x32xf32>
    %420 = vector.shape_cast %419 : vector<1x1x4x32xf32> to vector<4x32xf32>
    %421 = vector.shape_cast %417 : vector<4x32xf32> to vector<1x1x4x32xf32>
    tpu.vector_store %arg6[%418, %c1_176, %c0_177, %c0_178], %421 {strides = array<i32>} : memref<8x2x4x32xf32, #tpu.memory_space<vmem>>, vector<1x1x4x32xf32>,
    %422 = vector.broadcast %415 : vector<4x1xf32> to vector<4x32xf32>
    %423 = arith.mulf %422, %411 : vector<4x32xf32>
    %cst_179 = arith.constant 1.000000e+00 : f32
    %424 = vector.broadcast %cst_179 : f32 to vector<4x1xf32>
    %425 = arith.subf %424, %415 : vector<4x1xf32>
    %426 = vector.broadcast %425 : vector<4x1xf32> to vector<4x32xf32>
    %427 = arith.mulf %426, %327 : vector<4x32xf32>
    %428 = arith.addf %423, %427 : vector<4x32xf32>
    %c4_i32 = arith.constant 4 : i32
    %c7_i32_180 = arith.constant 7 : i32
    %429 = arith.subi %c7_i32_180, %c4_i32 : i32
    %430 = arith.index_cast %c4_i32 : i32 to index
    %c0_181 = arith.constant 0 : index
    %c0_182 = arith.constant 0 : index
    %c0_183 = arith.constant 0 : index
    %431 = vector.load %arg2[%430, %c0_181, %c0_182, %c0_183] : memref<8x6x4x32xf32, #tpu.memory_space<vmem>>, vector<1x1x4x32xf32>
    %432 = vector.shape_cast %431 : vector<1x1x4x32xf32> to vector<4x32xf32>
    %433 = arith.index_cast %c4_i32 : i32 to index
    %c1_184 = arith.constant 1 : index
    %c0_185 = arith.constant 0 : index
    %c0_186 = arith.constant 0 : index
    %434 = vector.load %arg2[%433, %c1_184, %c0_185, %c0_186] : memref<8x6x4x32xf32, #tpu.memory_space<vmem>>, vector<1x1x4x32xf32>
    %435 = vector.shape_cast %434 : vector<1x1x4x32xf32> to vector<4x32xf32>
    %436 = arith.index_cast %c4_i32 : i32 to index
    %c2_187 = arith.constant 2 : index
    %c0_188 = arith.constant 0 : index
    %c0_189 = arith.constant 0 : index
    %437 = vector.load %arg2[%436, %c2_187, %c0_188, %c0_189] : memref<8x6x4x32xf32, #tpu.memory_space<vmem>>, vector<1x1x4x32xf32>
    %438 = vector.shape_cast %437 : vector<1x1x4x32xf32> to vector<4x32xf32>
    %cst_190 = arith.constant dense<0.000000e+00> : vector<4x32xf32>
    %439 = tpu.matmul %378, %1, %cst_190 {dimension_numbers = #tpu.dot_dimension_numbers<[1], [0], [0], [1], [0, 0, 1, 1], [], []>} : vector<4x32xf32>, vector<32x32xf32>, vector<4x32xf32> -> vector<4x32xf32>
    %440 = arith.addf %432, %439 : vector<4x32xf32>
    %441 = arith.negf %440 : vector<4x32xf32>
    %442 = math.exp %441 : vector<4x32xf32>
    %cst_191 = arith.constant 1.000000e+00 : f32
    %443 = vector.broadcast %cst_191 : f32 to vector<4x32xf32>
    %444 = arith.addf %443, %442 : vector<4x32xf32>
    %445 = arith.divf %443, %444 : vector<4x32xf32>
    %cst_192 = arith.constant dense<0.000000e+00> : vector<4x32xf32>
    %446 = tpu.matmul %378, %3, %cst_192 {dimension_numbers = #tpu.dot_dimension_numbers<[1], [0], [0], [1], [0, 0, 1, 1], [], []>} : vector<4x32xf32>, vector<32x32xf32>, vector<4x32xf32> -> vector<4x32xf32>
    %447 = arith.addf %435, %446 : vector<4x32xf32>
    %448 = arith.negf %447 : vector<4x32xf32>
    %449 = math.exp %448 : vector<4x32xf32>
    %cst_193 = arith.constant 1.000000e+00 : f32
    %450 = vector.broadcast %cst_193 : f32 to vector<4x32xf32>
    %451 = arith.addf %450, %449 : vector<4x32xf32>
    %452 = arith.divf %450, %451 : vector<4x32xf32>
    %cst_194 = arith.constant dense<0.000000e+00> : vector<4x32xf32>
    %453 = tpu.matmul %378, %5, %cst_194 {dimension_numbers = #tpu.dot_dimension_numbers<[1], [0], [0], [1], [0, 0, 1, 1], [], []>} : vector<4x32xf32>, vector<32x32xf32>, vector<4x32xf32> -> vector<4x32xf32>
    %454 = arith.addf %453, %15 : vector<4x32xf32>
    %455 = arith.mulf %445, %454 : vector<4x32xf32>
    %456 = arith.addf %438, %455 : vector<4x32xf32>
    %457 = math.tanh %456 : vector<4x32xf32>
    %cst_195 = arith.constant 1.000000e+00 : f32
    %458 = vector.broadcast %cst_195 : f32 to vector<4x32xf32>
    %459 = arith.subf %458, %452 : vector<4x32xf32>
    %460 = arith.mulf %459, %457 : vector<4x32xf32>
    %461 = arith.mulf %452, %378 : vector<4x32xf32>
    %462 = arith.addf %460, %461 : vector<4x32xf32>
    %463 = vector.broadcast %c4_i32 : i32 to vector<4x1xi32>
    %464 = arith.cmpi sgt, %20, %463 : vector<4x1xi32>
    %465 = arith.extui %464 : vector<4x1xi1> to vector<4x1xi32>
    %466 = arith.sitofp %465 : vector<4x1xi32> to vector<4x1xf32>
    %467 = vector.broadcast %466 : vector<4x1xf32> to vector<4x32xf32>
    %468 = arith.mulf %467, %462 : vector<4x32xf32>
    %469 = arith.index_cast %c4_i32 : i32 to index
    %c0_196 = arith.constant 0 : index
    %c0_197 = arith.constant 0 : index
    %c0_198 = arith.constant 0 : index
    %470 = vector.load %arg6[%469, %c0_196, %c0_197, %c0_198] : memref<8x2x4x32xf32, #tpu.memory_space<vmem>>, vector<1x1x4x32xf32>
    %471 = vector.shape_cast %470 : vector<1x1x4x32xf32> to vector<4x32xf32>
    %472 = vector.shape_cast %468 : vector<4x32xf32> to vector<1x1x4x32xf32>
    tpu.vector_store %arg6[%469, %c0_196, %c0_197, %c0_198], %472 {strides = array<i32>} : memref<8x2x4x32xf32, #tpu.memory_space<vmem>>, vector<1x1x4x32xf32>,
    %473 = vector.broadcast %466 : vector<4x1xf32> to vector<4x32xf32>
    %474 = arith.mulf %473, %462 : vector<4x32xf32>
    %cst_199 = arith.constant 1.000000e+00 : f32
    %475 = vector.broadcast %cst_199 : f32 to vector<4x1xf32>
    %476 = arith.subf %475, %466 : vector<4x1xf32>
    %477 = vector.broadcast %476 : vector<4x1xf32> to vector<4x32xf32>
    %478 = arith.mulf %477, %378 : vector<4x32xf32>
    %479 = arith.addf %474, %478 : vector<4x32xf32>
    %480 = arith.index_cast %429 : i32 to index
    %c3_200 = arith.constant 3 : index
    %c0_201 = arith.constant 0 : index
    %c0_202 = arith.constant 0 : index
    %481 = vector.load %arg2[%480, %c3_200, %c0_201, %c0_202] : memref<8x6x4x32xf32, #tpu.memory_space<vmem>>, vector<1x1x4x32xf32>
    %482 = vector.shape_cast %481 : vector<1x1x4x32xf32> to vector<4x32xf32>
    %483 = arith.index_cast %429 : i32 to index
    %c4_203 = arith.constant 4 : index
    %c0_204 = arith.constant 0 : index
    %c0_205 = arith.constant 0 : index
    %484 = vector.load %arg2[%483, %c4_203, %c0_204, %c0_205] : memref<8x6x4x32xf32, #tpu.memory_space<vmem>>, vector<1x1x4x32xf32>
    %485 = vector.shape_cast %484 : vector<1x1x4x32xf32> to vector<4x32xf32>
    %486 = arith.index_cast %429 : i32 to index
    %c5_206 = arith.constant 5 : index
    %c0_207 = arith.constant 0 : index
    %c0_208 = arith.constant 0 : index
    %487 = vector.load %arg2[%486, %c5_206, %c0_207, %c0_208] : memref<8x6x4x32xf32, #tpu.memory_space<vmem>>, vector<1x1x4x32xf32>
    %488 = vector.shape_cast %487 : vector<1x1x4x32xf32> to vector<4x32xf32>
    %cst_209 = arith.constant dense<0.000000e+00> : vector<4x32xf32>
    %489 = tpu.matmul %428, %7, %cst_209 {dimension_numbers = #tpu.dot_dimension_numbers<[1], [0], [0], [1], [0, 0, 1, 1], [], []>} : vector<4x32xf32>, vector<32x32xf32>, vector<4x32xf32> -> vector<4x32xf32>
    %490 = arith.addf %482, %489 : vector<4x32xf32>
    %491 = arith.negf %490 : vector<4x32xf32>
    %492 = math.exp %491 : vector<4x32xf32>
    %cst_210 = arith.constant 1.000000e+00 : f32
    %493 = vector.broadcast %cst_210 : f32 to vector<4x32xf32>
    %494 = arith.addf %493, %492 : vector<4x32xf32>
    %495 = arith.divf %493, %494 : vector<4x32xf32>
    %cst_211 = arith.constant dense<0.000000e+00> : vector<4x32xf32>
    %496 = tpu.matmul %428, %9, %cst_211 {dimension_numbers = #tpu.dot_dimension_numbers<[1], [0], [0], [1], [0, 0, 1, 1], [], []>} : vector<4x32xf32>, vector<32x32xf32>, vector<4x32xf32> -> vector<4x32xf32>
    %497 = arith.addf %485, %496 : vector<4x32xf32>
    %498 = arith.negf %497 : vector<4x32xf32>
    %499 = math.exp %498 : vector<4x32xf32>
    %cst_212 = arith.constant 1.000000e+00 : f32
    %500 = vector.broadcast %cst_212 : f32 to vector<4x32xf32>
    %501 = arith.addf %500, %499 : vector<4x32xf32>
    %502 = arith.divf %500, %501 : vector<4x32xf32>
    %cst_213 = arith.constant dense<0.000000e+00> : vector<4x32xf32>
    %503 = tpu.matmul %428, %11, %cst_213 {dimension_numbers = #tpu.dot_dimension_numbers<[1], [0], [0], [1], [0, 0, 1, 1], [], []>} : vector<4x32xf32>, vector<32x32xf32>, vector<4x32xf32> -> vector<4x32xf32>
    %504 = arith.addf %503, %19 : vector<4x32xf32>
    %505 = arith.mulf %495, %504 : vector<4x32xf32>
    %506 = arith.addf %488, %505 : vector<4x32xf32>
    %507 = math.tanh %506 : vector<4x32xf32>
    %cst_214 = arith.constant 1.000000e+00 : f32
    %508 = vector.broadcast %cst_214 : f32 to vector<4x32xf32>
    %509 = arith.subf %508, %502 : vector<4x32xf32>
    %510 = arith.mulf %509, %507 : vector<4x32xf32>
    %511 = arith.mulf %502, %428 : vector<4x32xf32>
    %512 = arith.addf %510, %511 : vector<4x32xf32>
    %513 = vector.broadcast %429 : i32 to vector<4x1xi32>
    %514 = arith.cmpi sgt, %20, %513 : vector<4x1xi32>
    %515 = arith.extui %514 : vector<4x1xi1> to vector<4x1xi32>
    %516 = arith.sitofp %515 : vector<4x1xi32> to vector<4x1xf32>
    %517 = vector.broadcast %516 : vector<4x1xf32> to vector<4x32xf32>
    %518 = arith.mulf %517, %512 : vector<4x32xf32>
    %519 = arith.index_cast %429 : i32 to index
    %c1_215 = arith.constant 1 : index
    %c0_216 = arith.constant 0 : index
    %c0_217 = arith.constant 0 : index
    %520 = vector.load %arg6[%519, %c1_215, %c0_216, %c0_217] : memref<8x2x4x32xf32, #tpu.memory_space<vmem>>, vector<1x1x4x32xf32>
    %521 = vector.shape_cast %520 : vector<1x1x4x32xf32> to vector<4x32xf32>
    %522 = vector.shape_cast %518 : vector<4x32xf32> to vector<1x1x4x32xf32>
    tpu.vector_store %arg6[%519, %c1_215, %c0_216, %c0_217], %522 {strides = array<i32>} : memref<8x2x4x32xf32, #tpu.memory_space<vmem>>, vector<1x1x4x32xf32>,
    %523 = vector.broadcast %516 : vector<4x1xf32> to vector<4x32xf32>
    %524 = arith.mulf %523, %512 : vector<4x32xf32>
    %cst_218 = arith.constant 1.000000e+00 : f32
    %525 = vector.broadcast %cst_218 : f32 to vector<4x1xf32>
    %526 = arith.subf %525, %516 : vector<4x1xf32>
    %527 = vector.broadcast %526 : vector<4x1xf32> to vector<4x32xf32>
    %528 = arith.mulf %527, %428 : vector<4x32xf32>
    %529 = arith.addf %524, %528 : vector<4x32xf32>
    %c5_i32 = arith.constant 5 : i32
    %c7_i32_219 = arith.constant 7 : i32
    %530 = arith.subi %c7_i32_219, %c5_i32 : i32
    %531 = arith.index_cast %c5_i32 : i32 to index
    %c0_220 = arith.constant 0 : index
    %c0_221 = arith.constant 0 : index
    %c0_222 = arith.constant 0 : index
    %532 = vector.load %arg2[%531, %c0_220, %c0_221, %c0_222] : memref<8x6x4x32xf32, #tpu.memory_space<vmem>>, vector<1x1x4x32xf32>
    %533 = vector.shape_cast %532 : vector<1x1x4x32xf32> to vector<4x32xf32>
    %534 = arith.index_cast %c5_i32 : i32 to index
    %c1_223 = arith.constant 1 : index
    %c0_224 = arith.constant 0 : index
    %c0_225 = arith.constant 0 : index
    %535 = vector.load %arg2[%534, %c1_223, %c0_224, %c0_225] : memref<8x6x4x32xf32, #tpu.memory_space<vmem>>, vector<1x1x4x32xf32>
    %536 = vector.shape_cast %535 : vector<1x1x4x32xf32> to vector<4x32xf32>
    %537 = arith.index_cast %c5_i32 : i32 to index
    %c2_226 = arith.constant 2 : index
    %c0_227 = arith.constant 0 : index
    %c0_228 = arith.constant 0 : index
    %538 = vector.load %arg2[%537, %c2_226, %c0_227, %c0_228] : memref<8x6x4x32xf32, #tpu.memory_space<vmem>>, vector<1x1x4x32xf32>
    %539 = vector.shape_cast %538 : vector<1x1x4x32xf32> to vector<4x32xf32>
    %cst_229 = arith.constant dense<0.000000e+00> : vector<4x32xf32>
    %540 = tpu.matmul %479, %1, %cst_229 {dimension_numbers = #tpu.dot_dimension_numbers<[1], [0], [0], [1], [0, 0, 1, 1], [], []>} : vector<4x32xf32>, vector<32x32xf32>, vector<4x32xf32> -> vector<4x32xf32>
    %541 = arith.addf %533, %540 : vector<4x32xf32>
    %542 = arith.negf %541 : vector<4x32xf32>
    %543 = math.exp %542 : vector<4x32xf32>
    %cst_230 = arith.constant 1.000000e+00 : f32
    %544 = vector.broadcast %cst_230 : f32 to vector<4x32xf32>
    %545 = arith.addf %544, %543 : vector<4x32xf32>
    %546 = arith.divf %544, %545 : vector<4x32xf32>
    %cst_231 = arith.constant dense<0.000000e+00> : vector<4x32xf32>
    %547 = tpu.matmul %479, %3, %cst_231 {dimension_numbers = #tpu.dot_dimension_numbers<[1], [0], [0], [1], [0, 0, 1, 1], [], []>} : vector<4x32xf32>, vector<32x32xf32>, vector<4x32xf32> -> vector<4x32xf32>
    %548 = arith.addf %536, %547 : vector<4x32xf32>
    %549 = arith.negf %548 : vector<4x32xf32>
    %550 = math.exp %549 : vector<4x32xf32>
    %cst_232 = arith.constant 1.000000e+00 : f32
    %551 = vector.broadcast %cst_232 : f32 to vector<4x32xf32>
    %552 = arith.addf %551, %550 : vector<4x32xf32>
    %553 = arith.divf %551, %552 : vector<4x32xf32>
    %cst_233 = arith.constant dense<0.000000e+00> : vector<4x32xf32>
    %554 = tpu.matmul %479, %5, %cst_233 {dimension_numbers = #tpu.dot_dimension_numbers<[1], [0], [0], [1], [0, 0, 1, 1], [], []>} : vector<4x32xf32>, vector<32x32xf32>, vector<4x32xf32> -> vector<4x32xf32>
    %555 = arith.addf %554, %15 : vector<4x32xf32>
    %556 = arith.mulf %546, %555 : vector<4x32xf32>
    %557 = arith.addf %539, %556 : vector<4x32xf32>
    %558 = math.tanh %557 : vector<4x32xf32>
    %cst_234 = arith.constant 1.000000e+00 : f32
    %559 = vector.broadcast %cst_234 : f32 to vector<4x32xf32>
    %560 = arith.subf %559, %553 : vector<4x32xf32>
    %561 = arith.mulf %560, %558 : vector<4x32xf32>
    %562 = arith.mulf %553, %479 : vector<4x32xf32>
    %563 = arith.addf %561, %562 : vector<4x32xf32>
    %564 = vector.broadcast %c5_i32 : i32 to vector<4x1xi32>
    %565 = arith.cmpi sgt, %20, %564 : vector<4x1xi32>
    %566 = arith.extui %565 : vector<4x1xi1> to vector<4x1xi32>
    %567 = arith.sitofp %566 : vector<4x1xi32> to vector<4x1xf32>
    %568 = vector.broadcast %567 : vector<4x1xf32> to vector<4x32xf32>
    %569 = arith.mulf %568, %563 : vector<4x32xf32>
    %570 = arith.index_cast %c5_i32 : i32 to index
    %c0_235 = arith.constant 0 : index
    %c0_236 = arith.constant 0 : index
    %c0_237 = arith.constant 0 : index
    %571 = vector.load %arg6[%570, %c0_235, %c0_236, %c0_237] : memref<8x2x4x32xf32, #tpu.memory_space<vmem>>, vector<1x1x4x32xf32>
    %572 = vector.shape_cast %571 : vector<1x1x4x32xf32> to vector<4x32xf32>
    %573 = vector.shape_cast %569 : vector<4x32xf32> to vector<1x1x4x32xf32>
    tpu.vector_store %arg6[%570, %c0_235, %c0_236, %c0_237], %573 {strides = array<i32>} : memref<8x2x4x32xf32, #tpu.memory_space<vmem>>, vector<1x1x4x32xf32>,
    %574 = vector.broadcast %567 : vector<4x1xf32> to vector<4x32xf32>
    %575 = arith.mulf %574, %563 : vector<4x32xf32>
    %cst_238 = arith.constant 1.000000e+00 : f32
    %576 = vector.broadcast %cst_238 : f32 to vector<4x1xf32>
    %577 = arith.subf %576, %567 : vector<4x1xf32>
    %578 = vector.broadcast %577 : vector<4x1xf32> to vector<4x32xf32>
    %579 = arith.mulf %578, %479 : vector<4x32xf32>
    %580 = arith.addf %575, %579 : vector<4x32xf32>
    %581 = arith.index_cast %530 : i32 to index
    %c3_239 = arith.constant 3 : index
    %c0_240 = arith.constant 0 : index
    %c0_241 = arith.constant 0 : index
    %582 = vector.load %arg2[%581, %c3_239, %c0_240, %c0_241] : memref<8x6x4x32xf32, #tpu.memory_space<vmem>>, vector<1x1x4x32xf32>
    %583 = vector.shape_cast %582 : vector<1x1x4x32xf32> to vector<4x32xf32>
    %584 = arith.index_cast %530 : i32 to index
    %c4_242 = arith.constant 4 : index
    %c0_243 = arith.constant 0 : index
    %c0_244 = arith.constant 0 : index
    %585 = vector.load %arg2[%584, %c4_242, %c0_243, %c0_244] : memref<8x6x4x32xf32, #tpu.memory_space<vmem>>, vector<1x1x4x32xf32>
    %586 = vector.shape_cast %585 : vector<1x1x4x32xf32> to vector<4x32xf32>
    %587 = arith.index_cast %530 : i32 to index
    %c5_245 = arith.constant 5 : index
    %c0_246 = arith.constant 0 : index
    %c0_247 = arith.constant 0 : index
    %588 = vector.load %arg2[%587, %c5_245, %c0_246, %c0_247] : memref<8x6x4x32xf32, #tpu.memory_space<vmem>>, vector<1x1x4x32xf32>
    %589 = vector.shape_cast %588 : vector<1x1x4x32xf32> to vector<4x32xf32>
    %cst_248 = arith.constant dense<0.000000e+00> : vector<4x32xf32>
    %590 = tpu.matmul %529, %7, %cst_248 {dimension_numbers = #tpu.dot_dimension_numbers<[1], [0], [0], [1], [0, 0, 1, 1], [], []>} : vector<4x32xf32>, vector<32x32xf32>, vector<4x32xf32> -> vector<4x32xf32>
    %591 = arith.addf %583, %590 : vector<4x32xf32>
    %592 = arith.negf %591 : vector<4x32xf32>
    %593 = math.exp %592 : vector<4x32xf32>
    %cst_249 = arith.constant 1.000000e+00 : f32
    %594 = vector.broadcast %cst_249 : f32 to vector<4x32xf32>
    %595 = arith.addf %594, %593 : vector<4x32xf32>
    %596 = arith.divf %594, %595 : vector<4x32xf32>
    %cst_250 = arith.constant dense<0.000000e+00> : vector<4x32xf32>
    %597 = tpu.matmul %529, %9, %cst_250 {dimension_numbers = #tpu.dot_dimension_numbers<[1], [0], [0], [1], [0, 0, 1, 1], [], []>} : vector<4x32xf32>, vector<32x32xf32>, vector<4x32xf32> -> vector<4x32xf32>
    %598 = arith.addf %586, %597 : vector<4x32xf32>
    %599 = arith.negf %598 : vector<4x32xf32>
    %600 = math.exp %599 : vector<4x32xf32>
    %cst_251 = arith.constant 1.000000e+00 : f32
    %601 = vector.broadcast %cst_251 : f32 to vector<4x32xf32>
    %602 = arith.addf %601, %600 : vector<4x32xf32>
    %603 = arith.divf %601, %602 : vector<4x32xf32>
    %cst_252 = arith.constant dense<0.000000e+00> : vector<4x32xf32>
    %604 = tpu.matmul %529, %11, %cst_252 {dimension_numbers = #tpu.dot_dimension_numbers<[1], [0], [0], [1], [0, 0, 1, 1], [], []>} : vector<4x32xf32>, vector<32x32xf32>, vector<4x32xf32> -> vector<4x32xf32>
    %605 = arith.addf %604, %19 : vector<4x32xf32>
    %606 = arith.mulf %596, %605 : vector<4x32xf32>
    %607 = arith.addf %589, %606 : vector<4x32xf32>
    %608 = math.tanh %607 : vector<4x32xf32>
    %cst_253 = arith.constant 1.000000e+00 : f32
    %609 = vector.broadcast %cst_253 : f32 to vector<4x32xf32>
    %610 = arith.subf %609, %603 : vector<4x32xf32>
    %611 = arith.mulf %610, %608 : vector<4x32xf32>
    %612 = arith.mulf %603, %529 : vector<4x32xf32>
    %613 = arith.addf %611, %612 : vector<4x32xf32>
    %614 = vector.broadcast %530 : i32 to vector<4x1xi32>
    %615 = arith.cmpi sgt, %20, %614 : vector<4x1xi32>
    %616 = arith.extui %615 : vector<4x1xi1> to vector<4x1xi32>
    %617 = arith.sitofp %616 : vector<4x1xi32> to vector<4x1xf32>
    %618 = vector.broadcast %617 : vector<4x1xf32> to vector<4x32xf32>
    %619 = arith.mulf %618, %613 : vector<4x32xf32>
    %620 = arith.index_cast %530 : i32 to index
    %c1_254 = arith.constant 1 : index
    %c0_255 = arith.constant 0 : index
    %c0_256 = arith.constant 0 : index
    %621 = vector.load %arg6[%620, %c1_254, %c0_255, %c0_256] : memref<8x2x4x32xf32, #tpu.memory_space<vmem>>, vector<1x1x4x32xf32>
    %622 = vector.shape_cast %621 : vector<1x1x4x32xf32> to vector<4x32xf32>
    %623 = vector.shape_cast %619 : vector<4x32xf32> to vector<1x1x4x32xf32>
    tpu.vector_store %arg6[%620, %c1_254, %c0_255, %c0_256], %623 {strides = array<i32>} : memref<8x2x4x32xf32, #tpu.memory_space<vmem>>, vector<1x1x4x32xf32>,
    %624 = vector.broadcast %617 : vector<4x1xf32> to vector<4x32xf32>
    %625 = arith.mulf %624, %613 : vector<4x32xf32>
    %cst_257 = arith.constant 1.000000e+00 : f32
    %626 = vector.broadcast %cst_257 : f32 to vector<4x1xf32>
    %627 = arith.subf %626, %617 : vector<4x1xf32>
    %628 = vector.broadcast %627 : vector<4x1xf32> to vector<4x32xf32>
    %629 = arith.mulf %628, %529 : vector<4x32xf32>
    %630 = arith.addf %625, %629 : vector<4x32xf32>
    %c6_i32 = arith.constant 6 : i32
    %c7_i32_258 = arith.constant 7 : i32
    %631 = arith.subi %c7_i32_258, %c6_i32 : i32
    %632 = arith.index_cast %c6_i32 : i32 to index
    %c0_259 = arith.constant 0 : index
    %c0_260 = arith.constant 0 : index
    %c0_261 = arith.constant 0 : index
    %633 = vector.load %arg2[%632, %c0_259, %c0_260, %c0_261] : memref<8x6x4x32xf32, #tpu.memory_space<vmem>>, vector<1x1x4x32xf32>
    %634 = vector.shape_cast %633 : vector<1x1x4x32xf32> to vector<4x32xf32>
    %635 = arith.index_cast %c6_i32 : i32 to index
    %c1_262 = arith.constant 1 : index
    %c0_263 = arith.constant 0 : index
    %c0_264 = arith.constant 0 : index
    %636 = vector.load %arg2[%635, %c1_262, %c0_263, %c0_264] : memref<8x6x4x32xf32, #tpu.memory_space<vmem>>, vector<1x1x4x32xf32>
    %637 = vector.shape_cast %636 : vector<1x1x4x32xf32> to vector<4x32xf32>
    %638 = arith.index_cast %c6_i32 : i32 to index
    %c2_265 = arith.constant 2 : index
    %c0_266 = arith.constant 0 : index
    %c0_267 = arith.constant 0 : index
    %639 = vector.load %arg2[%638, %c2_265, %c0_266, %c0_267] : memref<8x6x4x32xf32, #tpu.memory_space<vmem>>, vector<1x1x4x32xf32>
    %640 = vector.shape_cast %639 : vector<1x1x4x32xf32> to vector<4x32xf32>
    %cst_268 = arith.constant dense<0.000000e+00> : vector<4x32xf32>
    %641 = tpu.matmul %580, %1, %cst_268 {dimension_numbers = #tpu.dot_dimension_numbers<[1], [0], [0], [1], [0, 0, 1, 1], [], []>} : vector<4x32xf32>, vector<32x32xf32>, vector<4x32xf32> -> vector<4x32xf32>
    %642 = arith.addf %634, %641 : vector<4x32xf32>
    %643 = arith.negf %642 : vector<4x32xf32>
    %644 = math.exp %643 : vector<4x32xf32>
    %cst_269 = arith.constant 1.000000e+00 : f32
    %645 = vector.broadcast %cst_269 : f32 to vector<4x32xf32>
    %646 = arith.addf %645, %644 : vector<4x32xf32>
    %647 = arith.divf %645, %646 : vector<4x32xf32>
    %cst_270 = arith.constant dense<0.000000e+00> : vector<4x32xf32>
    %648 = tpu.matmul %580, %3, %cst_270 {dimension_numbers = #tpu.dot_dimension_numbers<[1], [0], [0], [1], [0, 0, 1, 1], [], []>} : vector<4x32xf32>, vector<32x32xf32>, vector<4x32xf32> -> vector<4x32xf32>
    %649 = arith.addf %637, %648 : vector<4x32xf32>
    %650 = arith.negf %649 : vector<4x32xf32>
    %651 = math.exp %650 : vector<4x32xf32>
    %cst_271 = arith.constant 1.000000e+00 : f32
    %652 = vector.broadcast %cst_271 : f32 to vector<4x32xf32>
    %653 = arith.addf %652, %651 : vector<4x32xf32>
    %654 = arith.divf %652, %653 : vector<4x32xf32>
    %cst_272 = arith.constant dense<0.000000e+00> : vector<4x32xf32>
    %655 = tpu.matmul %580, %5, %cst_272 {dimension_numbers = #tpu.dot_dimension_numbers<[1], [0], [0], [1], [0, 0, 1, 1], [], []>} : vector<4x32xf32>, vector<32x32xf32>, vector<4x32xf32> -> vector<4x32xf32>
    %656 = arith.addf %655, %15 : vector<4x32xf32>
    %657 = arith.mulf %647, %656 : vector<4x32xf32>
    %658 = arith.addf %640, %657 : vector<4x32xf32>
    %659 = math.tanh %658 : vector<4x32xf32>
    %cst_273 = arith.constant 1.000000e+00 : f32
    %660 = vector.broadcast %cst_273 : f32 to vector<4x32xf32>
    %661 = arith.subf %660, %654 : vector<4x32xf32>
    %662 = arith.mulf %661, %659 : vector<4x32xf32>
    %663 = arith.mulf %654, %580 : vector<4x32xf32>
    %664 = arith.addf %662, %663 : vector<4x32xf32>
    %665 = vector.broadcast %c6_i32 : i32 to vector<4x1xi32>
    %666 = arith.cmpi sgt, %20, %665 : vector<4x1xi32>
    %667 = arith.extui %666 : vector<4x1xi1> to vector<4x1xi32>
    %668 = arith.sitofp %667 : vector<4x1xi32> to vector<4x1xf32>
    %669 = vector.broadcast %668 : vector<4x1xf32> to vector<4x32xf32>
    %670 = arith.mulf %669, %664 : vector<4x32xf32>
    %671 = arith.index_cast %c6_i32 : i32 to index
    %c0_274 = arith.constant 0 : index
    %c0_275 = arith.constant 0 : index
    %c0_276 = arith.constant 0 : index
    %672 = vector.load %arg6[%671, %c0_274, %c0_275, %c0_276] : memref<8x2x4x32xf32, #tpu.memory_space<vmem>>, vector<1x1x4x32xf32>
    %673 = vector.shape_cast %672 : vector<1x1x4x32xf32> to vector<4x32xf32>
    %674 = vector.shape_cast %670 : vector<4x32xf32> to vector<1x1x4x32xf32>
    tpu.vector_store %arg6[%671, %c0_274, %c0_275, %c0_276], %674 {strides = array<i32>} : memref<8x2x4x32xf32, #tpu.memory_space<vmem>>, vector<1x1x4x32xf32>,
    %675 = vector.broadcast %668 : vector<4x1xf32> to vector<4x32xf32>
    %676 = arith.mulf %675, %664 : vector<4x32xf32>
    %cst_277 = arith.constant 1.000000e+00 : f32
    %677 = vector.broadcast %cst_277 : f32 to vector<4x1xf32>
    %678 = arith.subf %677, %668 : vector<4x1xf32>
    %679 = vector.broadcast %678 : vector<4x1xf32> to vector<4x32xf32>
    %680 = arith.mulf %679, %580 : vector<4x32xf32>
    %681 = arith.addf %676, %680 : vector<4x32xf32>
    %682 = arith.index_cast %631 : i32 to index
    %c3_278 = arith.constant 3 : index
    %c0_279 = arith.constant 0 : index
    %c0_280 = arith.constant 0 : index
    %683 = vector.load %arg2[%682, %c3_278, %c0_279, %c0_280] : memref<8x6x4x32xf32, #tpu.memory_space<vmem>>, vector<1x1x4x32xf32>
    %684 = vector.shape_cast %683 : vector<1x1x4x32xf32> to vector<4x32xf32>
    %685 = arith.index_cast %631 : i32 to index
    %c4_281 = arith.constant 4 : index
    %c0_282 = arith.constant 0 : index
    %c0_283 = arith.constant 0 : index
    %686 = vector.load %arg2[%685, %c4_281, %c0_282, %c0_283] : memref<8x6x4x32xf32, #tpu.memory_space<vmem>>, vector<1x1x4x32xf32>
    %687 = vector.shape_cast %686 : vector<1x1x4x32xf32> to vector<4x32xf32>
    %688 = arith.index_cast %631 : i32 to index
    %c5_284 = arith.constant 5 : index
    %c0_285 = arith.constant 0 : index
    %c0_286 = arith.constant 0 : index
    %689 = vector.load %arg2[%688, %c5_284, %c0_285, %c0_286] : memref<8x6x4x32xf32, #tpu.memory_space<vmem>>, vector<1x1x4x32xf32>
    %690 = vector.shape_cast %689 : vector<1x1x4x32xf32> to vector<4x32xf32>
    %cst_287 = arith.constant dense<0.000000e+00> : vector<4x32xf32>
    %691 = tpu.matmul %630, %7, %cst_287 {dimension_numbers = #tpu.dot_dimension_numbers<[1], [0], [0], [1], [0, 0, 1, 1], [], []>} : vector<4x32xf32>, vector<32x32xf32>, vector<4x32xf32> -> vector<4x32xf32>
    %692 = arith.addf %684, %691 : vector<4x32xf32>
    %693 = arith.negf %692 : vector<4x32xf32>
    %694 = math.exp %693 : vector<4x32xf32>
    %cst_288 = arith.constant 1.000000e+00 : f32
    %695 = vector.broadcast %cst_288 : f32 to vector<4x32xf32>
    %696 = arith.addf %695, %694 : vector<4x32xf32>
    %697 = arith.divf %695, %696 : vector<4x32xf32>
    %cst_289 = arith.constant dense<0.000000e+00> : vector<4x32xf32>
    %698 = tpu.matmul %630, %9, %cst_289 {dimension_numbers = #tpu.dot_dimension_numbers<[1], [0], [0], [1], [0, 0, 1, 1], [], []>} : vector<4x32xf32>, vector<32x32xf32>, vector<4x32xf32> -> vector<4x32xf32>
    %699 = arith.addf %687, %698 : vector<4x32xf32>
    %700 = arith.negf %699 : vector<4x32xf32>
    %701 = math.exp %700 : vector<4x32xf32>
    %cst_290 = arith.constant 1.000000e+00 : f32
    %702 = vector.broadcast %cst_290 : f32 to vector<4x32xf32>
    %703 = arith.addf %702, %701 : vector<4x32xf32>
    %704 = arith.divf %702, %703 : vector<4x32xf32>
    %cst_291 = arith.constant dense<0.000000e+00> : vector<4x32xf32>
    %705 = tpu.matmul %630, %11, %cst_291 {dimension_numbers = #tpu.dot_dimension_numbers<[1], [0], [0], [1], [0, 0, 1, 1], [], []>} : vector<4x32xf32>, vector<32x32xf32>, vector<4x32xf32> -> vector<4x32xf32>
    %706 = arith.addf %705, %19 : vector<4x32xf32>
    %707 = arith.mulf %697, %706 : vector<4x32xf32>
    %708 = arith.addf %690, %707 : vector<4x32xf32>
    %709 = math.tanh %708 : vector<4x32xf32>
    %cst_292 = arith.constant 1.000000e+00 : f32
    %710 = vector.broadcast %cst_292 : f32 to vector<4x32xf32>
    %711 = arith.subf %710, %704 : vector<4x32xf32>
    %712 = arith.mulf %711, %709 : vector<4x32xf32>
    %713 = arith.mulf %704, %630 : vector<4x32xf32>
    %714 = arith.addf %712, %713 : vector<4x32xf32>
    %715 = vector.broadcast %631 : i32 to vector<4x1xi32>
    %716 = arith.cmpi sgt, %20, %715 : vector<4x1xi32>
    %717 = arith.extui %716 : vector<4x1xi1> to vector<4x1xi32>
    %718 = arith.sitofp %717 : vector<4x1xi32> to vector<4x1xf32>
    %719 = vector.broadcast %718 : vector<4x1xf32> to vector<4x32xf32>
    %720 = arith.mulf %719, %714 : vector<4x32xf32>
    %721 = arith.index_cast %631 : i32 to index
    %c1_293 = arith.constant 1 : index
    %c0_294 = arith.constant 0 : index
    %c0_295 = arith.constant 0 : index
    %722 = vector.load %arg6[%721, %c1_293, %c0_294, %c0_295] : memref<8x2x4x32xf32, #tpu.memory_space<vmem>>, vector<1x1x4x32xf32>
    %723 = vector.shape_cast %722 : vector<1x1x4x32xf32> to vector<4x32xf32>
    %724 = vector.shape_cast %720 : vector<4x32xf32> to vector<1x1x4x32xf32>
    tpu.vector_store %arg6[%721, %c1_293, %c0_294, %c0_295], %724 {strides = array<i32>} : memref<8x2x4x32xf32, #tpu.memory_space<vmem>>, vector<1x1x4x32xf32>,
    %725 = vector.broadcast %718 : vector<4x1xf32> to vector<4x32xf32>
    %726 = arith.mulf %725, %714 : vector<4x32xf32>
    %cst_296 = arith.constant 1.000000e+00 : f32
    %727 = vector.broadcast %cst_296 : f32 to vector<4x1xf32>
    %728 = arith.subf %727, %718 : vector<4x1xf32>
    %729 = vector.broadcast %728 : vector<4x1xf32> to vector<4x32xf32>
    %730 = arith.mulf %729, %630 : vector<4x32xf32>
    %731 = arith.addf %726, %730 : vector<4x32xf32>
    %c7_i32_297 = arith.constant 7 : i32
    %c7_i32_298 = arith.constant 7 : i32
    %732 = arith.subi %c7_i32_298, %c7_i32_297 : i32
    %733 = arith.index_cast %c7_i32_297 : i32 to index
    %c0_299 = arith.constant 0 : index
    %c0_300 = arith.constant 0 : index
    %c0_301 = arith.constant 0 : index
    %734 = vector.load %arg2[%733, %c0_299, %c0_300, %c0_301] : memref<8x6x4x32xf32, #tpu.memory_space<vmem>>, vector<1x1x4x32xf32>
    %735 = vector.shape_cast %734 : vector<1x1x4x32xf32> to vector<4x32xf32>
    %736 = arith.index_cast %c7_i32_297 : i32 to index
    %c1_302 = arith.constant 1 : index
    %c0_303 = arith.constant 0 : index
    %c0_304 = arith.constant 0 : index
    %737 = vector.load %arg2[%736, %c1_302, %c0_303, %c0_304] : memref<8x6x4x32xf32, #tpu.memory_space<vmem>>, vector<1x1x4x32xf32>
    %738 = vector.shape_cast %737 : vector<1x1x4x32xf32> to vector<4x32xf32>
    %739 = arith.index_cast %c7_i32_297 : i32 to index
    %c2_305 = arith.constant 2 : index
    %c0_306 = arith.constant 0 : index
    %c0_307 = arith.constant 0 : index
    %740 = vector.load %arg2[%739, %c2_305, %c0_306, %c0_307] : memref<8x6x4x32xf32, #tpu.memory_space<vmem>>, vector<1x1x4x32xf32>
    %741 = vector.shape_cast %740 : vector<1x1x4x32xf32> to vector<4x32xf32>
    %cst_308 = arith.constant dense<0.000000e+00> : vector<4x32xf32>
    %742 = tpu.matmul %681, %1, %cst_308 {dimension_numbers = #tpu.dot_dimension_numbers<[1], [0], [0], [1], [0, 0, 1, 1], [], []>} : vector<4x32xf32>, vector<32x32xf32>, vector<4x32xf32> -> vector<4x32xf32>
    %743 = arith.addf %735, %742 : vector<4x32xf32>
    %744 = arith.negf %743 : vector<4x32xf32>
    %745 = math.exp %744 : vector<4x32xf32>
    %cst_309 = arith.constant 1.000000e+00 : f32
    %746 = vector.broadcast %cst_309 : f32 to vector<4x32xf32>
    %747 = arith.addf %746, %745 : vector<4x32xf32>
    %748 = arith.divf %746, %747 : vector<4x32xf32>
    %cst_310 = arith.constant dense<0.000000e+00> : vector<4x32xf32>
    %749 = tpu.matmul %681, %3, %cst_310 {dimension_numbers = #tpu.dot_dimension_numbers<[1], [0], [0], [1], [0, 0, 1, 1], [], []>} : vector<4x32xf32>, vector<32x32xf32>, vector<4x32xf32> -> vector<4x32xf32>
    %750 = arith.addf %738, %749 : vector<4x32xf32>
    %751 = arith.negf %750 : vector<4x32xf32>
    %752 = math.exp %751 : vector<4x32xf32>
    %cst_311 = arith.constant 1.000000e+00 : f32
    %753 = vector.broadcast %cst_311 : f32 to vector<4x32xf32>
    %754 = arith.addf %753, %752 : vector<4x32xf32>
    %755 = arith.divf %753, %754 : vector<4x32xf32>
    %cst_312 = arith.constant dense<0.000000e+00> : vector<4x32xf32>
    %756 = tpu.matmul %681, %5, %cst_312 {dimension_numbers = #tpu.dot_dimension_numbers<[1], [0], [0], [1], [0, 0, 1, 1], [], []>} : vector<4x32xf32>, vector<32x32xf32>, vector<4x32xf32> -> vector<4x32xf32>
    %757 = arith.addf %756, %15 : vector<4x32xf32>
    %758 = arith.mulf %748, %757 : vector<4x32xf32>
    %759 = arith.addf %741, %758 : vector<4x32xf32>
    %760 = math.tanh %759 : vector<4x32xf32>
    %cst_313 = arith.constant 1.000000e+00 : f32
    %761 = vector.broadcast %cst_313 : f32 to vector<4x32xf32>
    %762 = arith.subf %761, %755 : vector<4x32xf32>
    %763 = arith.mulf %762, %760 : vector<4x32xf32>
    %764 = arith.mulf %755, %681 : vector<4x32xf32>
    %765 = arith.addf %763, %764 : vector<4x32xf32>
    %766 = vector.broadcast %c7_i32_297 : i32 to vector<4x1xi32>
    %767 = arith.cmpi sgt, %20, %766 : vector<4x1xi32>
    %768 = arith.extui %767 : vector<4x1xi1> to vector<4x1xi32>
    %769 = arith.sitofp %768 : vector<4x1xi32> to vector<4x1xf32>
    %770 = vector.broadcast %769 : vector<4x1xf32> to vector<4x32xf32>
    %771 = arith.mulf %770, %765 : vector<4x32xf32>
    %772 = arith.index_cast %c7_i32_297 : i32 to index
    %c0_314 = arith.constant 0 : index
    %c0_315 = arith.constant 0 : index
    %c0_316 = arith.constant 0 : index
    %773 = vector.load %arg6[%772, %c0_314, %c0_315, %c0_316] : memref<8x2x4x32xf32, #tpu.memory_space<vmem>>, vector<1x1x4x32xf32>
    %774 = vector.shape_cast %773 : vector<1x1x4x32xf32> to vector<4x32xf32>
    %775 = vector.shape_cast %771 : vector<4x32xf32> to vector<1x1x4x32xf32>
    tpu.vector_store %arg6[%772, %c0_314, %c0_315, %c0_316], %775 {strides = array<i32>} : memref<8x2x4x32xf32, #tpu.memory_space<vmem>>, vector<1x1x4x32xf32>,
    %776 = vector.broadcast %769 : vector<4x1xf32> to vector<4x32xf32>
    %777 = arith.mulf %776, %765 : vector<4x32xf32>
    %cst_317 = arith.constant 1.000000e+00 : f32
    %778 = vector.broadcast %cst_317 : f32 to vector<4x1xf32>
    %779 = arith.subf %778, %769 : vector<4x1xf32>
    %780 = vector.broadcast %779 : vector<4x1xf32> to vector<4x32xf32>
    %781 = arith.mulf %780, %681 : vector<4x32xf32>
    %782 = arith.addf %777, %781 : vector<4x32xf32>
    %783 = arith.index_cast %732 : i32 to index
    %c3_318 = arith.constant 3 : index
    %c0_319 = arith.constant 0 : index
    %c0_320 = arith.constant 0 : index
    %784 = vector.load %arg2[%783, %c3_318, %c0_319, %c0_320] : memref<8x6x4x32xf32, #tpu.memory_space<vmem>>, vector<1x1x4x32xf32>
    %785 = vector.shape_cast %784 : vector<1x1x4x32xf32> to vector<4x32xf32>
    %786 = arith.index_cast %732 : i32 to index
    %c4_321 = arith.constant 4 : index
    %c0_322 = arith.constant 0 : index
    %c0_323 = arith.constant 0 : index
    %787 = vector.load %arg2[%786, %c4_321, %c0_322, %c0_323] : memref<8x6x4x32xf32, #tpu.memory_space<vmem>>, vector<1x1x4x32xf32>
    %788 = vector.shape_cast %787 : vector<1x1x4x32xf32> to vector<4x32xf32>
    %789 = arith.index_cast %732 : i32 to index
    %c5_324 = arith.constant 5 : index
    %c0_325 = arith.constant 0 : index
    %c0_326 = arith.constant 0 : index
    %790 = vector.load %arg2[%789, %c5_324, %c0_325, %c0_326] : memref<8x6x4x32xf32, #tpu.memory_space<vmem>>, vector<1x1x4x32xf32>
    %791 = vector.shape_cast %790 : vector<1x1x4x32xf32> to vector<4x32xf32>
    %cst_327 = arith.constant dense<0.000000e+00> : vector<4x32xf32>
    %792 = tpu.matmul %731, %7, %cst_327 {dimension_numbers = #tpu.dot_dimension_numbers<[1], [0], [0], [1], [0, 0, 1, 1], [], []>} : vector<4x32xf32>, vector<32x32xf32>, vector<4x32xf32> -> vector<4x32xf32>
    %793 = arith.addf %785, %792 : vector<4x32xf32>
    %794 = arith.negf %793 : vector<4x32xf32>
    %795 = math.exp %794 : vector<4x32xf32>
    %cst_328 = arith.constant 1.000000e+00 : f32
    %796 = vector.broadcast %cst_328 : f32 to vector<4x32xf32>
    %797 = arith.addf %796, %795 : vector<4x32xf32>
    %798 = arith.divf %796, %797 : vector<4x32xf32>
    %cst_329 = arith.constant dense<0.000000e+00> : vector<4x32xf32>
    %799 = tpu.matmul %731, %9, %cst_329 {dimension_numbers = #tpu.dot_dimension_numbers<[1], [0], [0], [1], [0, 0, 1, 1], [], []>} : vector<4x32xf32>, vector<32x32xf32>, vector<4x32xf32> -> vector<4x32xf32>
    %800 = arith.addf %788, %799 : vector<4x32xf32>
    %801 = arith.negf %800 : vector<4x32xf32>
    %802 = math.exp %801 : vector<4x32xf32>
    %cst_330 = arith.constant 1.000000e+00 : f32
    %803 = vector.broadcast %cst_330 : f32 to vector<4x32xf32>
    %804 = arith.addf %803, %802 : vector<4x32xf32>
    %805 = arith.divf %803, %804 : vector<4x32xf32>
    %cst_331 = arith.constant dense<0.000000e+00> : vector<4x32xf32>
    %806 = tpu.matmul %731, %11, %cst_331 {dimension_numbers = #tpu.dot_dimension_numbers<[1], [0], [0], [1], [0, 0, 1, 1], [], []>} : vector<4x32xf32>, vector<32x32xf32>, vector<4x32xf32> -> vector<4x32xf32>
    %807 = arith.addf %806, %19 : vector<4x32xf32>
    %808 = arith.mulf %798, %807 : vector<4x32xf32>
    %809 = arith.addf %791, %808 : vector<4x32xf32>
    %810 = math.tanh %809 : vector<4x32xf32>
    %cst_332 = arith.constant 1.000000e+00 : f32
    %811 = vector.broadcast %cst_332 : f32 to vector<4x32xf32>
    %812 = arith.subf %811, %805 : vector<4x32xf32>
    %813 = arith.mulf %812, %810 : vector<4x32xf32>
    %814 = arith.mulf %805, %731 : vector<4x32xf32>
    %815 = arith.addf %813, %814 : vector<4x32xf32>
    %816 = vector.broadcast %732 : i32 to vector<4x1xi32>
    %817 = arith.cmpi sgt, %20, %816 : vector<4x1xi32>
    %818 = arith.extui %817 : vector<4x1xi1> to vector<4x1xi32>
    %819 = arith.sitofp %818 : vector<4x1xi32> to vector<4x1xf32>
    %820 = vector.broadcast %819 : vector<4x1xf32> to vector<4x32xf32>
    %821 = arith.mulf %820, %815 : vector<4x32xf32>
    %822 = arith.index_cast %732 : i32 to index
    %c1_333 = arith.constant 1 : index
    %c0_334 = arith.constant 0 : index
    %c0_335 = arith.constant 0 : index
    %823 = vector.load %arg6[%822, %c1_333, %c0_334, %c0_335] : memref<8x2x4x32xf32, #tpu.memory_space<vmem>>, vector<1x1x4x32xf32>
    %824 = vector.shape_cast %823 : vector<1x1x4x32xf32> to vector<4x32xf32>
    %825 = vector.shape_cast %821 : vector<4x32xf32> to vector<1x1x4x32xf32>
    tpu.vector_store %arg6[%822, %c1_333, %c0_334, %c0_335], %825 {strides = array<i32>} : memref<8x2x4x32xf32, #tpu.memory_space<vmem>>, vector<1x1x4x32xf32>,
    %826 = vector.broadcast %819 : vector<4x1xf32> to vector<4x32xf32>
    %827 = arith.mulf %826, %815 : vector<4x32xf32>
    %cst_336 = arith.constant 1.000000e+00 : f32
    %828 = vector.broadcast %cst_336 : f32 to vector<4x1xf32>
    %829 = arith.subf %828, %819 : vector<4x1xf32>
    %830 = vector.broadcast %829 : vector<4x1xf32> to vector<4x32xf32>
    %831 = arith.mulf %830, %731 : vector<4x32xf32>
    %832 = arith.addf %827, %831 : vector<4x32xf32>
    %c8_i32 = arith.constant 8 : i32
    %c0_337 = arith.constant 0 : index
    %c0_338 = arith.constant 0 : index
    %c0_339 = arith.constant 0 : index
    %833 = vector.load %arg7[%c0_337, %c0_338, %c0_339] : memref<2x4x32xf32, #tpu.memory_space<vmem>>, vector<1x4x32xf32>
    %834 = vector.shape_cast %833 : vector<1x4x32xf32> to vector<4x32xf32>
    %835 = vector.shape_cast %782 : vector<4x32xf32> to vector<1x4x32xf32>
    tpu.vector_store %arg7[%c0_337, %c0_338, %c0_339], %835 {strides = array<i32>} : memref<2x4x32xf32, #tpu.memory_space<vmem>>, vector<1x4x32xf32>,
    %c1_340 = arith.constant 1 : index
    %c0_341 = arith.constant 0 : index
    %c0_342 = arith.constant 0 : index
    %836 = vector.load %arg7[%c1_340, %c0_341, %c0_342] : memref<2x4x32xf32, #tpu.memory_space<vmem>>, vector<1x4x32xf32>
    %837 = vector.shape_cast %836 : vector<1x4x32xf32> to vector<4x32xf32>
    %838 = vector.shape_cast %832 : vector<4x32xf32> to vector<1x4x32xf32>
    tpu.vector_store %arg7[%c1_340, %c0_341, %c0_342], %838 {strides = array<i32>} : memref<2x4x32xf32, #tpu.memory_space<vmem>>, vector<1x4x32xf32>,
    return
  }
  func.func @transform_0(%arg0: i32) -> (i32, i32) {
    %c0_i32 = arith.constant 0 : i32
    %c0_i32_0 = arith.constant 0 : i32
    return %arg0, %c0_i32 : i32, i32
  }
  func.func @transform_1(%arg0: i32) -> (i32, i32, i32, i32) {
    %c0_i32 = arith.constant 0 : i32
    %c0_i32_0 = arith.constant 0 : i32
    %c0_i32_1 = arith.constant 0 : i32
    %c0_i32_2 = arith.constant 0 : i32
    return %c0_i32, %c0_i32_0, %arg0, %c0_i32_1 : i32, i32, i32, i32
  }
  func.func @transform_2(%arg0: i32) -> (i32, i32, i32) {
    %c0_i32 = arith.constant 0 : i32
    %c0_i32_0 = arith.constant 0 : i32
    %c0_i32_1 = arith.constant 0 : i32
    %c0_i32_2 = arith.constant 0 : i32
    return %c0_i32, %c0_i32_0, %c0_i32_1 : i32, i32, i32
  }
  func.func @transform_3(%arg0: i32) -> (i32, i32, i32) {
    %c0_i32 = arith.constant 0 : i32
    %c0_i32_0 = arith.constant 0 : i32
    %c0_i32_1 = arith.constant 0 : i32
    %c0_i32_2 = arith.constant 0 : i32
    return %c0_i32, %c0_i32_0, %c0_i32_1 : i32, i32, i32
  }
  func.func @transform_4(%arg0: i32) -> (i32, i32, i32) {
    %c0_i32 = arith.constant 0 : i32
    %c0_i32_0 = arith.constant 0 : i32
    %c0_i32_1 = arith.constant 0 : i32
    return %c0_i32, %arg0, %c0_i32_0 : i32, i32, i32
  }
  func.func @transform_5(%arg0: i32) -> (i32, i32, i32, i32) {
    %c0_i32 = arith.constant 0 : i32
    %c0_i32_0 = arith.constant 0 : i32
    %c0_i32_1 = arith.constant 0 : i32
    %c0_i32_2 = arith.constant 0 : i32
    return %c0_i32, %c0_i32_0, %arg0, %c0_i32_1 : i32, i32, i32, i32
  }
  func.func @transform_6(%arg0: i32) -> (i32, i32, i32) {
    %c0_i32 = arith.constant 0 : i32
    %c0_i32_0 = arith.constant 0 : i32
    %c0_i32_1 = arith.constant 0 : i32
    return %c0_i32, %arg0, %c0_i32_0 : i32, i32, i32
  }
}

</mosaic_0001>

<llo_original>
// kernel: tpu_custom_call.1
$region0: #{tpu_custom_call.1}
  #allocation0 [shape = 'u32[]', space=smem, size = 0x4, offset = 0x4, fixed_abs, tag = 'smem constant byte address 0x4 - core index']
  #allocation1 [shape = 'u32[72,128]{1,0:T(1,128)}', space=vmem, size = 0x9000, scoped, tag = 'internal scratch']
  %s0 = inlined_call_operand.vmem [shape: s32[4,1], index: 0, kind: input, shape index: {}]
  %s1 = inlined_call_operand.hbm [shape: f32[8,6,4,32], index: 1, kind: input, shape index: {}]
  %s2 = inlined_call_operand.hbm [shape: f32[6,32,32], index: 2, kind: input, shape index: {}]
  %s3 = inlined_call_operand.hbm [shape: f32[2,1,32], index: 3, kind: input, shape index: {}]
  %s4 = inlined_call_operand.vmem [shape: f32[2,4,32], index: 4, kind: input, shape index: {}]
  %s5 = inlined_call_operand.hbm [shape: f32[8,2,4,32], index: 5, kind: output, shape index: {0}]
  %s6 = inlined_call_operand.hbm [shape: f32[2,4,32], index: 6, kind: output, shape index: {1}]
  %7 = xla_tuple %s5, %s6
  %s8 = sld [smem:[#allocation0]]
  $region50: #{tpu_custom_call.1} parent=0
    _
  %s10 = ssub.s32 1, %s8
  %s11 = scalar_select 0, %s10, %s8
  $region1: #{tpu_custom_call.1} parent=0
    #allocation2 [shape = 'u8[98304]{0}', space=vmem, size = 0x18000, scoped, tag = 'input window, operand 1, single buffered']
    #allocation3 [shape = 's32[1]{0}', space=sflag, size = 0x4, scoped, tag = 'scoped memory for tpu_custom_call.1']
    #allocation4 [shape = 's32[1]{0}', space=sflag, size = 0x4, scoped, tag = 'scoped memory for tpu_custom_call.1']
    #allocation5 [shape = 'u8[98304]{0}', space=vmem, size = 0x18000, scoped, tag = 'input window, operand 2, single buffered']
    #allocation6 [shape = 's32[1]{0}', space=sflag, size = 0x4, scoped, tag = 'scoped memory for tpu_custom_call.1']
    #allocation7 [shape = 'u8[1024]{0}', space=vmem, size = 0x400, scoped, tag = 'input window, operand 3, single buffered']
    #allocation8 [shape = 'u8[32768]{0}', space=vmem, size = 0x8000, scoped, tag = 'output window, operand 0, single buffered']
    #allocation9 [shape = 'u8[4096]{0}', space=vmem, size = 0x1000, scoped, tag = 'output window, operand 1, single buffered']
    #allocation10 [shape = 's32[1]{0}', space=sflag, size = 0x4, scoped, tag = 'scoped memory for tpu_custom_call.1']
    %12 = vsyncpa [#allocation3], 0
    %13 = vsyncpa [#allocation6], 0
    %14 = vsyncpa [#allocation4], 0
    %15 = vsyncpa [#allocation10], 0
    // Predicated region
    $region2: #{tpu_custom_call.1} parent=1 // pred_check
      _
    $region3: #{tpu_custom_call.1} parent=1 // pred_check_branch
      %17 = sbr.rel (0) target = $region5
    $region4: #{tpu_custom_call.1} parent=1 // pred_region
      _
    $region5: #{tpu_custom_call.1} parent=1 // pred_fallthru
      _
    // Predicated region
    $region6: #{tpu_custom_call.1} parent=1 // pred_check
      _
    $region7: #{tpu_custom_call.1} parent=1 // pred_check_branch
      %19 = sbr.rel (0) target = $region9
    $region8: #{tpu_custom_call.1} parent=1 // pred_region
      %21 = vsyncadd [#allocation3], 0
      %s22 = sshll.u32 %s1, 4
      %s23 = int_to_ptr.hbm [resolvable:$true] %s22
      %s24 = sshll.u32 [#allocation2], 4
      %s25 = int_to_ptr.vmem [resolvable:$true] %s24
      %30 = dma.hbm_to_vmem [thread:$0]  %s23, 3072, %s25, [#allocation3], 64, 64, 4
    $region9: #{tpu_custom_call.1} parent=1 // pred_fallthru
      _
    // Predicated region
    $region10: #{tpu_custom_call.1} parent=1 // pred_check
      _
    $region11: #{tpu_custom_call.1} parent=1 // pred_check_branch
      %32 = sbr.rel (0) target = $region13
    $region12: #{tpu_custom_call.1} parent=1 // pred_region
      %34 = vsyncadd [#allocation6], 0
      %s35 = sshll.u32 %s2, 4
      %s36 = int_to_ptr.hbm [resolvable:$true] %s35
      %s37 = sshll.u32 [#allocation5], 4
      %s38 = int_to_ptr.vmem [resolvable:$true] %s37
      %43 = dma.hbm_to_vmem [thread:$0]  %s36, 3072, %s38, [#allocation6], 128, 128, 8
    $region13: #{tpu_custom_call.1} parent=1 // pred_fallthru
      _
    // Predicated region
    $region14: #{tpu_custom_call.1} parent=1 // pred_check
      _
    $region15: #{tpu_custom_call.1} parent=1 // pred_check_branch
      %45 = sbr.rel (0) target = $region17
    $region16: #{tpu_custom_call.1} parent=1 // pred_region
      %47 = vsyncadd [#allocation6], 0
      %s48 = sshll.u32 %s3, 4
      %s49 = int_to_ptr.hbm [resolvable:$true] %s48
      %s50 = sshll.u32 [#allocation7], 4
      %s51 = int_to_ptr.vmem [resolvable:$true] %s50
      %56 = dma.hbm_to_vmem [thread:$0]  %s49, 32, %s51, [#allocation6], 16, 16, 1
    $region17: #{tpu_custom_call.1} parent=1 // pred_fallthru
      _
    // Predicated region
    $region18: #{tpu_custom_call.1} parent=1 // pred_check
      _
    $region19: #{tpu_custom_call.1} parent=1 // pred_check_branch
      %58 = sbr.rel (0) target = $region21
    $region20: #{tpu_custom_call.1} parent=1 // pred_region
      _
    $region21: #{tpu_custom_call.1} parent=1 // pred_fallthru
      _
    // Predicated region
    $region22: #{tpu_custom_call.1} parent=1 // pred_check
      _
    $region23: #{tpu_custom_call.1} parent=1 // pred_check_branch
      %60 = sbr.rel (0) target = $region25
    $region24: #{tpu_custom_call.1} parent=1 // pred_region
      %62 = dma.done [#allocation3], 3072
    $region25: #{tpu_custom_call.1} parent=1 // pred_fallthru
      _
    // Predicated region
    $region26: #{tpu_custom_call.1} parent=1 // pred_check
      _
    $region27: #{tpu_custom_call.1} parent=1 // pred_check_branch
      %64 = sbr.rel (0) target = $region29
    $region28: #{tpu_custom_call.1} parent=1 // pred_region
      %66 = dma.done [#allocation6], 3072
    $region29: #{tpu_custom_call.1} parent=1 // pred_fallthru
      _
    // Predicated region
    $region30: #{tpu_custom_call.1} parent=1 // pred_check
      _
    $region31: #{tpu_custom_call.1} parent=1 // pred_check_branch
      %68 = sbr.rel (0) target = $region33
    $region32: #{tpu_custom_call.1} parent=1 // pred_region
      %70 = dma.done [#allocation6], 32
    $region33: #{tpu_custom_call.1} parent=1 // pred_fallthru
      _
    %v71 = vld [vmem:[#allocation5] sm:$0xff]
    %v72 = vld [vmem:[#allocation5 + $0x8] sm:$0xff]
    %v73 = vld [vmem:[#allocation5 + $0x10] sm:$0xff]
    %v74 = vld [vmem:[#allocation5 + $0x18] sm:$0xff]
    %s75 = scalar_lea.vmem [#allocation5], 32
    %v76 = vld [vmem:[%s75] sm:$0xff]
    %v77 = vld [vmem:[%s75 + $0x8] sm:$0xff]
    %v78 = vld [vmem:[%s75 + $0x10] sm:$0xff]
    %v79 = vld [vmem:[%s75 + $0x18] sm:$0xff]
    %s80 = scalar_lea.vmem [#allocation5], 64
    %v81 = vld [vmem:[%s80] sm:$0xff]
    %v82 = vld [vmem:[%s80 + $0x8] sm:$0xff]
    %v83 = vld [vmem:[%s80 + $0x10] sm:$0xff]
    %v84 = vld [vmem:[%s80 + $0x18] sm:$0xff]
    %s85 = scalar_lea.vmem [#allocation5], 96
    %v86 = vld [vmem:[%s85] sm:$0xff]
    %v87 = vld [vmem:[%s85 + $0x8] sm:$0xff]
    %v88 = vld [vmem:[%s85 + $0x10] sm:$0xff]
    %v89 = vld [vmem:[%s85 + $0x18] sm:$0xff]
    %s90 = scalar_lea.vmem [#allocation5], 128
    %v91 = vld [vmem:[%s90] sm:$0xff]
    %v92 = vld [vmem:[%s90 + $0x8] sm:$0xff]
    %v93 = vld [vmem:[%s90 + $0x10] sm:$0xff]
    %v94 = vld [vmem:[%s90 + $0x18] sm:$0xff]
    %s95 = scalar_lea.vmem [#allocation5], 160
    %v96 = vld [vmem:[%s95] sm:$0xff]
    %v97 = vld [vmem:[%s95 + $0x8] sm:$0xff]
    %v98 = vld [vmem:[%s95 + $0x10] sm:$0xff]
    %v99 = vld [vmem:[%s95 + $0x18] sm:$0xff]
    %v100 = vld [vmem:[#allocation7] sm:$0x1]
    %v102 = vperm.slane %v100, 0
    %s104 = scalar_lea.vmem [#allocation7], 1
    %v105 = vld [vmem:[%s104] sm:$0x1]
    %v107 = vperm.slane %v105, 0
    %v109 = vld [vmem:[%s0] sm:$0xf]
    %v110 = vld [vmem:[%s4] sm:$0xf]
    %s111 = scalar_lea.vmem %s4, 4
    %v112 = vld [vmem:[%s111] sm:$0xf]
    %v113 = vld [vmem:[#allocation2] sm:$0xf]
    %s114 = scalar_lea.vmem [#allocation2], 4
    %v115 = vld [vmem:[%s114] sm:$0xf]
    %s116 = scalar_lea.vmem [#allocation2], 8
    %v117 = vld [vmem:[%s116] sm:$0xf]
    %vm118 = vcmask 261120
    %v120 = vsel %vm118, %v110, 0
    %122 = vmatpush.msra.mxu0 0.0
    %123 = vmatpush.msra.mxu0 0.0
    %124 = vmatpush.msra.mxu0 0.0
    %125 = vmatpush.msra.mxu0 0.0
    %126 = vmatpush.msra.mxu0 0.0
    %127 = vmatpush.msra.mxu0 0.0
    %128 = vmatpush.msra.mxu0 0.0
    %129 = vmatpush.msra.mxu0 0.0
    %130 = vmatpush.msra.mxu0 0.0
    %131 = vmatpush.msra.mxu0 0.0
    %132 = vmatpush.msra.mxu0 0.0
    %133 = vmatpush.msra.mxu0 0.0
    %134 = vmatpush.msra.mxu0 %v74
    %135 = vmatpush.msra.mxu0 %v73
    %136 = vmatpush.msra.mxu0 %v72
    %137 = vmatpush.msra.mxu0 %v71
    %138 = vmatmul.f32.gmra.mxu0 %v120
    %v139 = vpop.f32.mrf.mxu0
    %v140 = vadd.f32 0.0, %v139
    %141 = vdwg.mxu0
    %v142 = vadd.f32 %v113, %v140
    %v143 = vxor.u32 %v142, 2147483648
    %v144 = vmul.f32 %v143, 1.442695
    %v145 = vpow.pop %v144
    %v146 = vadd.f32 %v145, 1.0
    %v147 = vrcp.pop %v146
    %v148 = vmul.f32 %v146, %v147
    %v149 = vsub.f32 1.0, %v148
    %v150 = vmul.f32 %v147, %v149
    %v151 = vadd.f32 %v147, %v150
    %vm152 = vweird.f32 %v146
    %vm153 = vweird.f32 %v147
    %vm154 = vmor %vm152, %vm153
    %v155 = vsel %vm154, %v147, %v151
    %v156 = vand.u32 2147483647, %v146
    %vm157 = vcmp.eq.f32.partialorder %v156, 8.507059e+37
    %v158 = vand.u32 %v146, 2147483648
    %v159 = vor.u32 1.1754944e-38, %v158
    %v160 = vsel %vm157, %v159, %v155
    %v161 = vmul.f32 1.0, %v160
    %162 = vmatpush.msra.mxu0 0.0
    %163 = vmatpush.msra.mxu0 0.0
    %164 = vmatpush.msra.mxu0 0.0
    %165 = vmatpush.msra.mxu0 0.0
    %166 = vmatpush.msra.mxu0 0.0
    %167 = vmatpush.msra.mxu0 0.0
    %168 = vmatpush.msra.mxu0 0.0
    %169 = vmatpush.msra.mxu0 0.0
    %170 = vmatpush.msra.mxu0 0.0
    %171 = vmatpush.msra.mxu0 0.0
    %172 = vmatpush.msra.mxu0 0.0
    %173 = vmatpush.msra.mxu0 0.0
    %174 = vmatpush.msra.mxu0 %v79
    %175 = vmatpush.msra.mxu0 %v78
    %176 = vmatpush.msra.mxu0 %v77
    %177 = vmatpush.msra.mxu0 %v76
    %178 = vmatmul.f32.gmra.mxu0 %v120
    %v179 = vpop.f32.mrf.mxu0
    %v180 = vadd.f32 0.0, %v179
    %181 = vdwg.mxu0
    %v182 = vadd.f32 %v115, %v180
    %v183 = vxor.u32 %v182, 2147483648
    %v184 = vmul.f32 %v183, 1.442695
    %v185 = vpow.pop %v184
    %v186 = vadd.f32 %v185, 1.0
    %v187 = vrcp.pop %v186
    %v188 = vmul.f32 %v186, %v187
    %v189 = vsub.f32 1.0, %v188
    %v190 = vmul.f32 %v187, %v189
    %v191 = vadd.f32 %v187, %v190
    %vm192 = vweird.f32 %v186
    %vm193 = vweird.f32 %v187
    %vm194 = vmor %vm192, %vm193
    %v195 = vsel %vm194, %v187, %v191
    %v196 = vand.u32 2147483647, %v186
    %vm197 = vcmp.eq.f32.partialorder %v196, 8.507059e+37
    %v198 = vand.u32 %v186, 2147483648
    %v199 = vor.u32 1.1754944e-38, %v198
    %v200 = vsel %vm197, %v199, %v195
    %v201 = vmul.f32 1.0, %v200
    %202 = vmatpush.msra.mxu0 0.0
    %203 = vmatpush.msra.mxu0 0.0
    %204 = vmatpush.msra.mxu0 0.0
    %205 = vmatpush.msra.mxu0 0.0
    %206 = vmatpush.msra.mxu0 0.0
    %207 = vmatpush.msra.mxu0 0.0
    %208 = vmatpush.msra.mxu0 0.0
    %209 = vmatpush.msra.mxu0 0.0
    %210 = vmatpush.msra.mxu0 0.0
    %211 = vmatpush.msra.mxu0 0.0
    %212 = vmatpush.msra.mxu0 0.0
    %213 = vmatpush.msra.mxu0 0.0
    %214 = vmatpush.msra.mxu0 %v84
    %215 = vmatpush.msra.mxu0 %v83
    %216 = vmatpush.msra.mxu0 %v82
    %217 = vmatpush.msra.mxu0 %v81
    %218 = vmatmul.f32.gmra.mxu0 %v120
    %v219 = vpop.f32.mrf.mxu0
    %v220 = vadd.f32 %v102, %v219
    %221 = vdwg.mxu0
    %v222 = vmul.f32 %v161, %v220
    %v223 = vadd.f32 %v117, %v222
    %v224 = vtanh.pop %v223
    %v225 = vsub.f32 1.0, %v201
    %v226 = vmul.f32 %v225, %v224
    %v227 = vmul.f32 %v201, %v110
    %v228 = vadd.f32 %v226, %v227
    %vm229 = vcmp.gt.s32.totalorder %v109, 0
    %v230 = vsel %vm229, 1, 0
    %v231 = vcvt.s32.f32 %v230
    %233 = vset.pattern.permute.xlu0 0
    %234 = vperm.xlu0 %233, %v231
    %v235 = vpop.permute.xlu0 %234
    %v237 = vmul.f32 %v235, %v228
    %vm238 = vcmask 257024
    %239 = vst.msk [vmem:[#allocation8] sm:$0xf] %vm238, %v237
    %v240 = vsub.f32 1.0, %v231
    %242 = vset.pattern.permute.xlu0 0
    %243 = vperm.xlu0 %242, %v240
    %v244 = vpop.permute.xlu0 %243
    %v246 = vmul.f32 %v244, %v110
    %v247 = vadd.f32 %v237, %v246
    %s248 = scalar_lea.vmem [#allocation2], 180
    %v249 = vld [vmem:[%s248] sm:$0xf]
    %s250 = scalar_lea.vmem [#allocation2], 184
    %v251 = vld [vmem:[%s250] sm:$0xf]
    %s252 = scalar_lea.vmem [#allocation2], 188
    %v253 = vld [vmem:[%s252] sm:$0xf]
    %v255 = vsel %vm118, %v112, 0
    %257 = vmatpush.msra.mxu0 0.0
    %258 = vmatpush.msra.mxu0 0.0
    %259 = vmatpush.msra.mxu0 0.0
    %260 = vmatpush.msra.mxu0 0.0
    %261 = vmatpush.msra.mxu0 0.0
    %262 = vmatpush.msra.mxu0 0.0
    %263 = vmatpush.msra.mxu0 0.0
    %264 = vmatpush.msra.mxu0 0.0
    %265 = vmatpush.msra.mxu0 0.0
    %266 = vmatpush.msra.mxu0 0.0
    %267 = vmatpush.msra.mxu0 0.0
    %268 = vmatpush.msra.mxu0 0.0
    %269 = vmatpush.msra.mxu0 %v89
    %270 = vmatpush.msra.mxu0 %v88
    %271 = vmatpush.msra.mxu0 %v87
    %272 = vmatpush.msra.mxu0 %v86
    %273 = vmatmul.f32.gmra.mxu0 %v255
    %v274 = vpop.f32.mrf.mxu0
    %v275 = vadd.f32 0.0, %v274
    %276 = vdwg.mxu0
    %v277 = vadd.f32 %v249, %v275
    %v278 = vxor.u32 %v277, 2147483648
    %v279 = vmul.f32 %v278, 1.442695
    %v280 = vpow.pop %v279
    %v281 = vadd.f32 %v280, 1.0
    %v282 = vrcp.pop %v281
    %v283 = vmul.f32 %v281, %v282
    %v284 = vsub.f32 1.0, %v283
    %v285 = vmul.f32 %v282, %v284
    %v286 = vadd.f32 %v282, %v285
    %vm287 = vweird.f32 %v281
    %vm288 = vweird.f32 %v282
    %vm289 = vmor %vm287, %vm288
    %v290 = vsel %vm289, %v282, %v286
    %v291 = vand.u32 2147483647, %v281
    %vm292 = vcmp.eq.f32.partialorder %v291, 8.507059e+37
    %v293 = vand.u32 %v281, 2147483648
    %v294 = vor.u32 1.1754944e-38, %v293
    %v295 = vsel %vm292, %v294, %v290
    %v296 = vmul.f32 1.0, %v295
    %297 = vmatpush.msra.mxu0 0.0
    %298 = vmatpush.msra.mxu0 0.0
    %299 = vmatpush.msra.mxu0 0.0
    %300 = vmatpush.msra.mxu0 0.0
    %301 = vmatpush.msra.mxu0 0.0
    %302 = vmatpush.msra.mxu0 0.0
    %303 = vmatpush.msra.mxu0 0.0
    %304 = vmatpush.msra.mxu0 0.0
    %305 = vmatpush.msra.mxu0 0.0
    %306 = vmatpush.msra.mxu0 0.0
    %307 = vmatpush.msra.mxu0 0.0
    %308 = vmatpush.msra.mxu0 0.0
    %309 = vmatpush.msra.mxu0 %v94
    %310 = vmatpush.msra.mxu0 %v93
    %311 = vmatpush.msra.mxu0 %v92
    %312 = vmatpush.msra.mxu0 %v91
    %313 = vmatmul.f32.gmra.mxu0 %v255
    %v314 = vpop.f32.mrf.mxu0
    %v315 = vadd.f32 0.0, %v314
    %316 = vdwg.mxu0
    %v317 = vadd.f32 %v251, %v315
    %v318 = vxor.u32 %v317, 2147483648
    %v319 = vmul.f32 %v318, 1.442695
    %v320 = vpow.pop %v319
    %v321 = vadd.f32 %v320, 1.0
    %v322 = vrcp.pop %v321
    %v323 = vmul.f32 %v321, %v322
    %v324 = vsub.f32 1.0, %v323
    %v325 = vmul.f32 %v322, %v324
    %v326 = vadd.f32 %v322, %v325
    %vm327 = vweird.f32 %v321
    %vm328 = vweird.f32 %v322
    %vm329 = vmor %vm327, %vm328
    %v330 = vsel %vm329, %v322, %v326
    %v331 = vand.u32 2147483647, %v321
    %vm332 = vcmp.eq.f32.partialorder %v331, 8.507059e+37
    %v333 = vand.u32 %v321, 2147483648
    %v334 = vor.u32 1.1754944e-38, %v333
    %v335 = vsel %vm332, %v334, %v330
    %v336 = vmul.f32 1.0, %v335
    %337 = vmatpush.msra.mxu0 0.0
    %338 = vmatpush.msra.mxu0 0.0
    %339 = vmatpush.msra.mxu0 0.0
    %340 = vmatpush.msra.mxu0 0.0
    %341 = vmatpush.msra.mxu0 0.0
    %342 = vmatpush.msra.mxu0 0.0
    %343 = vmatpush.msra.mxu0 0.0
    %344 = vmatpush.msra.mxu0 0.0
    %345 = vmatpush.msra.mxu0 0.0
    %346 = vmatpush.msra.mxu0 0.0
    %347 = vmatpush.msra.mxu0 0.0
    %348 = vmatpush.msra.mxu0 0.0
    %349 = vmatpush.msra.mxu0 %v99
    %350 = vmatpush.msra.mxu0 %v98
    %351 = vmatpush.msra.mxu0 %v97
    %352 = vmatpush.msra.mxu0 %v96
    %353 = vmatmul.f32.gmra.mxu0 %v255
    %v354 = vpop.f32.mrf.mxu0
    %v355 = vadd.f32 %v107, %v354
    %356 = vdwg.mxu0
    %v357 = vmul.f32 %v296, %v355
    %v358 = vadd.f32 %v253, %v357
    %v359 = vtanh.pop %v358
    %v360 = vsub.f32 1.0, %v336
    %v361 = vmul.f32 %v360, %v359
    %v362 = vmul.f32 %v336, %v112
    %v363 = vadd.f32 %v361, %v362
    %vm364 = vcmp.gt.s32.totalorder %v109, 7
    %v365 = vsel %vm364, 1, 0
    %v366 = vcvt.s32.f32 %v365
    %368 = vset.pattern.permute.xlu0 0
    %369 = vperm.xlu0 %368, %v366
    %v370 = vpop.permute.xlu0 %369
    %v372 = vmul.f32 %v370, %v363
    %s373 = scalar_lea.vmem [#allocation8], 60
    %374 = vst.msk [vmem:[%s373] sm:$0xf] %vm238, %v372
    %v375 = vsub.f32 1.0, %v366
    %377 = vset.pattern.permute.xlu0 0
    %378 = vperm.xlu0 %377, %v375
    %v379 = vpop.permute.xlu0 %378
    %v381 = vmul.f32 %v379, %v112
    %v382 = vadd.f32 %v372, %v381
    %s383 = scalar_lea.vmem [#allocation2], 24
    %v384 = vld [vmem:[%s383] sm:$0xf]
    %s385 = scalar_lea.vmem [#allocation2], 28
    %v386 = vld [vmem:[%s385] sm:$0xf]
    %s387 = scalar_lea.vmem [#allocation2], 32
    %v388 = vld [vmem:[%s387] sm:$0xf]
    %v390 = vsel %vm118, %v247, 0
    %392 = vmatpush.msra.mxu0 0.0
    %393 = vmatpush.msra.mxu0 0.0
    %394 = vmatpush.msra.mxu0 0.0
    %395 = vmatpush.msra.mxu0 0.0
    %396 = vmatpush.msra.mxu0 0.0
    %397 = vmatpush.msra.mxu0 0.0
    %398 = vmatpush.msra.mxu0 0.0
    %399 = vmatpush.msra.mxu0 0.0
    %400 = vmatpush.msra.mxu0 0.0
    %401 = vmatpush.msra.mxu0 0.0
    %402 = vmatpush.msra.mxu0 0.0
    %403 = vmatpush.msra.mxu0 0.0
    %404 = vmatpush.msra.mxu0 %v74
    %405 = vmatpush.msra.mxu0 %v73
    %406 = vmatpush.msra.mxu0 %v72
    %407 = vmatpush.msra.mxu0 %v71
    %408 = vmatmul.f32.gmra.mxu0 %v390
    %v409 = vpop.f32.mrf.mxu0
    %v410 = vadd.f32 0.0, %v409
    %411 = vdwg.mxu0
    %v412 = vadd.f32 %v384, %v410
    %v413 = vxor.u32 %v412, 2147483648
    %v414 = vmul.f32 %v413, 1.442695
    %v415 = vpow.pop %v414
    %v416 = vadd.f32 %v415, 1.0
    %v417 = vrcp.pop %v416
    %v418 = vmul.f32 %v416, %v417
    %v419 = vsub.f32 1.0, %v418
    %v420 = vmul.f32 %v417, %v419
    %v421 = vadd.f32 %v417, %v420
    %vm422 = vweird.f32 %v416
    %vm423 = vweird.f32 %v417
    %vm424 = vmor %vm422, %vm423
    %v425 = vsel %vm424, %v417, %v421
    %v426 = vand.u32 2147483647, %v416
    %vm427 = vcmp.eq.f32.partialorder %v426, 8.507059e+37
    %v428 = vand.u32 %v416, 2147483648
    %v429 = vor.u32 1.1754944e-38, %v428
    %v430 = vsel %vm427, %v429, %v425
    %v431 = vmul.f32 1.0, %v430
    %432 = vmatpush.msra.mxu0 0.0
    %433 = vmatpush.msra.mxu0 0.0
    %434 = vmatpush.msra.mxu0 0.0
    %435 = vmatpush.msra.mxu0 0.0
    %436 = vmatpush.msra.mxu0 0.0
    %437 = vmatpush.msra.mxu0 0.0
    %438 = vmatpush.msra.mxu0 0.0
    %439 = vmatpush.msra.mxu0 0.0
    %440 = vmatpush.msra.mxu0 0.0
    %441 = vmatpush.msra.mxu0 0.0
    %442 = vmatpush.msra.mxu0 0.0
    %443 = vmatpush.msra.mxu0 0.0
    %444 = vmatpush.msra.mxu0 %v79
    %445 = vmatpush.msra.mxu0 %v78
    %446 = vmatpush.msra.mxu0 %v77
    %447 = vmatpush.msra.mxu0 %v76
    %448 = vmatmul.f32.gmra.mxu0 %v390
    %v449 = vpop.f32.mrf.mxu0
    %v450 = vadd.f32 0.0, %v449
    %451 = vdwg.mxu0
    %v452 = vadd.f32 %v386, %v450
    %v453 = vxor.u32 %v452, 2147483648
    %v454 = vmul.f32 %v453, 1.442695
    %v455 = vpow.pop %v454
    %v456 = vadd.f32 %v455, 1.0
    %v457 = vrcp.pop %v456
    %v458 = vmul.f32 %v456, %v457
    %v459 = vsub.f32 1.0, %v458
    %v460 = vmul.f32 %v457, %v459
    %v461 = vadd.f32 %v457, %v460
    %vm462 = vweird.f32 %v456
    %vm463 = vweird.f32 %v457
    %vm464 = vmor %vm462, %vm463
    %v465 = vsel %vm464, %v457, %v461
    %v466 = vand.u32 2147483647, %v456
    %vm467 = vcmp.eq.f32.partialorder %v466, 8.507059e+37
    %v468 = vand.u32 %v456, 2147483648
    %v469 = vor.u32 1.1754944e-38, %v468
    %v470 = vsel %vm467, %v469, %v465
    %v471 = vmul.f32 1.0, %v470
    %472 = vmatpush.msra.mxu0 0.0
    %473 = vmatpush.msra.mxu0 0.0
    %474 = vmatpush.msra.mxu0 0.0
    %475 = vmatpush.msra.mxu0 0.0
    %476 = vmatpush.msra.mxu0 0.0
    %477 = vmatpush.msra.mxu0 0.0
    %478 = vmatpush.msra.mxu0 0.0
    %479 = vmatpush.msra.mxu0 0.0
    %480 = vmatpush.msra.mxu0 0.0
    %481 = vmatpush.msra.mxu0 0.0
    %482 = vmatpush.msra.mxu0 0.0
    %483 = vmatpush.msra.mxu0 0.0
    %484 = vmatpush.msra.mxu0 %v84
    %485 = vmatpush.msra.mxu0 %v83
    %486 = vmatpush.msra.mxu0 %v82
    %487 = vmatpush.msra.mxu0 %v81
    %488 = vmatmul.f32.gmra.mxu0 %v390
    %v489 = vpop.f32.mrf.mxu0
    %v490 = vadd.f32 %v102, %v489
    %491 = vdwg.mxu0
    %v492 = vmul.f32 %v431, %v490
    %v493 = vadd.f32 %v388, %v492
    %v494 = vtanh.pop %v493
    %v495 = vsub.f32 1.0, %v471
    %v496 = vmul.f32 %v495, %v494
    %v497 = vmul.f32 %v471, %v247
    %v498 = vadd.f32 %v496, %v497
    %vm499 = vcmp.gt.s32.totalorder %v109, 1
    %v500 = vsel %vm499, 1, 0
    %v501 = vcvt.s32.f32 %v500
    %503 = vset.pattern.permute.xlu0 0
    %504 = vperm.xlu0 %503, %v501
    %v505 = vpop.permute.xlu0 %504
    %v507 = vmul.f32 %v505, %v498
    %s508 = scalar_lea.vmem [#allocation8], 8
    %509 = vst.msk [vmem:[%s508] sm:$0xf] %vm238, %v507
    %v510 = vsub.f32 1.0, %v501
    %512 = vset.pattern.permute.xlu0 0
    %513 = vperm.xlu0 %512, %v510
    %v514 = vpop.permute.xlu0 %513
    %v516 = vmul.f32 %v514, %v247
    %v517 = vadd.f32 %v507, %v516
    %s518 = scalar_lea.vmem [#allocation2], 156
    %v519 = vld [vmem:[%s518] sm:$0xf]
    %s520 = scalar_lea.vmem [#allocation2], 160
    %v521 = vld [vmem:[%s520] sm:$0xf]
    %s522 = scalar_lea.vmem [#allocation2], 164
    %v523 = vld [vmem:[%s522] sm:$0xf]
    %v525 = vsel %vm118, %v382, 0
    %527 = vmatpush.msra.mxu0 0.0
    %528 = vmatpush.msra.mxu0 0.0
    %529 = vmatpush.msra.mxu0 0.0
    %530 = vmatpush.msra.mxu0 0.0
    %531 = vmatpush.msra.mxu0 0.0
    %532 = vmatpush.msra.mxu0 0.0
    %533 = vmatpush.msra.mxu0 0.0
    %534 = vmatpush.msra.mxu0 0.0
    %535 = vmatpush.msra.mxu0 0.0
    %536 = vmatpush.msra.mxu0 0.0
    %537 = vmatpush.msra.mxu0 0.0
    %538 = vmatpush.msra.mxu0 0.0
    %539 = vmatpush.msra.mxu0 %v89
    %540 = vmatpush.msra.mxu0 %v88
    %541 = vmatpush.msra.mxu0 %v87
    %542 = vmatpush.msra.mxu0 %v86
    %543 = vmatmul.f32.gmra.mxu0 %v525
    %v544 = vpop.f32.mrf.mxu0
    %v545 = vadd.f32 0.0, %v544
    %546 = vdwg.mxu0
    %v547 = vadd.f32 %v519, %v545
    %v548 = vxor.u32 %v547, 2147483648
    %v549 = vmul.f32 %v548, 1.442695
    %v550 = vpow.pop %v549
    %v551 = vadd.f32 %v550, 1.0
    %v552 = vrcp.pop %v551
    %v553 = vmul.f32 %v551, %v552
    %v554 = vsub.f32 1.0, %v553
    %v555 = vmul.f32 %v552, %v554
    %v556 = vadd.f32 %v552, %v555
    %vm557 = vweird.f32 %v551
    %vm558 = vweird.f32 %v552
    %vm559 = vmor %vm557, %vm558
    %v560 = vsel %vm559, %v552, %v556
    %v561 = vand.u32 2147483647, %v551
    %vm562 = vcmp.eq.f32.partialorder %v561, 8.507059e+37
    %v563 = vand.u32 %v551, 2147483648
    %v564 = vor.u32 1.1754944e-38, %v563
    %v565 = vsel %vm562, %v564, %v560
    %v566 = vmul.f32 1.0, %v565
    %567 = vmatpush.msra.mxu0 0.0
    %568 = vmatpush.msra.mxu0 0.0
    %569 = vmatpush.msra.mxu0 0.0
    %570 = vmatpush.msra.mxu0 0.0
    %571 = vmatpush.msra.mxu0 0.0
    %572 = vmatpush.msra.mxu0 0.0
    %573 = vmatpush.msra.mxu0 0.0
    %574 = vmatpush.msra.mxu0 0.0
    %575 = vmatpush.msra.mxu0 0.0
    %576 = vmatpush.msra.mxu0 0.0
    %577 = vmatpush.msra.mxu0 0.0
    %578 = vmatpush.msra.mxu0 0.0
    %579 = vmatpush.msra.mxu0 %v94
    %580 = vmatpush.msra.mxu0 %v93
    %581 = vmatpush.msra.mxu0 %v92
    %582 = vmatpush.msra.mxu0 %v91
    %583 = vmatmul.f32.gmra.mxu0 %v525
    %v584 = vpop.f32.mrf.mxu0
    %v585 = vadd.f32 0.0, %v584
    %586 = vdwg.mxu0
    %v587 = vadd.f32 %v521, %v585
    %v588 = vxor.u32 %v587, 2147483648
    %v589 = vmul.f32 %v588, 1.442695
    %v590 = vpow.pop %v589
    %v591 = vadd.f32 %v590, 1.0
    %v592 = vrcp.pop %v591
    %v593 = vmul.f32 %v591, %v592
    %v594 = vsub.f32 1.0, %v593
    %v595 = vmul.f32 %v592, %v594
    %v596 = vadd.f32 %v592, %v595
    %vm597 = vweird.f32 %v591
    %vm598 = vweird.f32 %v592
    %vm599 = vmor %vm597, %vm598
    %v600 = vsel %vm599, %v592, %v596
    %v601 = vand.u32 2147483647, %v591
    %vm602 = vcmp.eq.f32.partialorder %v601, 8.507059e+37
    %v603 = vand.u32 %v591, 2147483648
    %v604 = vor.u32 1.1754944e-38, %v603
    %v605 = vsel %vm602, %v604, %v600
    %v606 = vmul.f32 1.0, %v605
    %607 = vmatpush.msra.mxu0 0.0
    %608 = vmatpush.msra.mxu0 0.0
    %609 = vmatpush.msra.mxu0 0.0
    %610 = vmatpush.msra.mxu0 0.0
    %611 = vmatpush.msra.mxu0 0.0
    %612 = vmatpush.msra.mxu0 0.0
    %613 = vmatpush.msra.mxu0 0.0
    %614 = vmatpush.msra.mxu0 0.0
    %615 = vmatpush.msra.mxu0 0.0
    %616 = vmatpush.msra.mxu0 0.0
    %617 = vmatpush.msra.mxu0 0.0
    %618 = vmatpush.msra.mxu0 0.0
    %619 = vmatpush.msra.mxu0 %v99
    %620 = vmatpush.msra.mxu0 %v98
    %621 = vmatpush.msra.mxu0 %v97
    %622 = vmatpush.msra.mxu0 %v96
    %623 = vmatmul.f32.gmra.mxu0 %v525
    %v624 = vpop.f32.mrf.mxu0
    %v625 = vadd.f32 %v107, %v624
    %626 = vdwg.mxu0
    %v627 = vmul.f32 %v566, %v625
    %v628 = vadd.f32 %v523, %v627
    %v629 = vtanh.pop %v628
    %v630 = vsub.f32 1.0, %v606
    %v631 = vmul.f32 %v630, %v629
    %v632 = vmul.f32 %v606, %v382
    %v633 = vadd.f32 %v631, %v632
    %vm634 = vcmp.gt.s32.totalorder %v109, 6
    %v635 = vsel %vm634, 1, 0
    %v636 = vcvt.s32.f32 %v635
    %638 = vset.pattern.permute.xlu0 0
    %639 = vperm.xlu0 %638, %v636
    %v640 = vpop.permute.xlu0 %639
    %v642 = vmul.f32 %v640, %v633
    %s643 = scalar_lea.vmem [#allocation8], 52
    %644 = vst.msk [vmem:[%s643] sm:$0xf] %vm238, %v642
    %v645 = vsub.f32 1.0, %v636
    %647 = vset.pattern.permute.xlu0 0
    %648 = vperm.xlu0 %647, %v645
    %v649 = vpop.permute.xlu0 %648
    %v651 = vmul.f32 %v649, %v382
    %v652 = vadd.f32 %v642, %v651
    %s653 = scalar_lea.vmem [#allocation2], 48
    %v654 = vld [vmem:[%s653] sm:$0xf]
    %s655 = scalar_lea.vmem [#allocation2], 52
    %v656 = vld [vmem:[%s655] sm:$0xf]
    %s657 = scalar_lea.vmem [#allocation2], 56
    %v658 = vld [vmem:[%s657] sm:$0xf]
    %v660 = vsel %vm118, %v517, 0
    %662 = vmatpush.msra.mxu0 0.0
    %663 = vmatpush.msra.mxu0 0.0
    %664 = vmatpush.msra.mxu0 0.0
    %665 = vmatpush.msra.mxu0 0.0
    %666 = vmatpush.msra.mxu0 0.0
    %667 = vmatpush.msra.mxu0 0.0
    %668 = vmatpush.msra.mxu0 0.0
    %669 = vmatpush.msra.mxu0 0.0
    %670 = vmatpush.msra.mxu0 0.0
    %671 = vmatpush.msra.mxu0 0.0
    %672 = vmatpush.msra.mxu0 0.0
    %673 = vmatpush.msra.mxu0 0.0
    %674 = vmatpush.msra.mxu0 %v74
    %675 = vmatpush.msra.mxu0 %v73
    %676 = vmatpush.msra.mxu0 %v72
    %677 = vmatpush.msra.mxu0 %v71
    %678 = vmatmul.f32.gmra.mxu0 %v660
    %v679 = vpop.f32.mrf.mxu0
    %v680 = vadd.f32 0.0, %v679
    %681 = vdwg.mxu0
    %v682 = vadd.f32 %v654, %v680
    %v683 = vxor.u32 %v682, 2147483648
    %v684 = vmul.f32 %v683, 1.442695
    %v685 = vpow.pop %v684
    %v686 = vadd.f32 %v685, 1.0
    %v687 = vrcp.pop %v686
    %v688 = vmul.f32 %v686, %v687
    %v689 = vsub.f32 1.0, %v688
    %v690 = vmul.f32 %v687, %v689
    %v691 = vadd.f32 %v687, %v690
    %vm692 = vweird.f32 %v686
    %vm693 = vweird.f32 %v687
    %vm694 = vmor %vm692, %vm693
    %v695 = vsel %vm694, %v687, %v691
    %v696 = vand.u32 2147483647, %v686
    %vm697 = vcmp.eq.f32.partialorder %v696, 8.507059e+37
    %v698 = vand.u32 %v686, 2147483648
    %v699 = vor.u32 1.1754944e-38, %v698
    %v700 = vsel %vm697, %v699, %v695
    %v701 = vmul.f32 1.0, %v700
    %702 = vmatpush.msra.mxu0 0.0
    %703 = vmatpush.msra.mxu0 0.0
    %704 = vmatpush.msra.mxu0 0.0
    %705 = vmatpush.msra.mxu0 0.0
    %706 = vmatpush.msra.mxu0 0.0
    %707 = vmatpush.msra.mxu0 0.0
    %708 = vmatpush.msra.mxu0 0.0
    %709 = vmatpush.msra.mxu0 0.0
    %710 = vmatpush.msra.mxu0 0.0
    %711 = vmatpush.msra.mxu0 0.0
    %712 = vmatpush.msra.mxu0 0.0
    %713 = vmatpush.msra.mxu0 0.0
    %714 = vmatpush.msra.mxu0 %v79
    %715 = vmatpush.msra.mxu0 %v78
    %716 = vmatpush.msra.mxu0 %v77
    %717 = vmatpush.msra.mxu0 %v76
    %718 = vmatmul.f32.gmra.mxu0 %v660
    %v719 = vpop.f32.mrf.mxu0
    %v720 = vadd.f32 0.0, %v719
    %721 = vdwg.mxu0
    %v722 = vadd.f32 %v656, %v720
    %v723 = vxor.u32 %v722, 2147483648
    %v724 = vmul.f32 %v723, 1.442695
    %v725 = vpow.pop %v724
    %v726 = vadd.f32 %v725, 1.0
    %v727 = vrcp.pop %v726
    %v728 = vmul.f32 %v726, %v727
    %v729 = vsub.f32 1.0, %v728
    %v730 = vmul.f32 %v727, %v729
    %v731 = vadd.f32 %v727, %v730
    %vm732 = vweird.f32 %v726
    %vm733 = vweird.f32 %v727
    %vm734 = vmor %vm732, %vm733
    %v735 = vsel %vm734, %v727, %v731
    %v736 = vand.u32 2147483647, %v726
    %vm737 = vcmp.eq.f32.partialorder %v736, 8.507059e+37
    %v738 = vand.u32 %v726, 2147483648
    %v739 = vor.u32 1.1754944e-38, %v738
    %v740 = vsel %vm737, %v739, %v735
    %v741 = vmul.f32 1.0, %v740
    %742 = vmatpush.msra.mxu0 0.0
    %743 = vmatpush.msra.mxu0 0.0
    %744 = vmatpush.msra.mxu0 0.0
    %745 = vmatpush.msra.mxu0 0.0
    %746 = vmatpush.msra.mxu0 0.0
    %747 = vmatpush.msra.mxu0 0.0
    %748 = vmatpush.msra.mxu0 0.0
    %749 = vmatpush.msra.mxu0 0.0
    %750 = vmatpush.msra.mxu0 0.0
    %751 = vmatpush.msra.mxu0 0.0
    %752 = vmatpush.msra.mxu0 0.0
    %753 = vmatpush.msra.mxu0 0.0
    %754 = vmatpush.msra.mxu0 %v84
    %755 = vmatpush.msra.mxu0 %v83
    %756 = vmatpush.msra.mxu0 %v82
    %757 = vmatpush.msra.mxu0 %v81
    %758 = vmatmul.f32.gmra.mxu0 %v660
    %v759 = vpop.f32.mrf.mxu0
    %v760 = vadd.f32 %v102, %v759
    %761 = vdwg.mxu0
    %v762 = vmul.f32 %v701, %v760
    %v763 = vadd.f32 %v658, %v762
    %v764 = vtanh.pop %v763
    %v765 = vsub.f32 1.0, %v741
    %v766 = vmul.f32 %v765, %v764
    %v767 = vmul.f32 %v741, %v517
    %v768 = vadd.f32 %v766, %v767
    %vm769 = vcmp.gt.s32.totalorder %v109, 2
    %v770 = vsel %vm769, 1, 0
    %v771 = vcvt.s32.f32 %v770
    %773 = vset.pattern.permute.xlu0 0
    %774 = vperm.xlu0 %773, %v771
    %v775 = vpop.permute.xlu0 %774
    %v777 = vmul.f32 %v775, %v768
    %s778 = scalar_lea.vmem [#allocation8], 16
    %779 = vst.msk [vmem:[%s778] sm:$0xf] %vm238, %v777
    %v780 = vsub.f32 1.0, %v771
    %782 = vset.pattern.permute.xlu0 0
    %783 = vperm.xlu0 %782, %v780
    %v784 = vpop.permute.xlu0 %783
    %v786 = vmul.f32 %v784, %v517
    %v787 = vadd.f32 %v777, %v786
    %s788 = scalar_lea.vmem [#allocation2], 132
    %v789 = vld [vmem:[%s788] sm:$0xf]
    %s790 = scalar_lea.vmem [#allocation2], 136
    %v791 = vld [vmem:[%s790] sm:$0xf]
    %s792 = scalar_lea.vmem [#allocation2], 140
    %v793 = vld [vmem:[%s792] sm:$0xf]
    %v795 = vsel %vm118, %v652, 0
    %797 = vmatpush.msra.mxu0 0.0
    %798 = vmatpush.msra.mxu0 0.0
    %799 = vmatpush.msra.mxu0 0.0
    %800 = vmatpush.msra.mxu0 0.0
    %801 = vmatpush.msra.mxu0 0.0
    %802 = vmatpush.msra.mxu0 0.0
    %803 = vmatpush.msra.mxu0 0.0
    %804 = vmatpush.msra.mxu0 0.0
    %805 = vmatpush.msra.mxu0 0.0
    %806 = vmatpush.msra.mxu0 0.0
    %807 = vmatpush.msra.mxu0 0.0
    %808 = vmatpush.msra.mxu0 0.0
    %809 = vmatpush.msra.mxu0 %v89
    %810 = vmatpush.msra.mxu0 %v88
    %811 = vmatpush.msra.mxu0 %v87
    %812 = vmatpush.msra.mxu0 %v86
    %813 = vmatmul.f32.gmra.mxu0 %v795
    %v814 = vpop.f32.mrf.mxu0
    %v815 = vadd.f32 0.0, %v814
    %816 = vdwg.mxu0
    %v817 = vadd.f32 %v789, %v815
    %v818 = vxor.u32 %v817, 2147483648
    %v819 = vmul.f32 %v818, 1.442695
    %v820 = vpow.pop %v819
    %v821 = vadd.f32 %v820, 1.0
    %v822 = vrcp.pop %v821
    %v823 = vmul.f32 %v821, %v822
    %v824 = vsub.f32 1.0, %v823
    %v825 = vmul.f32 %v822, %v824
    %v826 = vadd.f32 %v822, %v825
    %vm827 = vweird.f32 %v821
    %vm828 = vweird.f32 %v822
    %vm829 = vmor %vm827, %vm828
    %v830 = vsel %vm829, %v822, %v826
    %v831 = vand.u32 2147483647, %v821
    %vm832 = vcmp.eq.f32.partialorder %v831, 8.507059e+37
    %v833 = vand.u32 %v821, 2147483648
    %v834 = vor.u32 1.1754944e-38, %v833
    %v835 = vsel %vm832, %v834, %v830
    %v836 = vmul.f32 1.0, %v835
    %837 = vmatpush.msra.mxu0 0.0
    %838 = vmatpush.msra.mxu0 0.0
    %839 = vmatpush.msra.mxu0 0.0
    %840 = vmatpush.msra.mxu0 0.0
    %841 = vmatpush.msra.mxu0 0.0
    %842 = vmatpush.msra.mxu0 0.0
    %843 = vmatpush.msra.mxu0 0.0
    %844 = vmatpush.msra.mxu0 0.0
    %845 = vmatpush.msra.mxu0 0.0
    %846 = vmatpush.msra.mxu0 0.0
    %847 = vmatpush.msra.mxu0 0.0
    %848 = vmatpush.msra.mxu0 0.0
    %849 = vmatpush.msra.mxu0 %v94
    %850 = vmatpush.msra.mxu0 %v93
    %851 = vmatpush.msra.mxu0 %v92
    %852 = vmatpush.msra.mxu0 %v91
    %853 = vmatmul.f32.gmra.mxu0 %v795
    %v854 = vpop.f32.mrf.mxu0
    %v855 = vadd.f32 0.0, %v854
    %856 = vdwg.mxu0
    %v857 = vadd.f32 %v791, %v855
    %v858 = vxor.u32 %v857, 2147483648
    %v859 = vmul.f32 %v858, 1.442695
    %v860 = vpow.pop %v859
    %v861 = vadd.f32 %v860, 1.0
    %v862 = vrcp.pop %v861
    %v863 = vmul.f32 %v861, %v862
    %v864 = vsub.f32 1.0, %v863
    %v865 = vmul.f32 %v862, %v864
    %v866 = vadd.f32 %v862, %v865
    %vm867 = vweird.f32 %v861
    %vm868 = vweird.f32 %v862
    %vm869 = vmor %vm867, %vm868
    %v870 = vsel %vm869, %v862, %v866
    %v871 = vand.u32 2147483647, %v861
    %vm872 = vcmp.eq.f32.partialorder %v871, 8.507059e+37
    %v873 = vand.u32 %v861, 2147483648
    %v874 = vor.u32 1.1754944e-38, %v873
    %v875 = vsel %vm872, %v874, %v870
    %v876 = vmul.f32 1.0, %v875
    %877 = vmatpush.msra.mxu0 0.0
    %878 = vmatpush.msra.mxu0 0.0
    %879 = vmatpush.msra.mxu0 0.0
    %880 = vmatpush.msra.mxu0 0.0
    %881 = vmatpush.msra.mxu0 0.0
    %882 = vmatpush.msra.mxu0 0.0
    %883 = vmatpush.msra.mxu0 0.0
    %884 = vmatpush.msra.mxu0 0.0
    %885 = vmatpush.msra.mxu0 0.0
    %886 = vmatpush.msra.mxu0 0.0
    %887 = vmatpush.msra.mxu0 0.0
    %888 = vmatpush.msra.mxu0 0.0
    %889 = vmatpush.msra.mxu0 %v99
    %890 = vmatpush.msra.mxu0 %v98
    %891 = vmatpush.msra.mxu0 %v97
    %892 = vmatpush.msra.mxu0 %v96
    %893 = vmatmul.f32.gmra.mxu0 %v795
    %v894 = vpop.f32.mrf.mxu0
    %v895 = vadd.f32 %v107, %v894
    %896 = vdwg.mxu0
    %v897 = vmul.f32 %v836, %v895
    %v898 = vadd.f32 %v793, %v897
    %v899 = vtanh.pop %v898
    %v900 = vsub.f32 1.0, %v876
    %v901 = vmul.f32 %v900, %v899
    %v902 = vmul.f32 %v876, %v652
    %v903 = vadd.f32 %v901, %v902
    %vm904 = vcmp.gt.s32.totalorder %v109, 5
    %v905 = vsel %vm904, 1, 0
    %v906 = vcvt.s32.f32 %v905
    %908 = vset.pattern.permute.xlu0 0
    %909 = vperm.xlu0 %908, %v906
    %v910 = vpop.permute.xlu0 %909
    %v912 = vmul.f32 %v910, %v903
    %s913 = scalar_lea.vmem [#allocation8], 44
    %914 = vst.msk [vmem:[%s913] sm:$0xf] %vm238, %v912
    %v915 = vsub.f32 1.0, %v906
    %917 = vset.pattern.permute.xlu0 0
    %918 = vperm.xlu0 %917, %v915
    %v919 = vpop.permute.xlu0 %918
    %v921 = vmul.f32 %v919, %v652
    %v922 = vadd.f32 %v912, %v921
    %s923 = scalar_lea.vmem [#allocation2], 72
    %v924 = vld [vmem:[%s923] sm:$0xf]
    %s925 = scalar_lea.vmem [#allocation2], 76
    %v926 = vld [vmem:[%s925] sm:$0xf]
    %s927 = scalar_lea.vmem [#allocation2], 80
    %v928 = vld [vmem:[%s927] sm:$0xf]
    %v930 = vsel %vm118, %v787, 0
    %932 = vmatpush.msra.mxu0 0.0
    %933 = vmatpush.msra.mxu0 0.0
    %934 = vmatpush.msra.mxu0 0.0
    %935 = vmatpush.msra.mxu0 0.0
    %936 = vmatpush.msra.mxu0 0.0
    %937 = vmatpush.msra.mxu0 0.0
    %938 = vmatpush.msra.mxu0 0.0
    %939 = vmatpush.msra.mxu0 0.0
    %940 = vmatpush.msra.mxu0 0.0
    %941 = vmatpush.msra.mxu0 0.0
    %942 = vmatpush.msra.mxu0 0.0
    %943 = vmatpush.msra.mxu0 0.0
    %944 = vmatpush.msra.mxu0 %v74
    %945 = vmatpush.msra.mxu0 %v73
    %946 = vmatpush.msra.mxu0 %v72
    %947 = vmatpush.msra.mxu0 %v71
    %948 = vmatmul.f32.gmra.mxu0 %v930
    %v949 = vpop.f32.mrf.mxu0
    %v950 = vadd.f32 0.0, %v949
    %951 = vdwg.mxu0
    %v952 = vadd.f32 %v924, %v950
    %v953 = vxor.u32 %v952, 2147483648
    %v954 = vmul.f32 %v953, 1.442695
    %v955 = vpow.pop %v954
    %v956 = vadd.f32 %v955, 1.0
    %v957 = vrcp.pop %v956
    %v958 = vmul.f32 %v956, %v957
    %v959 = vsub.f32 1.0, %v958
    %v960 = vmul.f32 %v957, %v959
    %v961 = vadd.f32 %v957, %v960
    %vm962 = vweird.f32 %v956
    %vm963 = vweird.f32 %v957
    %vm964 = vmor %vm962, %vm963
    %v965 = vsel %vm964, %v957, %v961
    %v966 = vand.u32 2147483647, %v956
    %vm967 = vcmp.eq.f32.partialorder %v966, 8.507059e+37
    %v968 = vand.u32 %v956, 2147483648
    %v969 = vor.u32 1.1754944e-38, %v968
    %v970 = vsel %vm967, %v969, %v965
    %v971 = vmul.f32 1.0, %v970
    %972 = vmatpush.msra.mxu0 0.0
    %973 = vmatpush.msra.mxu0 0.0
    %974 = vmatpush.msra.mxu0 0.0
    %975 = vmatpush.msra.mxu0 0.0
    %976 = vmatpush.msra.mxu0 0.0
    %977 = vmatpush.msra.mxu0 0.0
    %978 = vmatpush.msra.mxu0 0.0
    %979 = vmatpush.msra.mxu0 0.0
    %980 = vmatpush.msra.mxu0 0.0
    %981 = vmatpush.msra.mxu0 0.0
    %982 = vmatpush.msra.mxu0 0.0
    %983 = vmatpush.msra.mxu0 0.0
    %984 = vmatpush.msra.mxu0 %v79
    %985 = vmatpush.msra.mxu0 %v78
    %986 = vmatpush.msra.mxu0 %v77
    %987 = vmatpush.msra.mxu0 %v76
    %988 = vmatmul.f32.gmra.mxu0 %v930
    %v989 = vpop.f32.mrf.mxu0
    %v990 = vadd.f32 0.0, %v989
    %991 = vdwg.mxu0
    %v992 = vadd.f32 %v926, %v990
    %v993 = vxor.u32 %v992, 2147483648
    %v994 = vmul.f32 %v993, 1.442695
    %v995 = vpow.pop %v994
    %v996 = vadd.f32 %v995, 1.0
    %v997 = vrcp.pop %v996
    %v998 = vmul.f32 %v996, %v997
    %v999 = vsub.f32 1.0, %v998
    %v1000 = vmul.f32 %v997, %v999
    %v1001 = vadd.f32 %v997, %v1000
    %vm1002 = vweird.f32 %v996
    %vm1003 = vweird.f32 %v997
    %vm1004 = vmor %vm1002, %vm1003
    %v1005 = vsel %vm1004, %v997, %v1001
    %v1006 = vand.u32 2147483647, %v996
    %vm1007 = vcmp.eq.f32.partialorder %v1006, 8.507059e+37
    %v1008 = vand.u32 %v996, 2147483648
    %v1009 = vor.u32 1.1754944e-38, %v1008
    %v1010 = vsel %vm1007, %v1009, %v1005
    %v1011 = vmul.f32 1.0, %v1010
    %1012 = vmatpush.msra.mxu0 0.0
    %1013 = vmatpush.msra.mxu0 0.0
    %1014 = vmatpush.msra.mxu0 0.0
    %1015 = vmatpush.msra.mxu0 0.0
    %1016 = vmatpush.msra.mxu0 0.0
    %1017 = vmatpush.msra.mxu0 0.0
    %1018 = vmatpush.msra.mxu0 0.0
    %1019 = vmatpush.msra.mxu0 0.0
    %1020 = vmatpush.msra.mxu0 0.0
    %1021 = vmatpush.msra.mxu0 0.0
    %1022 = vmatpush.msra.mxu0 0.0
    %1023 = vmatpush.msra.mxu0 0.0
    %1024 = vmatpush.msra.mxu0 %v84
    %1025 = vmatpush.msra.mxu0 %v83
    %1026 = vmatpush.msra.mxu0 %v82
    %1027 = vmatpush.msra.mxu0 %v81
    %1028 = vmatmul.f32.gmra.mxu0 %v930
    %v1029 = vpop.f32.mrf.mxu0
    %v1030 = vadd.f32 %v102, %v1029
    %1031 = vdwg.mxu0
    %v1032 = vmul.f32 %v971, %v1030
    %v1033 = vadd.f32 %v928, %v1032
    %v1034 = vtanh.pop %v1033
    %v1035 = vsub.f32 1.0, %v1011
    %v1036 = vmul.f32 %v1035, %v1034
    %v1037 = vmul.f32 %v1011, %v787
    %v1038 = vadd.f32 %v1036, %v1037
    %vm1039 = vcmp.gt.s32.totalorder %v109, 3
    %v1040 = vsel %vm1039, 1, 0
    %v1041 = vcvt.s32.f32 %v1040
    %1043 = vset.pattern.permute.xlu0 0
    %1044 = vperm.xlu0 %1043, %v1041
    %v1045 = vpop.permute.xlu0 %1044
    %v1047 = vmul.f32 %v1045, %v1038
    %s1048 = scalar_lea.vmem [#allocation8], 24
    %1049 = vst.msk [vmem:[%s1048] sm:$0xf] %vm238, %v1047
    %v1050 = vsub.f32 1.0, %v1041
    %1052 = vset.pattern.permute.xlu0 0
    %1053 = vperm.xlu0 %1052, %v1050
    %v1054 = vpop.permute.xlu0 %1053
    %v1056 = vmul.f32 %v1054, %v787
    %v1057 = vadd.f32 %v1047, %v1056
    %s1058 = scalar_lea.vmem [#allocation2], 108
    %v1059 = vld [vmem:[%s1058] sm:$0xf]
    %s1060 = scalar_lea.vmem [#allocation2], 112
    %v1061 = vld [vmem:[%s1060] sm:$0xf]
    %s1062 = scalar_lea.vmem [#allocation2], 116
    %v1063 = vld [vmem:[%s1062] sm:$0xf]
    %v1065 = vsel %vm118, %v922, 0
    %1067 = vmatpush.msra.mxu0 0.0
    %1068 = vmatpush.msra.mxu0 0.0
    %1069 = vmatpush.msra.mxu0 0.0
    %1070 = vmatpush.msra.mxu0 0.0
    %1071 = vmatpush.msra.mxu0 0.0
    %1072 = vmatpush.msra.mxu0 0.0
    %1073 = vmatpush.msra.mxu0 0.0
    %1074 = vmatpush.msra.mxu0 0.0
    %1075 = vmatpush.msra.mxu0 0.0
    %1076 = vmatpush.msra.mxu0 0.0
    %1077 = vmatpush.msra.mxu0 0.0
    %1078 = vmatpush.msra.mxu0 0.0
    %1079 = vmatpush.msra.mxu0 %v89
    %1080 = vmatpush.msra.mxu0 %v88
    %1081 = vmatpush.msra.mxu0 %v87
    %1082 = vmatpush.msra.mxu0 %v86
    %1083 = vmatmul.f32.gmra.mxu0 %v1065
    %v1084 = vpop.f32.mrf.mxu0
    %v1085 = vadd.f32 0.0, %v1084
    %1086 = vdwg.mxu0
    %v1087 = vadd.f32 %v1059, %v1085
    %v1088 = vxor.u32 %v1087, 2147483648
    %v1089 = vmul.f32 %v1088, 1.442695
    %v1090 = vpow.pop %v1089
    %v1091 = vadd.f32 %v1090, 1.0
    %v1092 = vrcp.pop %v1091
    %v1093 = vmul.f32 %v1091, %v1092
    %v1094 = vsub.f32 1.0, %v1093
    %v1095 = vmul.f32 %v1092, %v1094
    %v1096 = vadd.f32 %v1092, %v1095
    %vm1097 = vweird.f32 %v1091
    %vm1098 = vweird.f32 %v1092
    %vm1099 = vmor %vm1097, %vm1098
    %v1100 = vsel %vm1099, %v1092, %v1096
    %v1101 = vand.u32 2147483647, %v1091
    %vm1102 = vcmp.eq.f32.partialorder %v1101, 8.507059e+37
    %v1103 = vand.u32 %v1091, 2147483648
    %v1104 = vor.u32 1.1754944e-38, %v1103
    %v1105 = vsel %vm1102, %v1104, %v1100
    %v1106 = vmul.f32 1.0, %v1105
    %1107 = vmatpush.msra.mxu0 0.0
    %1108 = vmatpush.msra.mxu0 0.0
    %1109 = vmatpush.msra.mxu0 0.0
    %1110 = vmatpush.msra.mxu0 0.0
    %1111 = vmatpush.msra.mxu0 0.0
    %1112 = vmatpush.msra.mxu0 0.0
    %1113 = vmatpush.msra.mxu0 0.0
    %1114 = vmatpush.msra.mxu0 0.0
    %1115 = vmatpush.msra.mxu0 0.0
    %1116 = vmatpush.msra.mxu0 0.0
    %1117 = vmatpush.msra.mxu0 0.0
    %1118 = vmatpush.msra.mxu0 0.0
    %1119 = vmatpush.msra.mxu0 %v94
    %1120 = vmatpush.msra.mxu0 %v93
    %1121 = vmatpush.msra.mxu0 %v92
    %1122 = vmatpush.msra.mxu0 %v91
    %1123 = vmatmul.f32.gmra.mxu0 %v1065
    %v1124 = vpop.f32.mrf.mxu0
    %v1125 = vadd.f32 0.0, %v1124
    %1126 = vdwg.mxu0
    %v1127 = vadd.f32 %v1061, %v1125
    %v1128 = vxor.u32 %v1127, 2147483648
    %v1129 = vmul.f32 %v1128, 1.442695
    %v1130 = vpow.pop %v1129
    %v1131 = vadd.f32 %v1130, 1.0
    %v1132 = vrcp.pop %v1131
    %v1133 = vmul.f32 %v1131, %v1132
    %v1134 = vsub.f32 1.0, %v1133
    %v1135 = vmul.f32 %v1132, %v1134
    %v1136 = vadd.f32 %v1132, %v1135
    %vm1137 = vweird.f32 %v1131
    %vm1138 = vweird.f32 %v1132
    %vm1139 = vmor %vm1137, %vm1138
    %v1140 = vsel %vm1139, %v1132, %v1136
    %v1141 = vand.u32 2147483647, %v1131
    %vm1142 = vcmp.eq.f32.partialorder %v1141, 8.507059e+37
    %v1143 = vand.u32 %v1131, 2147483648
    %v1144 = vor.u32 1.1754944e-38, %v1143
    %v1145 = vsel %vm1142, %v1144, %v1140
    %v1146 = vmul.f32 1.0, %v1145
    %1147 = vmatpush.msra.mxu0 0.0
    %1148 = vmatpush.msra.mxu0 0.0
    %1149 = vmatpush.msra.mxu0 0.0
    %1150 = vmatpush.msra.mxu0 0.0
    %1151 = vmatpush.msra.mxu0 0.0
    %1152 = vmatpush.msra.mxu0 0.0
    %1153 = vmatpush.msra.mxu0 0.0
    %1154 = vmatpush.msra.mxu0 0.0
    %1155 = vmatpush.msra.mxu0 0.0
    %1156 = vmatpush.msra.mxu0 0.0
    %1157 = vmatpush.msra.mxu0 0.0
    %1158 = vmatpush.msra.mxu0 0.0
    %1159 = vmatpush.msra.mxu0 %v99
    %1160 = vmatpush.msra.mxu0 %v98
    %1161 = vmatpush.msra.mxu0 %v97
    %1162 = vmatpush.msra.mxu0 %v96
    %1163 = vmatmul.f32.gmra.mxu0 %v1065
    %v1164 = vpop.f32.mrf.mxu0
    %v1165 = vadd.f32 %v107, %v1164
    %1166 = vdwg.mxu0
    %v1167 = vmul.f32 %v1106, %v1165
    %v1168 = vadd.f32 %v1063, %v1167
    %v1169 = vtanh.pop %v1168
    %v1170 = vsub.f32 1.0, %v1146
    %v1171 = vmul.f32 %v1170, %v1169
    %v1172 = vmul.f32 %v1146, %v922
    %v1173 = vadd.f32 %v1171, %v1172
    %vm1174 = vcmp.gt.s32.totalorder %v109, 4
    %v1175 = vsel %vm1174, 1, 0
    %v1176 = vcvt.s32.f32 %v1175
    %1178 = vset.pattern.permute.xlu0 0
    %1179 = vperm.xlu0 %1178, %v1176
    %v1180 = vpop.permute.xlu0 %1179
    %v1182 = vmul.f32 %v1180, %v1173
    %s1183 = scalar_lea.vmem [#allocation8], 36
    %1184 = vst.msk [vmem:[%s1183] sm:$0xf] %vm238, %v1182
    %v1185 = vsub.f32 1.0, %v1176
    %1187 = vset.pattern.permute.xlu0 0
    %1188 = vperm.xlu0 %1187, %v1185
    %v1189 = vpop.permute.xlu0 %1188
    %v1191 = vmul.f32 %v1189, %v922
    %v1192 = vadd.f32 %v1182, %v1191
    %s1193 = scalar_lea.vmem [#allocation2], 96
    %v1194 = vld [vmem:[%s1193] sm:$0xf]
    %s1195 = scalar_lea.vmem [#allocation2], 100
    %v1196 = vld [vmem:[%s1195] sm:$0xf]
    %s1197 = scalar_lea.vmem [#allocation2], 104
    %v1198 = vld [vmem:[%s1197] sm:$0xf]
    %v1200 = vsel %vm118, %v1057, 0
    %1202 = vmatpush.msra.mxu0 0.0
    %1203 = vmatpush.msra.mxu0 0.0
    %1204 = vmatpush.msra.mxu0 0.0
    %1205 = vmatpush.msra.mxu0 0.0
    %1206 = vmatpush.msra.mxu0 0.0
    %1207 = vmatpush.msra.mxu0 0.0
    %1208 = vmatpush.msra.mxu0 0.0
    %1209 = vmatpush.msra.mxu0 0.0
    %1210 = vmatpush.msra.mxu0 0.0
    %1211 = vmatpush.msra.mxu0 0.0
    %1212 = vmatpush.msra.mxu0 0.0
    %1213 = vmatpush.msra.mxu0 0.0
    %1214 = vmatpush.msra.mxu0 %v74
    %1215 = vmatpush.msra.mxu0 %v73
    %1216 = vmatpush.msra.mxu0 %v72
    %1217 = vmatpush.msra.mxu0 %v71
    %1218 = vmatmul.f32.gmra.mxu0 %v1200
    %v1219 = vpop.f32.mrf.mxu0
    %v1220 = vadd.f32 0.0, %v1219
    %1221 = vdwg.mxu0
    %v1222 = vadd.f32 %v1194, %v1220
    %v1223 = vxor.u32 %v1222, 2147483648
    %v1224 = vmul.f32 %v1223, 1.442695
    %v1225 = vpow.pop %v1224
    %v1226 = vadd.f32 %v1225, 1.0
    %v1227 = vrcp.pop %v1226
    %v1228 = vmul.f32 %v1226, %v1227
    %v1229 = vsub.f32 1.0, %v1228
    %v1230 = vmul.f32 %v1227, %v1229
    %v1231 = vadd.f32 %v1227, %v1230
    %vm1232 = vweird.f32 %v1226
    %vm1233 = vweird.f32 %v1227
    %vm1234 = vmor %vm1232, %vm1233
    %v1235 = vsel %vm1234, %v1227, %v1231
    %v1236 = vand.u32 2147483647, %v1226
    %vm1237 = vcmp.eq.f32.partialorder %v1236, 8.507059e+37
    %v1238 = vand.u32 %v1226, 2147483648
    %v1239 = vor.u32 1.1754944e-38, %v1238
    %v1240 = vsel %vm1237, %v1239, %v1235
    %v1241 = vmul.f32 1.0, %v1240
    %1242 = vmatpush.msra.mxu0 0.0
    %1243 = vmatpush.msra.mxu0 0.0
    %1244 = vmatpush.msra.mxu0 0.0
    %1245 = vmatpush.msra.mxu0 0.0
    %1246 = vmatpush.msra.mxu0 0.0
    %1247 = vmatpush.msra.mxu0 0.0
    %1248 = vmatpush.msra.mxu0 0.0
    %1249 = vmatpush.msra.mxu0 0.0
    %1250 = vmatpush.msra.mxu0 0.0
    %1251 = vmatpush.msra.mxu0 0.0
    %1252 = vmatpush.msra.mxu0 0.0
    %1253 = vmatpush.msra.mxu0 0.0
    %1254 = vmatpush.msra.mxu0 %v79
    %1255 = vmatpush.msra.mxu0 %v78
    %1256 = vmatpush.msra.mxu0 %v77
    %1257 = vmatpush.msra.mxu0 %v76
    %1258 = vmatmul.f32.gmra.mxu0 %v1200
    %v1259 = vpop.f32.mrf.mxu0
    %v1260 = vadd.f32 0.0, %v1259
    %1261 = vdwg.mxu0
    %v1262 = vadd.f32 %v1196, %v1260
    %v1263 = vxor.u32 %v1262, 2147483648
    %v1264 = vmul.f32 %v1263, 1.442695
    %v1265 = vpow.pop %v1264
    %v1266 = vadd.f32 %v1265, 1.0
    %v1267 = vrcp.pop %v1266
    %v1268 = vmul.f32 %v1266, %v1267
    %v1269 = vsub.f32 1.0, %v1268
    %v1270 = vmul.f32 %v1267, %v1269
    %v1271 = vadd.f32 %v1267, %v1270
    %vm1272 = vweird.f32 %v1266
    %vm1273 = vweird.f32 %v1267
    %vm1274 = vmor %vm1272, %vm1273
    %v1275 = vsel %vm1274, %v1267, %v1271
    %v1276 = vand.u32 2147483647, %v1266
    %vm1277 = vcmp.eq.f32.partialorder %v1276, 8.507059e+37
    %v1278 = vand.u32 %v1266, 2147483648
    %v1279 = vor.u32 1.1754944e-38, %v1278
    %v1280 = vsel %vm1277, %v1279, %v1275
    %v1281 = vmul.f32 1.0, %v1280
    %1282 = vmatpush.msra.mxu0 0.0
    %1283 = vmatpush.msra.mxu0 0.0
    %1284 = vmatpush.msra.mxu0 0.0
    %1285 = vmatpush.msra.mxu0 0.0
    %1286 = vmatpush.msra.mxu0 0.0
    %1287 = vmatpush.msra.mxu0 0.0
    %1288 = vmatpush.msra.mxu0 0.0
    %1289 = vmatpush.msra.mxu0 0.0
    %1290 = vmatpush.msra.mxu0 0.0
    %1291 = vmatpush.msra.mxu0 0.0
    %1292 = vmatpush.msra.mxu0 0.0
    %1293 = vmatpush.msra.mxu0 0.0
    %1294 = vmatpush.msra.mxu0 %v84
    %1295 = vmatpush.msra.mxu0 %v83
    %1296 = vmatpush.msra.mxu0 %v82
    %1297 = vmatpush.msra.mxu0 %v81
    %1298 = vmatmul.f32.gmra.mxu0 %v1200
    %v1299 = vpop.f32.mrf.mxu0
    %v1300 = vadd.f32 %v102, %v1299
    %1301 = vdwg.mxu0
    %v1302 = vmul.f32 %v1241, %v1300
    %v1303 = vadd.f32 %v1198, %v1302
    %v1304 = vtanh.pop %v1303
    %v1305 = vsub.f32 1.0, %v1281
    %v1306 = vmul.f32 %v1305, %v1304
    %v1307 = vmul.f32 %v1281, %v1057
    %v1308 = vadd.f32 %v1306, %v1307
    %v1309 = vmul.f32 %v1180, %v1308
    %s1310 = scalar_lea.vmem [#allocation8], 32
    %1311 = vst.msk [vmem:[%s1310] sm:$0xf] %vm238, %v1309
    %v1312 = vmul.f32 %v1189, %v1057
    %v1313 = vadd.f32 %v1309, %v1312
    %s1314 = scalar_lea.vmem [#allocation2], 84
    %v1315 = vld [vmem:[%s1314] sm:$0xf]
    %s1316 = scalar_lea.vmem [#allocation2], 88
    %v1317 = vld [vmem:[%s1316] sm:$0xf]
    %s1318 = scalar_lea.vmem [#allocation2], 92
    %v1319 = vld [vmem:[%s1318] sm:$0xf]
    %v1321 = vsel %vm118, %v1192, 0
    %1323 = vmatpush.msra.mxu0 0.0
    %1324 = vmatpush.msra.mxu0 0.0
    %1325 = vmatpush.msra.mxu0 0.0
    %1326 = vmatpush.msra.mxu0 0.0
    %1327 = vmatpush.msra.mxu0 0.0
    %1328 = vmatpush.msra.mxu0 0.0
    %1329 = vmatpush.msra.mxu0 0.0
    %1330 = vmatpush.msra.mxu0 0.0
    %1331 = vmatpush.msra.mxu0 0.0
    %1332 = vmatpush.msra.mxu0 0.0
    %1333 = vmatpush.msra.mxu0 0.0
    %1334 = vmatpush.msra.mxu0 0.0
    %1335 = vmatpush.msra.mxu0 %v89
    %1336 = vmatpush.msra.mxu0 %v88
    %1337 = vmatpush.msra.mxu0 %v87
    %1338 = vmatpush.msra.mxu0 %v86
    %1339 = vmatmul.f32.gmra.mxu0 %v1321
    %v1340 = vpop.f32.mrf.mxu0
    %v1341 = vadd.f32 0.0, %v1340
    %1342 = vdwg.mxu0
    %v1343 = vadd.f32 %v1315, %v1341
    %v1344 = vxor.u32 %v1343, 2147483648
    %v1345 = vmul.f32 %v1344, 1.442695
    %v1346 = vpow.pop %v1345
    %v1347 = vadd.f32 %v1346, 1.0
    %v1348 = vrcp.pop %v1347
    %v1349 = vmul.f32 %v1347, %v1348
    %v1350 = vsub.f32 1.0, %v1349
    %v1351 = vmul.f32 %v1348, %v1350
    %v1352 = vadd.f32 %v1348, %v1351
    %vm1353 = vweird.f32 %v1347
    %vm1354 = vweird.f32 %v1348
    %vm1355 = vmor %vm1353, %vm1354
    %v1356 = vsel %vm1355, %v1348, %v1352
    %v1357 = vand.u32 2147483647, %v1347
    %vm1358 = vcmp.eq.f32.partialorder %v1357, 8.507059e+37
    %v1359 = vand.u32 %v1347, 2147483648
    %v1360 = vor.u32 1.1754944e-38, %v1359
    %v1361 = vsel %vm1358, %v1360, %v1356
    %v1362 = vmul.f32 1.0, %v1361
    %1363 = vmatpush.msra.mxu0 0.0
    %1364 = vmatpush.msra.mxu0 0.0
    %1365 = vmatpush.msra.mxu0 0.0
    %1366 = vmatpush.msra.mxu0 0.0
    %1367 = vmatpush.msra.mxu0 0.0
    %1368 = vmatpush.msra.mxu0 0.0
    %1369 = vmatpush.msra.mxu0 0.0
    %1370 = vmatpush.msra.mxu0 0.0
    %1371 = vmatpush.msra.mxu0 0.0
    %1372 = vmatpush.msra.mxu0 0.0
    %1373 = vmatpush.msra.mxu0 0.0
    %1374 = vmatpush.msra.mxu0 0.0
    %1375 = vmatpush.msra.mxu0 %v94
    %1376 = vmatpush.msra.mxu0 %v93
    %1377 = vmatpush.msra.mxu0 %v92
    %1378 = vmatpush.msra.mxu0 %v91
    %1379 = vmatmul.f32.gmra.mxu0 %v1321
    %v1380 = vpop.f32.mrf.mxu0
    %v1381 = vadd.f32 0.0, %v1380
    %1382 = vdwg.mxu0
    %v1383 = vadd.f32 %v1317, %v1381
    %v1384 = vxor.u32 %v1383, 2147483648
    %v1385 = vmul.f32 %v1384, 1.442695
    %v1386 = vpow.pop %v1385
    %v1387 = vadd.f32 %v1386, 1.0
    %v1388 = vrcp.pop %v1387
    %v1389 = vmul.f32 %v1387, %v1388
    %v1390 = vsub.f32 1.0, %v1389
    %v1391 = vmul.f32 %v1388, %v1390
    %v1392 = vadd.f32 %v1388, %v1391
    %vm1393 = vweird.f32 %v1387
    %vm1394 = vweird.f32 %v1388
    %vm1395 = vmor %vm1393, %vm1394
    %v1396 = vsel %vm1395, %v1388, %v1392
    %v1397 = vand.u32 2147483647, %v1387
    %vm1398 = vcmp.eq.f32.partialorder %v1397, 8.507059e+37
    %v1399 = vand.u32 %v1387, 2147483648
    %v1400 = vor.u32 1.1754944e-38, %v1399
    %v1401 = vsel %vm1398, %v1400, %v1396
    %v1402 = vmul.f32 1.0, %v1401
    %1403 = vmatpush.msra.mxu0 0.0
    %1404 = vmatpush.msra.mxu0 0.0
    %1405 = vmatpush.msra.mxu0 0.0
    %1406 = vmatpush.msra.mxu0 0.0
    %1407 = vmatpush.msra.mxu0 0.0
    %1408 = vmatpush.msra.mxu0 0.0
    %1409 = vmatpush.msra.mxu0 0.0
    %1410 = vmatpush.msra.mxu0 0.0
    %1411 = vmatpush.msra.mxu0 0.0
    %1412 = vmatpush.msra.mxu0 0.0
    %1413 = vmatpush.msra.mxu0 0.0
    %1414 = vmatpush.msra.mxu0 0.0
    %1415 = vmatpush.msra.mxu0 %v99
    %1416 = vmatpush.msra.mxu0 %v98
    %1417 = vmatpush.msra.mxu0 %v97
    %1418 = vmatpush.msra.mxu0 %v96
    %1419 = vmatmul.f32.gmra.mxu0 %v1321
    %v1420 = vpop.f32.mrf.mxu0
    %v1421 = vadd.f32 %v107, %v1420
    %1422 = vdwg.mxu0
    %v1423 = vmul.f32 %v1362, %v1421
    %v1424 = vadd.f32 %v1319, %v1423
    %v1425 = vtanh.pop %v1424
    %v1426 = vsub.f32 1.0, %v1402
    %v1427 = vmul.f32 %v1426, %v1425
    %v1428 = vmul.f32 %v1402, %v1192
    %v1429 = vadd.f32 %v1427, %v1428
    %v1430 = vmul.f32 %v1045, %v1429
    %s1431 = scalar_lea.vmem [#allocation8], 28
    %1432 = vst.msk [vmem:[%s1431] sm:$0xf] %vm238, %v1430
    %v1433 = vmul.f32 %v1054, %v1192
    %v1434 = vadd.f32 %v1430, %v1433
    %s1435 = scalar_lea.vmem [#allocation2], 120
    %v1436 = vld [vmem:[%s1435] sm:$0xf]
    %s1437 = scalar_lea.vmem [#allocation2], 124
    %v1438 = vld [vmem:[%s1437] sm:$0xf]
    %s1439 = scalar_lea.vmem [#allocation2], 128
    %v1440 = vld [vmem:[%s1439] sm:$0xf]
    %v1442 = vsel %vm118, %v1313, 0
    %1444 = vmatpush.msra.mxu0 0.0
    %1445 = vmatpush.msra.mxu0 0.0
    %1446 = vmatpush.msra.mxu0 0.0
    %1447 = vmatpush.msra.mxu0 0.0
    %1448 = vmatpush.msra.mxu0 0.0
    %1449 = vmatpush.msra.mxu0 0.0
    %1450 = vmatpush.msra.mxu0 0.0
    %1451 = vmatpush.msra.mxu0 0.0
    %1452 = vmatpush.msra.mxu0 0.0
    %1453 = vmatpush.msra.mxu0 0.0
    %1454 = vmatpush.msra.mxu0 0.0
    %1455 = vmatpush.msra.mxu0 0.0
    %1456 = vmatpush.msra.mxu0 %v74
    %1457 = vmatpush.msra.mxu0 %v73
    %1458 = vmatpush.msra.mxu0 %v72
    %1459 = vmatpush.msra.mxu0 %v71
    %1460 = vmatmul.f32.gmra.mxu0 %v1442
    %v1461 = vpop.f32.mrf.mxu0
    %v1462 = vadd.f32 0.0, %v1461
    %1463 = vdwg.mxu0
    %v1464 = vadd.f32 %v1436, %v1462
    %v1465 = vxor.u32 %v1464, 2147483648
    %v1466 = vmul.f32 %v1465, 1.442695
    %v1467 = vpow.pop %v1466
    %v1468 = vadd.f32 %v1467, 1.0
    %v1469 = vrcp.pop %v1468
    %v1470 = vmul.f32 %v1468, %v1469
    %v1471 = vsub.f32 1.0, %v1470
    %v1472 = vmul.f32 %v1469, %v1471
    %v1473 = vadd.f32 %v1469, %v1472
    %vm1474 = vweird.f32 %v1468
    %vm1475 = vweird.f32 %v1469
    %vm1476 = vmor %vm1474, %vm1475
    %v1477 = vsel %vm1476, %v1469, %v1473
    %v1478 = vand.u32 2147483647, %v1468
    %vm1479 = vcmp.eq.f32.partialorder %v1478, 8.507059e+37
    %v1480 = vand.u32 %v1468, 2147483648
    %v1481 = vor.u32 1.1754944e-38, %v1480
    %v1482 = vsel %vm1479, %v1481, %v1477
    %v1483 = vmul.f32 1.0, %v1482
    %1484 = vmatpush.msra.mxu0 0.0
    %1485 = vmatpush.msra.mxu0 0.0
    %1486 = vmatpush.msra.mxu0 0.0
    %1487 = vmatpush.msra.mxu0 0.0
    %1488 = vmatpush.msra.mxu0 0.0
    %1489 = vmatpush.msra.mxu0 0.0
    %1490 = vmatpush.msra.mxu0 0.0
    %1491 = vmatpush.msra.mxu0 0.0
    %1492 = vmatpush.msra.mxu0 0.0
    %1493 = vmatpush.msra.mxu0 0.0
    %1494 = vmatpush.msra.mxu0 0.0
    %1495 = vmatpush.msra.mxu0 0.0
    %1496 = vmatpush.msra.mxu0 %v79
    %1497 = vmatpush.msra.mxu0 %v78
    %1498 = vmatpush.msra.mxu0 %v77
    %1499 = vmatpush.msra.mxu0 %v76
    %1500 = vmatmul.f32.gmra.mxu0 %v1442
    %v1501 = vpop.f32.mrf.mxu0
    %v1502 = vadd.f32 0.0, %v1501
    %1503 = vdwg.mxu0
    %v1504 = vadd.f32 %v1438, %v1502
    %v1505 = vxor.u32 %v1504, 2147483648
    %v1506 = vmul.f32 %v1505, 1.442695
    %v1507 = vpow.pop %v1506
    %v1508 = vadd.f32 %v1507, 1.0
    %v1509 = vrcp.pop %v1508
    %v1510 = vmul.f32 %v1508, %v1509
    %v1511 = vsub.f32 1.0, %v1510
    %v1512 = vmul.f32 %v1509, %v1511
    %v1513 = vadd.f32 %v1509, %v1512
    %vm1514 = vweird.f32 %v1508
    %vm1515 = vweird.f32 %v1509
    %vm1516 = vmor %vm1514, %vm1515
    %v1517 = vsel %vm1516, %v1509, %v1513
    %v1518 = vand.u32 2147483647, %v1508
    %vm1519 = vcmp.eq.f32.partialorder %v1518, 8.507059e+37
    %v1520 = vand.u32 %v1508, 2147483648
    %v1521 = vor.u32 1.1754944e-38, %v1520
    %v1522 = vsel %vm1519, %v1521, %v1517
    %v1523 = vmul.f32 1.0, %v1522
    %1524 = vmatpush.msra.mxu0 0.0
    %1525 = vmatpush.msra.mxu0 0.0
    %1526 = vmatpush.msra.mxu0 0.0
    %1527 = vmatpush.msra.mxu0 0.0
    %1528 = vmatpush.msra.mxu0 0.0
    %1529 = vmatpush.msra.mxu0 0.0
    %1530 = vmatpush.msra.mxu0 0.0
    %1531 = vmatpush.msra.mxu0 0.0
    %1532 = vmatpush.msra.mxu0 0.0
    %1533 = vmatpush.msra.mxu0 0.0
    %1534 = vmatpush.msra.mxu0 0.0
    %1535 = vmatpush.msra.mxu0 0.0
    %1536 = vmatpush.msra.mxu0 %v84
    %1537 = vmatpush.msra.mxu0 %v83
    %1538 = vmatpush.msra.mxu0 %v82
    %1539 = vmatpush.msra.mxu0 %v81
    %1540 = vmatmul.f32.gmra.mxu0 %v1442
    %v1541 = vpop.f32.mrf.mxu0
    %v1542 = vadd.f32 %v102, %v1541
    %1543 = vdwg.mxu0
    %v1544 = vmul.f32 %v1483, %v1542
    %v1545 = vadd.f32 %v1440, %v1544
    %v1546 = vtanh.pop %v1545
    %v1547 = vsub.f32 1.0, %v1523
    %v1548 = vmul.f32 %v1547, %v1546
    %v1549 = vmul.f32 %v1523, %v1313
    %v1550 = vadd.f32 %v1548, %v1549
    %v1551 = vmul.f32 %v910, %v1550
    %s1552 = scalar_lea.vmem [#allocation8], 40
    %1553 = vst.msk [vmem:[%s1552] sm:$0xf] %vm238, %v1551
    %v1554 = vmul.f32 %v919, %v1313
    %v1555 = vadd.f32 %v1551, %v1554
    %s1556 = scalar_lea.vmem [#allocation2], 60
    %v1557 = vld [vmem:[%s1556] sm:$0xf]
    %s1558 = scalar_lea.vmem [#allocation2], 64
    %v1559 = vld [vmem:[%s1558] sm:$0xf]
    %s1560 = scalar_lea.vmem [#allocation2], 68
    %v1561 = vld [vmem:[%s1560] sm:$0xf]
    %v1563 = vsel %vm118, %v1434, 0
    %1565 = vmatpush.msra.mxu0 0.0
    %1566 = vmatpush.msra.mxu0 0.0
    %1567 = vmatpush.msra.mxu0 0.0
    %1568 = vmatpush.msra.mxu0 0.0
    %1569 = vmatpush.msra.mxu0 0.0
    %1570 = vmatpush.msra.mxu0 0.0
    %1571 = vmatpush.msra.mxu0 0.0
    %1572 = vmatpush.msra.mxu0 0.0
    %1573 = vmatpush.msra.mxu0 0.0
    %1574 = vmatpush.msra.mxu0 0.0
    %1575 = vmatpush.msra.mxu0 0.0
    %1576 = vmatpush.msra.mxu0 0.0
    %1577 = vmatpush.msra.mxu0 %v89
    %1578 = vmatpush.msra.mxu0 %v88
    %1579 = vmatpush.msra.mxu0 %v87
    %1580 = vmatpush.msra.mxu0 %v86
    %1581 = vmatmul.f32.gmra.mxu0 %v1563
    %v1582 = vpop.f32.mrf.mxu0
    %v1583 = vadd.f32 0.0, %v1582
    %1584 = vdwg.mxu0
    %v1585 = vadd.f32 %v1557, %v1583
    %v1586 = vxor.u32 %v1585, 2147483648
    %v1587 = vmul.f32 %v1586, 1.442695
    %v1588 = vpow.pop %v1587
    %v1589 = vadd.f32 %v1588, 1.0
    %v1590 = vrcp.pop %v1589
    %v1591 = vmul.f32 %v1589, %v1590
    %v1592 = vsub.f32 1.0, %v1591
    %v1593 = vmul.f32 %v1590, %v1592
    %v1594 = vadd.f32 %v1590, %v1593
    %vm1595 = vweird.f32 %v1589
    %vm1596 = vweird.f32 %v1590
    %vm1597 = vmor %vm1595, %vm1596
    %v1598 = vsel %vm1597, %v1590, %v1594
    %v1599 = vand.u32 2147483647, %v1589
    %vm1600 = vcmp.eq.f32.partialorder %v1599, 8.507059e+37
    %v1601 = vand.u32 %v1589, 2147483648
    %v1602 = vor.u32 1.1754944e-38, %v1601
    %v1603 = vsel %vm1600, %v1602, %v1598
    %v1604 = vmul.f32 1.0, %v1603
    %1605 = vmatpush.msra.mxu0 0.0
    %1606 = vmatpush.msra.mxu0 0.0
    %1607 = vmatpush.msra.mxu0 0.0
    %1608 = vmatpush.msra.mxu0 0.0
    %1609 = vmatpush.msra.mxu0 0.0
    %1610 = vmatpush.msra.mxu0 0.0
    %1611 = vmatpush.msra.mxu0 0.0
    %1612 = vmatpush.msra.mxu0 0.0
    %1613 = vmatpush.msra.mxu0 0.0
    %1614 = vmatpush.msra.mxu0 0.0
    %1615 = vmatpush.msra.mxu0 0.0
    %1616 = vmatpush.msra.mxu0 0.0
    %1617 = vmatpush.msra.mxu0 %v94
    %1618 = vmatpush.msra.mxu0 %v93
    %1619 = vmatpush.msra.mxu0 %v92
    %1620 = vmatpush.msra.mxu0 %v91
    %1621 = vmatmul.f32.gmra.mxu0 %v1563
    %v1622 = vpop.f32.mrf.mxu0
    %v1623 = vadd.f32 0.0, %v1622
    %1624 = vdwg.mxu0
    %v1625 = vadd.f32 %v1559, %v1623
    %v1626 = vxor.u32 %v1625, 2147483648
    %v1627 = vmul.f32 %v1626, 1.442695
    %v1628 = vpow.pop %v1627
    %v1629 = vadd.f32 %v1628, 1.0
    %v1630 = vrcp.pop %v1629
    %v1631 = vmul.f32 %v1629, %v1630
    %v1632 = vsub.f32 1.0, %v1631
    %v1633 = vmul.f32 %v1630, %v1632
    %v1634 = vadd.f32 %v1630, %v1633
    %vm1635 = vweird.f32 %v1629
    %vm1636 = vweird.f32 %v1630
    %vm1637 = vmor %vm1635, %vm1636
    %v1638 = vsel %vm1637, %v1630, %v1634
    %v1639 = vand.u32 2147483647, %v1629
    %vm1640 = vcmp.eq.f32.partialorder %v1639, 8.507059e+37
    %v1641 = vand.u32 %v1629, 2147483648
    %v1642 = vor.u32 1.1754944e-38, %v1641
    %v1643 = vsel %vm1640, %v1642, %v1638
    %v1644 = vmul.f32 1.0, %v1643
    %1645 = vmatpush.msra.mxu0 0.0
    %1646 = vmatpush.msra.mxu0 0.0
    %1647 = vmatpush.msra.mxu0 0.0
    %1648 = vmatpush.msra.mxu0 0.0
    %1649 = vmatpush.msra.mxu0 0.0
    %1650 = vmatpush.msra.mxu0 0.0
    %1651 = vmatpush.msra.mxu0 0.0
    %1652 = vmatpush.msra.mxu0 0.0
    %1653 = vmatpush.msra.mxu0 0.0
    %1654 = vmatpush.msra.mxu0 0.0
    %1655 = vmatpush.msra.mxu0 0.0
    %1656 = vmatpush.msra.mxu0 0.0
    %1657 = vmatpush.msra.mxu0 %v99
    %1658 = vmatpush.msra.mxu0 %v98
    %1659 = vmatpush.msra.mxu0 %v97
    %1660 = vmatpush.msra.mxu0 %v96
    %1661 = vmatmul.f32.gmra.mxu0 %v1563
    %v1662 = vpop.f32.mrf.mxu0
    %v1663 = vadd.f32 %v107, %v1662
    %1664 = vdwg.mxu0
    %v1665 = vmul.f32 %v1604, %v1663
    %v1666 = vadd.f32 %v1561, %v1665
    %v1667 = vtanh.pop %v1666
    %v1668 = vsub.f32 1.0, %v1644
    %v1669 = vmul.f32 %v1668, %v1667
    %v1670 = vmul.f32 %v1644, %v1434
    %v1671 = vadd.f32 %v1669, %v1670
    %v1672 = vmul.f32 %v775, %v1671
    %s1673 = scalar_lea.vmem [#allocation8], 20
    %1674 = vst.msk [vmem:[%s1673] sm:$0xf] %vm238, %v1672
    %v1675 = vmul.f32 %v784, %v1434
    %v1676 = vadd.f32 %v1672, %v1675
    %s1677 = scalar_lea.vmem [#allocation2], 144
    %v1678 = vld [vmem:[%s1677] sm:$0xf]
    %s1679 = scalar_lea.vmem [#allocation2], 148
    %v1680 = vld [vmem:[%s1679] sm:$0xf]
    %s1681 = scalar_lea.vmem [#allocation2], 152
    %v1682 = vld [vmem:[%s1681] sm:$0xf]
    %v1684 = vsel %vm118, %v1555, 0
    %1686 = vmatpush.msra.mxu0 0.0
    %1687 = vmatpush.msra.mxu0 0.0
    %1688 = vmatpush.msra.mxu0 0.0
    %1689 = vmatpush.msra.mxu0 0.0
    %1690 = vmatpush.msra.mxu0 0.0
    %1691 = vmatpush.msra.mxu0 0.0
    %1692 = vmatpush.msra.mxu0 0.0
    %1693 = vmatpush.msra.mxu0 0.0
    %1694 = vmatpush.msra.mxu0 0.0
    %1695 = vmatpush.msra.mxu0 0.0
    %1696 = vmatpush.msra.mxu0 0.0
    %1697 = vmatpush.msra.mxu0 0.0
    %1698 = vmatpush.msra.mxu0 %v74
    %1699 = vmatpush.msra.mxu0 %v73
    %1700 = vmatpush.msra.mxu0 %v72
    %1701 = vmatpush.msra.mxu0 %v71
    %1702 = vmatmul.f32.gmra.mxu0 %v1684
    %v1703 = vpop.f32.mrf.mxu0
    %v1704 = vadd.f32 0.0, %v1703
    %1705 = vdwg.mxu0
    %v1706 = vadd.f32 %v1678, %v1704
    %v1707 = vxor.u32 %v1706, 2147483648
    %v1708 = vmul.f32 %v1707, 1.442695
    %v1709 = vpow.pop %v1708
    %v1710 = vadd.f32 %v1709, 1.0
    %v1711 = vrcp.pop %v1710
    %v1712 = vmul.f32 %v1710, %v1711
    %v1713 = vsub.f32 1.0, %v1712
    %v1714 = vmul.f32 %v1711, %v1713
    %v1715 = vadd.f32 %v1711, %v1714
    %vm1716 = vweird.f32 %v1710
    %vm1717 = vweird.f32 %v1711
    %vm1718 = vmor %vm1716, %vm1717
    %v1719 = vsel %vm1718, %v1711, %v1715
    %v1720 = vand.u32 2147483647, %v1710
    %vm1721 = vcmp.eq.f32.partialorder %v1720, 8.507059e+37
    %v1722 = vand.u32 %v1710, 2147483648
    %v1723 = vor.u32 1.1754944e-38, %v1722
    %v1724 = vsel %vm1721, %v1723, %v1719
    %v1725 = vmul.f32 1.0, %v1724
    %1726 = vmatpush.msra.mxu0 0.0
    %1727 = vmatpush.msra.mxu0 0.0
    %1728 = vmatpush.msra.mxu0 0.0
    %1729 = vmatpush.msra.mxu0 0.0
    %1730 = vmatpush.msra.mxu0 0.0
    %1731 = vmatpush.msra.mxu0 0.0
    %1732 = vmatpush.msra.mxu0 0.0
    %1733 = vmatpush.msra.mxu0 0.0
    %1734 = vmatpush.msra.mxu0 0.0
    %1735 = vmatpush.msra.mxu0 0.0
    %1736 = vmatpush.msra.mxu0 0.0
    %1737 = vmatpush.msra.mxu0 0.0
    %1738 = vmatpush.msra.mxu0 %v79
    %1739 = vmatpush.msra.mxu0 %v78
    %1740 = vmatpush.msra.mxu0 %v77
    %1741 = vmatpush.msra.mxu0 %v76
    %1742 = vmatmul.f32.gmra.mxu0 %v1684
    %v1743 = vpop.f32.mrf.mxu0
    %v1744 = vadd.f32 0.0, %v1743
    %1745 = vdwg.mxu0
    %v1746 = vadd.f32 %v1680, %v1744
    %v1747 = vxor.u32 %v1746, 2147483648
    %v1748 = vmul.f32 %v1747, 1.442695
    %v1749 = vpow.pop %v1748
    %v1750 = vadd.f32 %v1749, 1.0
    %v1751 = vrcp.pop %v1750
    %v1752 = vmul.f32 %v1750, %v1751
    %v1753 = vsub.f32 1.0, %v1752
    %v1754 = vmul.f32 %v1751, %v1753
    %v1755 = vadd.f32 %v1751, %v1754
    %vm1756 = vweird.f32 %v1750
    %vm1757 = vweird.f32 %v1751
    %vm1758 = vmor %vm1756, %vm1757
    %v1759 = vsel %vm1758, %v1751, %v1755
    %v1760 = vand.u32 2147483647, %v1750
    %vm1761 = vcmp.eq.f32.partialorder %v1760, 8.507059e+37
    %v1762 = vand.u32 %v1750, 2147483648
    %v1763 = vor.u32 1.1754944e-38, %v1762
    %v1764 = vsel %vm1761, %v1763, %v1759
    %v1765 = vmul.f32 1.0, %v1764
    %1766 = vmatpush.msra.mxu0 0.0
    %1767 = vmatpush.msra.mxu0 0.0
    %1768 = vmatpush.msra.mxu0 0.0
    %1769 = vmatpush.msra.mxu0 0.0
    %1770 = vmatpush.msra.mxu0 0.0
    %1771 = vmatpush.msra.mxu0 0.0
    %1772 = vmatpush.msra.mxu0 0.0
    %1773 = vmatpush.msra.mxu0 0.0
    %1774 = vmatpush.msra.mxu0 0.0
    %1775 = vmatpush.msra.mxu0 0.0
    %1776 = vmatpush.msra.mxu0 0.0
    %1777 = vmatpush.msra.mxu0 0.0
    %1778 = vmatpush.msra.mxu0 %v84
    %1779 = vmatpush.msra.mxu0 %v83
    %1780 = vmatpush.msra.mxu0 %v82
    %1781 = vmatpush.msra.mxu0 %v81
    %1782 = vmatmul.f32.gmra.mxu0 %v1684
    %v1783 = vpop.f32.mrf.mxu0
    %v1784 = vadd.f32 %v102, %v1783
    %1785 = vdwg.mxu0
    %v1786 = vmul.f32 %v1725, %v1784
    %v1787 = vadd.f32 %v1682, %v1786
    %v1788 = vtanh.pop %v1787
    %v1789 = vsub.f32 1.0, %v1765
    %v1790 = vmul.f32 %v1789, %v1788
    %v1791 = vmul.f32 %v1765, %v1555
    %v1792 = vadd.f32 %v1790, %v1791
    %v1793 = vmul.f32 %v640, %v1792
    %s1794 = scalar_lea.vmem [#allocation8], 48
    %1795 = vst.msk [vmem:[%s1794] sm:$0xf] %vm238, %v1793
    %v1796 = vmul.f32 %v649, %v1555
    %v1797 = vadd.f32 %v1793, %v1796
    %s1798 = scalar_lea.vmem [#allocation2], 36
    %v1799 = vld [vmem:[%s1798] sm:$0xf]
    %s1800 = scalar_lea.vmem [#allocation2], 40
    %v1801 = vld [vmem:[%s1800] sm:$0xf]
    %s1802 = scalar_lea.vmem [#allocation2], 44
    %v1803 = vld [vmem:[%s1802] sm:$0xf]
    %v1805 = vsel %vm118, %v1676, 0
    %1807 = vmatpush.msra.mxu0 0.0
    %1808 = vmatpush.msra.mxu0 0.0
    %1809 = vmatpush.msra.mxu0 0.0
    %1810 = vmatpush.msra.mxu0 0.0
    %1811 = vmatpush.msra.mxu0 0.0
    %1812 = vmatpush.msra.mxu0 0.0
    %1813 = vmatpush.msra.mxu0 0.0
    %1814 = vmatpush.msra.mxu0 0.0
    %1815 = vmatpush.msra.mxu0 0.0
    %1816 = vmatpush.msra.mxu0 0.0
    %1817 = vmatpush.msra.mxu0 0.0
    %1818 = vmatpush.msra.mxu0 0.0
    %1819 = vmatpush.msra.mxu0 %v89
    %1820 = vmatpush.msra.mxu0 %v88
    %1821 = vmatpush.msra.mxu0 %v87
    %1822 = vmatpush.msra.mxu0 %v86
    %1823 = vmatmul.f32.gmra.mxu0 %v1805
    %v1824 = vpop.f32.mrf.mxu0
    %v1825 = vadd.f32 0.0, %v1824
    %1826 = vdwg.mxu0
    %v1827 = vadd.f32 %v1799, %v1825
    %v1828 = vxor.u32 %v1827, 2147483648
    %v1829 = vmul.f32 %v1828, 1.442695
    %v1830 = vpow.pop %v1829
    %v1831 = vadd.f32 %v1830, 1.0
    %v1832 = vrcp.pop %v1831
    %v1833 = vmul.f32 %v1831, %v1832
    %v1834 = vsub.f32 1.0, %v1833
    %v1835 = vmul.f32 %v1832, %v1834
    %v1836 = vadd.f32 %v1832, %v1835
    %vm1837 = vweird.f32 %v1831
    %vm1838 = vweird.f32 %v1832
    %vm1839 = vmor %vm1837, %vm1838
    %v1840 = vsel %vm1839, %v1832, %v1836
    %v1841 = vand.u32 2147483647, %v1831
    %vm1842 = vcmp.eq.f32.partialorder %v1841, 8.507059e+37
    %v1843 = vand.u32 %v1831, 2147483648
    %v1844 = vor.u32 1.1754944e-38, %v1843
    %v1845 = vsel %vm1842, %v1844, %v1840
    %v1846 = vmul.f32 1.0, %v1845
    %1847 = vmatpush.msra.mxu0 0.0
    %1848 = vmatpush.msra.mxu0 0.0
    %1849 = vmatpush.msra.mxu0 0.0
    %1850 = vmatpush.msra.mxu0 0.0
    %1851 = vmatpush.msra.mxu0 0.0
    %1852 = vmatpush.msra.mxu0 0.0
    %1853 = vmatpush.msra.mxu0 0.0
    %1854 = vmatpush.msra.mxu0 0.0
    %1855 = vmatpush.msra.mxu0 0.0
    %1856 = vmatpush.msra.mxu0 0.0
    %1857 = vmatpush.msra.mxu0 0.0
    %1858 = vmatpush.msra.mxu0 0.0
    %1859 = vmatpush.msra.mxu0 %v94
    %1860 = vmatpush.msra.mxu0 %v93
    %1861 = vmatpush.msra.mxu0 %v92
    %1862 = vmatpush.msra.mxu0 %v91
    %1863 = vmatmul.f32.gmra.mxu0 %v1805
    %v1864 = vpop.f32.mrf.mxu0
    %v1865 = vadd.f32 0.0, %v1864
    %1866 = vdwg.mxu0
    %v1867 = vadd.f32 %v1801, %v1865
    %v1868 = vxor.u32 %v1867, 2147483648
    %v1869 = vmul.f32 %v1868, 1.442695
    %v1870 = vpow.pop %v1869
    %v1871 = vadd.f32 %v1870, 1.0
    %v1872 = vrcp.pop %v1871
    %v1873 = vmul.f32 %v1871, %v1872
    %v1874 = vsub.f32 1.0, %v1873
    %v1875 = vmul.f32 %v1872, %v1874
    %v1876 = vadd.f32 %v1872, %v1875
    %vm1877 = vweird.f32 %v1871
    %vm1878 = vweird.f32 %v1872
    %vm1879 = vmor %vm1877, %vm1878
    %v1880 = vsel %vm1879, %v1872, %v1876
    %v1881 = vand.u32 2147483647, %v1871
    %vm1882 = vcmp.eq.f32.partialorder %v1881, 8.507059e+37
    %v1883 = vand.u32 %v1871, 2147483648
    %v1884 = vor.u32 1.1754944e-38, %v1883
    %v1885 = vsel %vm1882, %v1884, %v1880
    %v1886 = vmul.f32 1.0, %v1885
    %1887 = vmatpush.msra.mxu0 0.0
    %1888 = vmatpush.msra.mxu0 0.0
    %1889 = vmatpush.msra.mxu0 0.0
    %1890 = vmatpush.msra.mxu0 0.0
    %1891 = vmatpush.msra.mxu0 0.0
    %1892 = vmatpush.msra.mxu0 0.0
    %1893 = vmatpush.msra.mxu0 0.0
    %1894 = vmatpush.msra.mxu0 0.0
    %1895 = vmatpush.msra.mxu0 0.0
    %1896 = vmatpush.msra.mxu0 0.0
    %1897 = vmatpush.msra.mxu0 0.0
    %1898 = vmatpush.msra.mxu0 0.0
    %1899 = vmatpush.msra.mxu0 %v99
    %1900 = vmatpush.msra.mxu0 %v98
    %1901 = vmatpush.msra.mxu0 %v97
    %1902 = vmatpush.msra.mxu0 %v96
    %1903 = vmatmul.f32.gmra.mxu0 %v1805
    %v1904 = vpop.f32.mrf.mxu0
    %v1905 = vadd.f32 %v107, %v1904
    %1906 = vdwg.mxu0
    %v1907 = vmul.f32 %v1846, %v1905
    %v1908 = vadd.f32 %v1803, %v1907
    %v1909 = vtanh.pop %v1908
    %v1910 = vsub.f32 1.0, %v1886
    %v1911 = vmul.f32 %v1910, %v1909
    %v1912 = vmul.f32 %v1886, %v1676
    %v1913 = vadd.f32 %v1911, %v1912
    %v1914 = vmul.f32 %v505, %v1913
    %s1915 = scalar_lea.vmem [#allocation8], 12
    %1916 = vst.msk [vmem:[%s1915] sm:$0xf] %vm238, %v1914
    %v1917 = vmul.f32 %v514, %v1676
    %v1918 = vadd.f32 %v1914, %v1917
    %s1919 = scalar_lea.vmem [#allocation2], 168
    %v1920 = vld [vmem:[%s1919] sm:$0xf]
    %s1921 = scalar_lea.vmem [#allocation2], 172
    %v1922 = vld [vmem:[%s1921] sm:$0xf]
    %s1923 = scalar_lea.vmem [#allocation2], 176
    %v1924 = vld [vmem:[%s1923] sm:$0xf]
    %v1926 = vsel %vm118, %v1797, 0
    %1928 = vmatpush.msra.mxu0 0.0
    %1929 = vmatpush.msra.mxu0 0.0
    %1930 = vmatpush.msra.mxu0 0.0
    %1931 = vmatpush.msra.mxu0 0.0
    %1932 = vmatpush.msra.mxu0 0.0
    %1933 = vmatpush.msra.mxu0 0.0
    %1934 = vmatpush.msra.mxu0 0.0
    %1935 = vmatpush.msra.mxu0 0.0
    %1936 = vmatpush.msra.mxu0 0.0
    %1937 = vmatpush.msra.mxu0 0.0
    %1938 = vmatpush.msra.mxu0 0.0
    %1939 = vmatpush.msra.mxu0 0.0
    %1940 = vmatpush.msra.mxu0 %v74
    %1941 = vmatpush.msra.mxu0 %v73
    %1942 = vmatpush.msra.mxu0 %v72
    %1943 = vmatpush.msra.mxu0 %v71
    %1944 = vmatmul.f32.gmra.mxu0 %v1926
    %v1945 = vpop.f32.mrf.mxu0
    %v1946 = vadd.f32 0.0, %v1945
    %1947 = vdwg.mxu0
    %v1948 = vadd.f32 %v1920, %v1946
    %v1949 = vxor.u32 %v1948, 2147483648
    %v1950 = vmul.f32 %v1949, 1.442695
    %v1951 = vpow.pop %v1950
    %v1952 = vadd.f32 %v1951, 1.0
    %v1953 = vrcp.pop %v1952
    %v1954 = vmul.f32 %v1952, %v1953
    %v1955 = vsub.f32 1.0, %v1954
    %v1956 = vmul.f32 %v1953, %v1955
    %v1957 = vadd.f32 %v1953, %v1956
    %vm1958 = vweird.f32 %v1952
    %vm1959 = vweird.f32 %v1953
    %vm1960 = vmor %vm1958, %vm1959
    %v1961 = vsel %vm1960, %v1953, %v1957
    %v1962 = vand.u32 2147483647, %v1952
    %vm1963 = vcmp.eq.f32.partialorder %v1962, 8.507059e+37
    %v1964 = vand.u32 %v1952, 2147483648
    %v1965 = vor.u32 1.1754944e-38, %v1964
    %v1966 = vsel %vm1963, %v1965, %v1961
    %v1967 = vmul.f32 1.0, %v1966
    %1968 = vmatpush.msra.mxu0 0.0
    %1969 = vmatpush.msra.mxu0 0.0
    %1970 = vmatpush.msra.mxu0 0.0
    %1971 = vmatpush.msra.mxu0 0.0
    %1972 = vmatpush.msra.mxu0 0.0
    %1973 = vmatpush.msra.mxu0 0.0
    %1974 = vmatpush.msra.mxu0 0.0
    %1975 = vmatpush.msra.mxu0 0.0
    %1976 = vmatpush.msra.mxu0 0.0
    %1977 = vmatpush.msra.mxu0 0.0
    %1978 = vmatpush.msra.mxu0 0.0
    %1979 = vmatpush.msra.mxu0 0.0
    %1980 = vmatpush.msra.mxu0 %v79
    %1981 = vmatpush.msra.mxu0 %v78
    %1982 = vmatpush.msra.mxu0 %v77
    %1983 = vmatpush.msra.mxu0 %v76
    %1984 = vmatmul.f32.gmra.mxu0 %v1926
    %v1985 = vpop.f32.mrf.mxu0
    %v1986 = vadd.f32 0.0, %v1985
    %1987 = vdwg.mxu0
    %v1988 = vadd.f32 %v1922, %v1986
    %v1989 = vxor.u32 %v1988, 2147483648
    %v1990 = vmul.f32 %v1989, 1.442695
    %v1991 = vpow.pop %v1990
    %v1992 = vadd.f32 %v1991, 1.0
    %v1993 = vrcp.pop %v1992
    %v1994 = vmul.f32 %v1992, %v1993
    %v1995 = vsub.f32 1.0, %v1994
    %v1996 = vmul.f32 %v1993, %v1995
    %v1997 = vadd.f32 %v1993, %v1996
    %vm1998 = vweird.f32 %v1992
    %vm1999 = vweird.f32 %v1993
    %vm2000 = vmor %vm1998, %vm1999
    %v2001 = vsel %vm2000, %v1993, %v1997
    %v2002 = vand.u32 2147483647, %v1992
    %vm2003 = vcmp.eq.f32.partialorder %v2002, 8.507059e+37
    %v2004 = vand.u32 %v1992, 2147483648
    %v2005 = vor.u32 1.1754944e-38, %v2004
    %v2006 = vsel %vm2003, %v2005, %v2001
    %v2007 = vmul.f32 1.0, %v2006
    %2008 = vmatpush.msra.mxu0 0.0
    %2009 = vmatpush.msra.mxu0 0.0
    %2010 = vmatpush.msra.mxu0 0.0
    %2011 = vmatpush.msra.mxu0 0.0
    %2012 = vmatpush.msra.mxu0 0.0
    %2013 = vmatpush.msra.mxu0 0.0
    %2014 = vmatpush.msra.mxu0 0.0
    %2015 = vmatpush.msra.mxu0 0.0
    %2016 = vmatpush.msra.mxu0 0.0
    %2017 = vmatpush.msra.mxu0 0.0
    %2018 = vmatpush.msra.mxu0 0.0
    %2019 = vmatpush.msra.mxu0 0.0
    %2020 = vmatpush.msra.mxu0 %v84
    %2021 = vmatpush.msra.mxu0 %v83
    %2022 = vmatpush.msra.mxu0 %v82
    %2023 = vmatpush.msra.mxu0 %v81
    %2024 = vmatmul.f32.gmra.mxu0 %v1926
    %v2025 = vpop.f32.mrf.mxu0
    %v2026 = vadd.f32 %v102, %v2025
    %2027 = vdwg.mxu0
    %v2028 = vmul.f32 %v1967, %v2026
    %v2029 = vadd.f32 %v1924, %v2028
    %v2030 = vtanh.pop %v2029
    %v2031 = vsub.f32 1.0, %v2007
    %v2032 = vmul.f32 %v2031, %v2030
    %v2033 = vmul.f32 %v2007, %v1797
    %v2034 = vadd.f32 %v2032, %v2033
    %v2035 = vmul.f32 %v370, %v2034
    %s2036 = scalar_lea.vmem [#allocation8], 56
    %2037 = vst.msk [vmem:[%s2036] sm:$0xf] %vm238, %v2035
    %v2038 = vmul.f32 %v379, %v1797
    %v2039 = vadd.f32 %v2035, %v2038
    %s2040 = scalar_lea.vmem [#allocation2], 12
    %v2041 = vld [vmem:[%s2040] sm:$0xf]
    %s2042 = scalar_lea.vmem [#allocation2], 16
    %v2043 = vld [vmem:[%s2042] sm:$0xf]
    %s2044 = scalar_lea.vmem [#allocation2], 20
    %v2045 = vld [vmem:[%s2044] sm:$0xf]
    %v2047 = vsel %vm118, %v1918, 0
    %2049 = vmatpush.msra.mxu0 0.0
    %2050 = vmatpush.msra.mxu0 0.0
    %2051 = vmatpush.msra.mxu0 0.0
    %2052 = vmatpush.msra.mxu0 0.0
    %2053 = vmatpush.msra.mxu0 0.0
    %2054 = vmatpush.msra.mxu0 0.0
    %2055 = vmatpush.msra.mxu0 0.0
    %2056 = vmatpush.msra.mxu0 0.0
    %2057 = vmatpush.msra.mxu0 0.0
    %2058 = vmatpush.msra.mxu0 0.0
    %2059 = vmatpush.msra.mxu0 0.0
    %2060 = vmatpush.msra.mxu0 0.0
    %2061 = vmatpush.msra.mxu0 %v89
    %2062 = vmatpush.msra.mxu0 %v88
    %2063 = vmatpush.msra.mxu0 %v87
    %2064 = vmatpush.msra.mxu0 %v86
    %2065 = vmatmul.f32.gmra.mxu0 %v2047
    %v2066 = vpop.f32.mrf.mxu0
    %v2067 = vadd.f32 0.0, %v2066
    %2068 = vdwg.mxu0
    %v2069 = vadd.f32 %v2041, %v2067
    %v2070 = vxor.u32 %v2069, 2147483648
    %v2071 = vmul.f32 %v2070, 1.442695
    %v2072 = vpow.pop %v2071
    %v2073 = vadd.f32 %v2072, 1.0
    %v2074 = vrcp.pop %v2073
    %v2075 = vmul.f32 %v2073, %v2074
    %v2076 = vsub.f32 1.0, %v2075
    %v2077 = vmul.f32 %v2074, %v2076
    %v2078 = vadd.f32 %v2074, %v2077
    %vm2079 = vweird.f32 %v2073
    %vm2080 = vweird.f32 %v2074
    %vm2081 = vmor %vm2079, %vm2080
    %v2082 = vsel %vm2081, %v2074, %v2078
    %v2083 = vand.u32 2147483647, %v2073
    %vm2084 = vcmp.eq.f32.partialorder %v2083, 8.507059e+37
    %v2085 = vand.u32 %v2073, 2147483648
    %v2086 = vor.u32 1.1754944e-38, %v2085
    %v2087 = vsel %vm2084, %v2086, %v2082
    %v2088 = vmul.f32 1.0, %v2087
    %2089 = vmatpush.msra.mxu0 0.0
    %2090 = vmatpush.msra.mxu0 0.0
    %2091 = vmatpush.msra.mxu0 0.0
    %2092 = vmatpush.msra.mxu0 0.0
    %2093 = vmatpush.msra.mxu0 0.0
    %2094 = vmatpush.msra.mxu0 0.0
    %2095 = vmatpush.msra.mxu0 0.0
    %2096 = vmatpush.msra.mxu0 0.0
    %2097 = vmatpush.msra.mxu0 0.0
    %2098 = vmatpush.msra.mxu0 0.0
    %2099 = vmatpush.msra.mxu0 0.0
    %2100 = vmatpush.msra.mxu0 0.0
    %2101 = vmatpush.msra.mxu0 %v94
    %2102 = vmatpush.msra.mxu0 %v93
    %2103 = vmatpush.msra.mxu0 %v92
    %2104 = vmatpush.msra.mxu0 %v91
    %2105 = vmatmul.f32.gmra.mxu0 %v2047
    %v2106 = vpop.f32.mrf.mxu0
    %v2107 = vadd.f32 0.0, %v2106
    %2108 = vdwg.mxu0
    %v2109 = vadd.f32 %v2043, %v2107
    %v2110 = vxor.u32 %v2109, 2147483648
    %v2111 = vmul.f32 %v2110, 1.442695
    %v2112 = vpow.pop %v2111
    %v2113 = vadd.f32 %v2112, 1.0
    %v2114 = vrcp.pop %v2113
    %v2115 = vmul.f32 %v2113, %v2114
    %v2116 = vsub.f32 1.0, %v2115
    %v2117 = vmul.f32 %v2114, %v2116
    %v2118 = vadd.f32 %v2114, %v2117
    %vm2119 = vweird.f32 %v2113
    %vm2120 = vweird.f32 %v2114
    %vm2121 = vmor %vm2119, %vm2120
    %v2122 = vsel %vm2121, %v2114, %v2118
    %v2123 = vand.u32 2147483647, %v2113
    %vm2124 = vcmp.eq.f32.partialorder %v2123, 8.507059e+37
    %v2125 = vand.u32 %v2113, 2147483648
    %v2126 = vor.u32 1.1754944e-38, %v2125
    %v2127 = vsel %vm2124, %v2126, %v2122
    %v2128 = vmul.f32 1.0, %v2127
    %2129 = vmatpush.msra.mxu0 0.0
    %2130 = vmatpush.msra.mxu0 0.0
    %2131 = vmatpush.msra.mxu0 0.0
    %2132 = vmatpush.msra.mxu0 0.0
    %2133 = vmatpush.msra.mxu0 0.0
    %2134 = vmatpush.msra.mxu0 0.0
    %2135 = vmatpush.msra.mxu0 0.0
    %2136 = vmatpush.msra.mxu0 0.0
    %2137 = vmatpush.msra.mxu0 0.0
    %2138 = vmatpush.msra.mxu0 0.0
    %2139 = vmatpush.msra.mxu0 0.0
    %2140 = vmatpush.msra.mxu0 0.0
    %2141 = vmatpush.msra.mxu0 %v99
    %2142 = vmatpush.msra.mxu0 %v98
    %2143 = vmatpush.msra.mxu0 %v97
    %2144 = vmatpush.msra.mxu0 %v96
    %2145 = vmatmul.f32.gmra.mxu0 %v2047
    %v2146 = vpop.f32.mrf.mxu0
    %v2147 = vadd.f32 %v107, %v2146
    %2148 = vdwg.mxu0
    %v2149 = vmul.f32 %v2088, %v2147
    %v2150 = vadd.f32 %v2045, %v2149
    %v2151 = vtanh.pop %v2150
    %v2152 = vsub.f32 1.0, %v2128
    %v2153 = vmul.f32 %v2152, %v2151
    %v2154 = vmul.f32 %v2128, %v1918
    %v2155 = vadd.f32 %v2153, %v2154
    %v2156 = vmul.f32 %v235, %v2155
    %s2157 = scalar_lea.vmem [#allocation8], 4
    %2158 = vst.msk [vmem:[%s2157] sm:$0xf] %vm238, %v2156
    %v2159 = vmul.f32 %v244, %v1918
    %v2160 = vadd.f32 %v2156, %v2159
    %2161 = vst.msk [vmem:[#allocation9] sm:$0xf] %vm238, %v2039
    %s2162 = scalar_lea.vmem [#allocation9], 4
    %2163 = vst.msk [vmem:[%s2162] sm:$0xf] %vm238, %v2160
    // Predicated region
    $region34: #{tpu_custom_call.1} parent=1 // pred_check
      _
    $region35: #{tpu_custom_call.1} parent=1 // pred_check_branch
      %2165 = sbr.rel (0) target = $region37
    $region36: #{tpu_custom_call.1} parent=1 // pred_region
      %2167 = vsyncadd [#allocation4], 0
      %s2168 = sshll.u32 [#allocation8], 4
      %s2169 = int_to_ptr.vmem [resolvable:$true] %s2168
      %s2170 = sshll.u32 %s5, 4
      %s2171 = int_to_ptr.hbm [resolvable:$true] %s2170
      %2176 = dma.vmem_to_hbm [thread:$0]  %s2169, 1024, %s2171, [#allocation4], 64, 64, 4
    $region37: #{tpu_custom_call.1} parent=1 // pred_fallthru
      _
    // Predicated region
    $region38: #{tpu_custom_call.1} parent=1 // pred_check
      _
    $region39: #{tpu_custom_call.1} parent=1 // pred_check_branch
      %2178 = sbr.rel (0) target = $region41
    $region40: #{tpu_custom_call.1} parent=1 // pred_region
      %2180 = vsyncadd [#allocation10], 0
      %s2181 = sshll.u32 [#allocation9], 4
      %s2182 = int_to_ptr.vmem [resolvable:$true] %s2181
      %s2183 = sshll.u32 %s6, 4
      %s2184 = int_to_ptr.hbm [resolvable:$true] %s2183
      %2189 = dma.vmem_to_hbm [thread:$0]  %s2182, 128, %s2184, [#allocation10], 64, 64, 4
    $region41: #{tpu_custom_call.1} parent=1 // pred_fallthru
      _
    // Predicated region
    $region42: #{tpu_custom_call.1} parent=1 // pred_check
      _
    $region43: #{tpu_custom_call.1} parent=1 // pred_check_branch
      %2191 = sbr.rel (0) target = $region45
    $region44: #{tpu_custom_call.1} parent=1 // pred_region
      %2193 = dma.done [#allocation4], 1024
    $region45: #{tpu_custom_call.1} parent=1 // pred_fallthru
      _
    // Predicated region
    $region46: #{tpu_custom_call.1} parent=1 // pred_check
      _
    $region47: #{tpu_custom_call.1} parent=1 // pred_check_branch
      %2195 = sbr.rel (0) target = $region49
    $region48: #{tpu_custom_call.1} parent=1 // pred_region
      %2197 = dma.done [#allocation10], 128
    $region49: #{tpu_custom_call.1} parent=1 // pred_fallthru
      _
    %2198 = vsyncpa [#allocation3], 1
    %2199 = vsyncpa [#allocation6], 1
    %2200 = vsyncpa [#allocation4], 1
    %2201 = vsyncpa [#allocation10], 1

</llo_original>
